<compile_context>
chip_gen: v5e
topology: v5e:2x2
jax: 0.10.0
libtpu: 0.0.40
codegen_flags: <defaults>
</compile_context>

<pallas_src>
import functools
import math

import jax
import jax.numpy as jnp
from jax import lax
from jax.experimental import pallas as pl
from jax.experimental.pallas import tpu as pltpu

LN_EPS = 1e-5
_NEG = -1e30  # large finite negative (avoids exp(-inf)/0 NaN paths)


def _round_up(x, m):
    return ((x + m - 1) // m) * m


def _pick_divisor_tile(dim, max_tile, align=128):
    """Largest multiple of `align` that divides `dim` and is <= max_tile."""
    if dim <= max_tile:
        return dim
    t = (max_tile // align) * align
    while t > align:
        if dim % t == 0:
            return t
        t -= align
    return align


@functools.lru_cache(maxsize=None)
def _tpu_vmem_capacity():
    try:
        return int(pltpu.get_tpu_info().vmem_capacity_bytes)
    except Exception:
        return 64 * 1024 * 1024


def _vmem_limit():
    # Explicit scoped-VMEM limit with headroom below physical capacity
    # (v5e/v6e: 128 MiB physical -> 64 MiB; v7x: 64 MiB physical -> 32 MiB).
    return min(int(_tpu_vmem_capacity() * 0.5), 96 * 1024 * 1024)


def _matmul_tile_caps():
    # v5e/v6e (128 MiB VMEM): grow tiles; v7x (64 MiB, 2 TCs): moderate tiles.
    if _tpu_vmem_capacity() >= 96 * 1024 * 1024:
        return 512, 512, 1024
    return 256, 256, 512


# ---------------------------------------------------------------------------
# Kernel 1: LayerNorm (residual add is fused into the preceding matmul)
# ---------------------------------------------------------------------------
def _ln_kernel(x_ref, g_ref, b_ref, o_ref, *, eps, inv_d):
    x = x_ref[...].astype(jnp.float32)
    mean = jnp.sum(x, axis=-1, keepdims=True) * inv_d
    xc = x - mean                                   # two-pass (centered) variance
    var = jnp.sum(xc * xc, axis=-1, keepdims=True) * inv_d
    y = xc * lax.rsqrt(var + eps) * g_ref[...] + b_ref[...]
    o_ref[...] = y.astype(o_ref.dtype)


def layer_norm(x, gamma, beta, *, eps=LN_EPS):
    """LayerNorm over the last dim. x: (..., D)."""
    *lead, D = x.shape
    rows = 1
    for d in lead:
        rows *= d
    x2 = x.reshape(rows, D)
    g2 = gamma.reshape(1, D).astype(jnp.float32)
    b2 = beta.reshape(1, D).astype(jnp.float32)

    itemsize = jnp.dtype(x.dtype).itemsize
    # HBM-bandwidth bound: biggest row tile fitting ~1/4 of the scoped limit
    # (in + out, double-buffered -> ~4 live tiles).
    budget = min(_vmem_limit() // 4, 8 * 1024 * 1024)
    tile = budget // (4 * D * itemsize)
    tile = max(8, min(2048, (tile // 8) * 8))
    rows8 = _round_up(rows, 8)
    tile = min(tile, rows8)
    # Only split into >=2 grid steps when each half stays a big (>=512-row)
    # block: helps v7x's 2 TensorCores, costs ~nothing on single-TC v5e/v6e.
    if rows8 // tile < 2 and tile >= 1024:
        tile = max(512, ((tile // 2) // 8) * 8)
    rows_pad = _round_up(rows, tile)
    if rows_pad != rows:
        x2 = jnp.pad(x2, ((0, rows_pad - rows), (0, 0)))

    out = pl.pallas_call(
        functools.partial(_ln_kernel, eps=eps, inv_d=1.0 / D),
        out_shape=jax.ShapeDtypeStruct((rows_pad, D), x.dtype),
        grid_spec=pltpu.PrefetchScalarGridSpec(
            num_scalar_prefetch=0,
            grid=(rows_pad // tile,),
            in_specs=[
                pl.BlockSpec((tile, D), lambda i: (i, 0)),
                pl.BlockSpec((1, D), lambda i: (0, 0)),
                pl.BlockSpec((1, D), lambda i: (0, 0)),
            ],
            out_specs=pl.BlockSpec((tile, D), lambda i: (i, 0)),
        ),
        compiler_params=pltpu.CompilerParams(
            dimension_semantics=("parallel",),
            vmem_limit_bytes=_vmem_limit()),
        cost_estimate=pl.CostEstimate(
            flops=7 * rows * D, transcendentals=rows,
            bytes_accessed=2 * rows * D * itemsize),
    )(x2, g2, b2)
    return out[:rows].reshape(*lead, D)


# ---------------------------------------------------------------------------
# Kernel 2: tiled matmul + bias (+ fused ReLU / fused residual add)
# ---------------------------------------------------------------------------
def _matmul_kernel(x_ref, w_ref, b_ref, o_ref, acc_ref, *, activation):
    @pl.when(pl.program_id(2) == 0)
    def _():
        acc_ref[...] = jnp.zeros_like(acc_ref)

    # bf16 operands go straight to the MXU; accumulation stays f32.
    acc_ref[...] += jnp.dot(x_ref[...], w_ref[...],
                            preferred_element_type=jnp.float32)

    @pl.when(pl.program_id(2) == pl.num_programs(2) - 1)
    def _():
        y = acc_ref[...] + b_ref[...]
        if activation == "relu":
            y = jnp.maximum(y, 0.0)
        o_ref[...] = y.astype(o_ref.dtype)


def _matmul_res_kernel(x_ref, w_ref, b_ref, r_ref, o_ref, acc_ref, *, activation):
    @pl.when(pl.program_id(2) == 0)
    def _():
        acc_ref[...] = jnp.zeros_like(acc_ref)

    acc_ref[...] += jnp.dot(x_ref[...], w_ref[...],
                            preferred_element_type=jnp.float32)

    @pl.when(pl.program_id(2) == pl.num_programs(2) - 1)
    def _():
        y = acc_ref[...] + b_ref[...] + r_ref[...].astype(jnp.float32)
        if activation == "relu":
            y = jnp.maximum(y, 0.0)
        o_ref[...] = y.astype(o_ref.dtype)


def linear(x, w, b, *, out_dim=None, residual=None, activation=None):
    """y = x @ w + bias (+ residual), optional fused ReLU.

    `w` is a prepared weight (Kp, Np), 128-aligned; `b` is (1, Np) float32.
    If out_dim is None the padded width is returned (cheap to chain layers).
    """
    *lead, Din = x.shape
    Kp, Np = w.shape
    x2 = x.reshape(-1, Din)
    M = x2.shape[0]
    if Din != Kp:                     # only when the feature dim isn't 128-aligned
        x2 = jnp.pad(x2, ((0, 0), (0, Kp - Din)))

    tm_cap, tn_cap, tk_cap = _matmul_tile_caps()
    tm = min(tm_cap, _round_up(M, 8))
    Mp = _round_up(M, tm)
    if Mp != M:
        x2 = jnp.pad(x2, ((0, Mp - M), (0, 0)))
    tn = _pick_divisor_tile(Np, tn_cap)
    tk = _pick_divisor_tile(Kp, tk_cap)

    grid = (Mp // tm, Np // tn, Kp // tk)
    in_specs = [
        pl.BlockSpec((tm, tk), lambda i, j, k: (i, k)),
        pl.BlockSpec((tk, tn), lambda i, j, k: (k, j)),
        pl.BlockSpec((1, tn), lambda i, j, k: (0, j)),
    ]
    operands = [x2, w, b]
    if residual is not None:
        r2 = residual.reshape(-1, residual.shape[-1])
        rD = r2.shape[1]
        if rD != Np or Mp != M:
            r2 = jnp.pad(r2, ((0, Mp - M), (0, Np - rD)))
        # Block index constant along k -> Pallas fetches it once per (i, j).
        in_specs.append(pl.BlockSpec((tm, tn), lambda i, j, k: (i, j)))
        operands.append(r2)
        kern = functools.partial(_matmul_res_kernel, activation=activation)
    else:
        kern = functools.partial(_matmul_kernel, activation=activation)

    out = pl.pallas_call(
        kern,
        out_shape=jax.ShapeDtypeStruct((Mp, Np), x.dtype),
        grid_spec=pltpu.PrefetchScalarGridSpec(
            num_scalar_prefetch=0,
            grid=grid,
            in_specs=in_specs,
            out_specs=pl.BlockSpec((tm, tn), lambda i, j, k: (i, j)),
            scratch_shapes=[pltpu.VMEM((tm, tn), jnp.float32)]),
        compiler_params=pltpu.CompilerParams(
            dimension_semantics=("parallel", "parallel", "arbitrary"),
            vmem_limit_bytes=_vmem_limit()),
        cost_estimate=pl.CostEstimate(
            flops=2 * Mp * Kp * Np, transcendentals=0,
            bytes_accessed=(Mp * Kp + Kp * Np + 2 * Mp * Np)
            * jnp.dtype(x.dtype).itemsize),
    )(*operands)

    out = out[:M]
    if out_dim is not None and out_dim != Np:
        out = out[:, :out_dim]
    return out.reshape(*lead, out.shape[1])


# ---------------------------------------------------------------------------
# Kernel 3: flash-style scaled dot-product attention (online softmax over Sk)
# ---------------------------------------------------------------------------
def _flash_attn_kernel(q_ref, kT_ref, v_ref, o_ref, m_sc, l_sc, acc_sc, *,
                       scale, causal, sk_valid):
    kv = pl.program_id(2)

    @pl.when(kv == 0)
    def _():
        m_sc[...] = jnp.full(m_sc.shape, _NEG, dtype=jnp.float32)
        l_sc[...] = jnp.zeros_like(l_sc)
        acc_sc[...] = jnp.zeros_like(acc_sc)

    # (G, tq, dk) @ (G, dk, tk) -> (G, tq, tk); K is pre-transposed in the
    # wrapper so no per-step XLU transpose is needed here.
    s = jnp.einsum("gqd,gdk->gqk", q_ref[...], kT_ref[...],
                   preferred_element_type=jnp.float32) * scale

    _, tq, tk = s.shape
    need_mask = causal or (sk_valid % tk != 0)
    if need_mask:
        q_abs = pl.program_id(1) * tq + lax.broadcasted_iota(jnp.int32, s.shape, 1)
        k_abs = kv * tk + lax.broadcasted_iota(jnp.int32, s.shape, 2)
        valid = k_abs < sk_valid
        if causal:
            valid = jnp.logical_and(valid, k_abs <= q_abs)
        s = jnp.where(valid, s, _NEG)

    m_prev = m_sc[...]
    m_new = jnp.maximum(m_prev, jnp.max(s, axis=-1, keepdims=True))
    alpha = jnp.exp(m_prev - m_new)
    p = jnp.exp(s - m_new)
    if need_mask:
        p = jnp.where(valid, p, 0.0)
    l_sc[...] = alpha * l_sc[...] + jnp.sum(p, axis=-1, keepdims=True)
    acc_sc[...] = alpha * acc_sc[...] + jnp.einsum(
        "gqk,gkd->gqd", p.astype(v_ref.dtype), v_ref[...],
        preferred_element_type=jnp.float32)
    m_sc[...] = m_new

    @pl.when(kv == pl.num_programs(2) - 1)
    def _():
        inv_l = pl.reciprocal(l_sc[...], approx=True)   # EUP slot -> ~free
        o_ref[...] = (acc_sc[...] * inv_l).astype(o_ref.dtype)


def dot_product_attention(q, k, v, *, scale, causal):
    """q: (BH, Sq, dk); k, v: (BH, Sk, dk)."""
    BH, Sq, dk = q.shape
    Sk = k.shape[1]

    # Several (batch*head) entries per grid step amortize per-step overhead and
    # feed the MXU a fuller batched matmul.
    G = 1
    for cand in (8, 4, 2):
        if BH % cand == 0:
            G = cand
            break

    tq = Sq if Sq <= 256 else 256
    Sqp = _round_up(Sq, tq)
    if Sk <= 512:
        tk, Skp = Sk, Sk
    else:
        Skp = _round_up(Sk, 128)
        tk = _pick_divisor_tile(Skp, 512)

    qp = q if Sqp == Sq else jnp.pad(q, ((0, 0), (0, Sqp - Sq), (0, 0)))
    kp = k if Skp == Sk else jnp.pad(k, ((0, 0), (0, Skp - Sk), (0, 0)))
    vp = v if Skp == Sk else jnp.pad(v, ((0, 0), (0, Skp - Sk), (0, 0)))
    kT = jnp.swapaxes(kp, 1, 2)      # transpose once in HBM, not per grid step

    grid = (BH // G, Sqp // tq, Skp // tk)
    out = pl.pallas_call(
        functools.partial(_flash_attn_kernel, scale=scale, causal=causal,
                          sk_valid=Sk),
        out_shape=jax.ShapeDtypeStruct((BH, Sqp, dk), q.dtype),
        grid_spec=pltpu.PrefetchScalarGridSpec(
            num_scalar_prefetch=0,
            grid=grid,
            in_specs=[
                pl.BlockSpec((G, tq, dk), lambda b, i, j: (b, i, 0)),
                pl.BlockSpec((G, dk, tk), lambda b, i, j: (b, 0, j)),
                pl.BlockSpec((G, tk, dk), lambda b, i, j: (b, j, 0)),
            ],
            out_specs=pl.BlockSpec((G, tq, dk), lambda b, i, j: (b, i, 0)),
            scratch_shapes=[
                pltpu.VMEM((G, tq, 1), jnp.float32),
                pltpu.VMEM((G, tq, 1), jnp.float32),
                pltpu.VMEM((G, tq, dk), jnp.float32),
            ]),
        compiler_params=pltpu.CompilerParams(
            dimension_semantics=("parallel", "parallel", "arbitrary"),
            vmem_limit_bytes=_vmem_limit()),
    )(qp, kT, vp)
    if Sqp != Sq:
        out = out[:, :Sq, :]
    return out


# ---------------------------------------------------------------------------
# Kernel 4: softmax over the sequence axis (final nn.Softmax(dim=1)),
# tiled over the vocab axis.
# ---------------------------------------------------------------------------
def _softmax_seq_kernel(x_ref, o_ref):
    x = x_ref[0].astype(jnp.float32)             # (S, tv): softmax over axis 0
    m = jnp.max(x, axis=0, keepdims=True)
    e = jnp.exp(x - m)
    o_ref[0] = (e / jnp.sum(e, axis=0, keepdims=True)).astype(o_ref.dtype)


def softmax_over_seq(logits, *, out_dtype=jnp.float32):
    B, S, V = logits.shape
    if V <= 2048:
        tv, Vp = V, V
    else:
        Vp = _round_up(V, 128)
        tv = _pick_divisor_tile(Vp, 2048)
    xp = logits if Vp == V else jnp.pad(logits, ((0, 0), (0, 0), (0, Vp - V)))

    out = pl.pallas_call(
        _softmax_seq_kernel,
        out_shape=jax.ShapeDtypeStruct((B, S, Vp), out_dtype),
        grid_spec=pltpu.PrefetchScalarGridSpec(
            num_scalar_prefetch=0,
            grid=(B, Vp // tv),
            in_specs=[pl.BlockSpec((1, S, tv), lambda b, j: (b, 0, j))],
            out_specs=pl.BlockSpec((1, S, tv), lambda b, j: (b, 0, j))),
        compiler_params=pltpu.CompilerParams(
            dimension_semantics=("parallel", "parallel"),
            vmem_limit_bytes=_vmem_limit()),
    )(xp)
    if Vp != V:
        out = out[:, :, :V]
    return out


# ---------------------------------------------------------------------------
# Transformer composition (matches the PyTorch module graph)
# ---------------------------------------------------------------------------
def _split_heads(t, B, S, h, dk):
    return t.reshape(B, S, h, dk).transpose(0, 2, 1, 3).reshape(B * h, S, dk)


def _mha_core(q, k, v, o_p, residual, *, h, d_model, causal):
    B, Sq, _ = q.shape
    Sk = k.shape[1]
    dk = d_model // h
    # NOTE: reference DotProductAttention scales by 1/sqrt(d_model), NOT 1/sqrt(d_k).
    attn = dot_product_attention(
        _split_heads(q, B, Sq, h, dk),
        _split_heads(k, B, Sk, h, dk),
        _split_heads(v, B, Sk, h, dk),
        scale=1.0 / math.sqrt(d_model), causal=causal)
    attn = attn.reshape(B, h, Sq, dk).transpose(0, 2, 1, 3).reshape(B, Sq, d_model)
    # Residual add fused into the o-projection epilogue.
    return linear(attn, o_p["w"], o_p["b"], out_dim=d_model, residual=residual)


def mha_self(p, x, *, h, d_model, causal, residual):
    Dp = _round_up(d_model, 128)
    qkv = linear(x, p["qkv"]["w"], p["qkv"]["b"])       # fused Q/K/V projection
    q = qkv[..., 0:d_model]
    k = qkv[..., Dp:Dp + d_model]
    v = qkv[..., 2 * Dp:2 * Dp + d_model]
    return _mha_core(q, k, v, p["o"], residual, h=h, d_model=d_model, causal=causal)


def mha_cross(p, x, enc, *, h, d_model, residual):
    Dp = _round_up(d_model, 128)
    q = linear(x, p["q"]["w"], p["q"]["b"], out_dim=d_model)
    kv = linear(enc, p["kv"]["w"], p["kv"]["b"])        # fused K/V projection
    k = kv[..., 0:d_model]
    v = kv[..., Dp:Dp + d_model]
    return _mha_core(q, k, v, p["o"], residual, h=h, d_model=d_model, causal=False)


def encoder_layer(p, x, *, h, d_model):
    attn = mha_self(p["mha"], x, h=h, d_model=d_model, causal=False, residual=x)
    n1 = layer_norm(attn, p["ln1"]["g"], p["ln1"]["b"])
    hdn = linear(n1, p["ff1"]["w"], p["ff1"]["b"], activation="relu")
    ffn = linear(hdn, p["ff2"]["w"], p["ff2"]["b"], out_dim=d_model, residual=n1)
    return layer_norm(ffn, p["ln2"]["g"], p["ln2"]["b"])


def decoder_layer(p, x, enc, *, h, d_model):
    m1 = mha_self(p["mmha"], x, h=h, d_model=d_model, causal=True, residual=x)
    n1 = layer_norm(m1, p["ln1"]["g"], p["ln1"]["b"])
    m2 = mha_cross(p["mha"], n1, enc, h=h, d_model=d_model, residual=n1)
    n2 = layer_norm(m2, p["ln2"]["g"], p["ln2"]["b"])
    hdn = linear(n2, p["ff1"]["w"], p["ff1"]["b"], activation="relu")
    ffn = linear(hdn, p["ff2"]["w"], p["ff2"]["b"], out_dim=d_model, residual=n2)
    return layer_norm(ffn, p["ln3"]["g"], p["ln3"]["b"])


def embeddings(emb_params, tokens, pe, d_model, compute_dtype):
    # TODO(synk): the nn.Embedding gather (data-dependent row lookup) stays in
    # plain JAX; a Pallas per-row DMA gather is not worth it at these sizes.
    emb = jnp.take(emb_params["table"], tokens, axis=0) * math.sqrt(float(d_model))
    return (emb + pe[None, : tokens.shape[1], :]).astype(compute_dtype)


def transformer_forward(params, x_tok, y_tok, *, h, d_model, vocab):
    cdt = params["proj"]["w"].dtype
    pe = params["pe"]
    x = embeddings(params["inp_emb"], x_tok, pe, d_model, cdt)
    for lp in params["encoder"]:
        x = encoder_layer(lp, x, h=h, d_model=d_model)
    y = embeddings(params["out_emb"], y_tok, pe, d_model, cdt)
    for lp in params["decoder"]:
        y = decoder_layer(lp, y, x, h=h, d_model=d_model)
    logits = linear(y, params["proj"]["w"], params["proj"]["b"], out_dim=vocab)
    return softmax_over_seq(logits)       # nn.Softmax(dim=1): over the seq axis


# ---------------------------------------------------------------------------
# One-time parameter preparation (pad + cast; runs outside the jitted forward)
# ---------------------------------------------------------------------------
def _prep_linear(p, dtype):
    din, dout = p["w"].shape
    Kp, Np = _round_up(din, 128), _round_up(dout, 128)
    w = jnp.pad(p["w"], ((0, Kp - din), (0, Np - dout))).astype(dtype)
    b = jnp.pad(p["b"], (0, Np - dout)).astype(jnp.float32).reshape(1, Np)
    return {"w": w, "b": b}


def _prep_fused(ps, dtype):
    """Concat several same-input linears along the output axis, each padded to
    a 128-aligned chunk so the fused result can be sliced at lane boundaries."""
    din = ps[0]["w"].shape[0]
    Kp = _round_up(din, 128)
    ws, bs = [], []
    for p in ps:
        dout = p["w"].shape[1]
        Np = _round_up(dout, 128)
        ws.append(jnp.pad(p["w"], ((0, Kp - din), (0, Np - dout))))
        bs.append(jnp.pad(p["b"], (0, Np - dout)))
    w = jnp.concatenate(ws, axis=1).astype(dtype)
    b = jnp.concatenate(bs).astype(jnp.float32).reshape(1, -1)
    return {"w": w, "b": b}


def _prep_mha(p, dtype, fuse_q):
    out = {"o": _prep_linear(p["o"], dtype)}
    if fuse_q:
        out["qkv"] = _prep_fused([p["q"], p["k"], p["v"]], dtype)
    else:
        out["q"] = _prep_linear(p["q"], dtype)
        out["kv"] = _prep_fused([p["k"], p["v"]], dtype)
    return out


def _prep_ln(p):
    return {"g": p["g"].astype(jnp.float32), "b": p["b"].astype(jnp.float32)}


def prepare_params(params, *, dtype=jnp.bfloat16):
    enc = [{
        "mha": _prep_mha(lp["mha"], dtype, fuse_q=True),
        "ln1": _prep_ln(lp["ln1"]), "ln2": _prep_ln(lp["ln2"]),
        "ff1": _prep_linear(lp["ff1"], dtype),
        "ff2": _prep_linear(lp["ff2"], dtype),
    } for lp in params["encoder"]]
    dec = [{
        "mmha": _prep_mha(lp["mmha"], dtype, fuse_q=True),
        "mha": _prep_mha(lp["mha"], dtype, fuse_q=False),
        "ln1": _prep_ln(lp["ln1"]), "ln2": _prep_ln(lp["ln2"]),
        "ln3": _prep_ln(lp["ln3"]),
        "ff1": _prep_linear(lp["ff1"], dtype),
        "ff2": _prep_linear(lp["ff2"], dtype),
    } for lp in params["decoder"]]
    return {
        "pe": params["pe"].astype(jnp.float32),
        "inp_emb": {"table": params["inp_emb"]["table"].astype(jnp.float32)},
        "out_emb": {"table": params["out_emb"]["table"].astype(jnp.float32)},
        "encoder": enc,
        "decoder": dec,
        "proj": _prep_linear(params["proj"], dtype),
    }


# ---------------------------------------------------------------------------
# Parameter init (PyTorch defaults: LN weight=1, bias=0; others random)
# ---------------------------------------------------------------------------
def positional_encoding(seq_len, d_model, n=10000.0):
    pos = jnp.arange(seq_len, dtype=jnp.float32)[:, None]
    div = jnp.exp(jnp.arange(0, d_model, 2, dtype=jnp.float32)
                  * (-math.log(n) / d_model))
    fm = pos * div[None, :]
    pe = jnp.zeros((seq_len, d_model), jnp.float32)
    pe = pe.at[:, 1::2].set(jnp.cos(fm))
    pe = pe.at[:, 0::2].set(jnp.sin(fm))
    return pe


def _init_linear(key, din, dout, scale=0.05):
    kw, kb = jax.random.split(key)
    return {"w": jax.random.normal(kw, (din, dout), jnp.float32) * scale,
            "b": jax.random.normal(kb, (dout,), jnp.float32) * scale}


def _init_ln(d):
    return {"g": jnp.ones((d,), jnp.float32), "b": jnp.zeros((d,), jnp.float32)}


def _init_mha(key, d_model):
    ks = jax.random.split(key, 4)
    return {"q": _init_linear(ks[0], d_model, d_model),
            "k": _init_linear(ks[1], d_model, d_model),
            "v": _init_linear(ks[2], d_model, d_model),
            "o": _init_linear(ks[3], d_model, d_model)}


def _init_encoder_layer(key, d_model, d_ff):
    ks = jax.random.split(key, 3)
    return {"mha": _init_mha(ks[0], d_model),
            "ln1": _init_ln(d_model), "ln2": _init_ln(d_model),
            "ff1": _init_linear(ks[1], d_model, d_ff),
            "ff2": _init_linear(ks[2], d_ff, d_model)}


def _init_decoder_layer(key, d_model, d_ff):
    ks = jax.random.split(key, 4)
    return {"mmha": _init_mha(ks[0], d_model),
            "mha": _init_mha(ks[1], d_model),
            "ln1": _init_ln(d_model), "ln2": _init_ln(d_model),
            "ln3": _init_ln(d_model),
            "ff1": _init_linear(ks[2], d_model, d_ff),
            "ff2": _init_linear(ks[3], d_ff, d_model)}


def init_transformer(key, *, vocab, seq_len, d_model, d_ff, n_x):
    keys = jax.random.split(key, 2 * n_x + 3)
    return {
        "pe": positional_encoding(seq_len, d_model),
        "inp_emb": {"table": jax.random.normal(keys[0], (vocab, d_model), jnp.float32) * 0.05},
        "out_emb": {"table": jax.random.normal(keys[1], (vocab, d_model), jnp.float32) * 0.05},
        "encoder": [_init_encoder_layer(keys[2 + i], d_model, d_ff) for i in range(n_x)],
        "decoder": [_init_decoder_layer(keys[2 + n_x + i], d_model, d_ff) for i in range(n_x)],
        "proj": _init_linear(keys[2 + 2 * n_x], d_model, vocab),
    }


# ---------------------------------------------------------------------------
# Pure-JAX f32 reference for validation
# ---------------------------------------------------------------------------
def _linear_ref(x, p):
    return jnp.dot(x, p["w"]) + p["b"]


def _layer_norm_ref(x, g, b, eps=LN_EPS):
    m = jnp.mean(x, -1, keepdims=True)
    v = jnp.mean((x - m) ** 2, -1, keepdims=True)
    return (x - m) / jnp.sqrt(v + eps) * g + b


def _mha_ref(p, Q, K, V, *, h, d_model, causal):
    B, Sq, D = Q.shape
    Sk = K.shape[1]
    dk = d_model // h
    q = _linear_ref(Q, p["q"]).reshape(B, Sq, h, dk).transpose(0, 2, 1, 3)
    k = _linear_ref(K, p["k"]).reshape(B, Sk, h, dk).transpose(0, 2, 1, 3)
    v = _linear_ref(V, p["v"]).reshape(B, Sk, h, dk).transpose(0, 2, 1, 3)
    s = jnp.einsum("bhqd,bhkd->bhqk", q, k) / math.sqrt(d_model)
    if causal:
        mask = jnp.tril(jnp.ones((Sq, Sk)))
        s = jnp.where(mask == 0, -jnp.inf, s)
    a = jax.nn.softmax(s, axis=-1)
    o = jnp.einsum("bhqk,bhkd->bhqd", a, v)
    o = o.transpose(0, 2, 1, 3).reshape(B, Sq, D)
    return _linear_ref(o, p["o"])


def _ff_ref(p, x):
    return _linear_ref(jnp.maximum(_linear_ref(x, p["ff1"]), 0.0), p["ff2"])


def transformer_ref(params, x_tok, y_tok, *, h, d_model):
    pe = params["pe"]

    def emb(p, t):
        return jnp.take(p["table"], t, axis=0) * math.sqrt(float(d_model)) \
            + pe[None, : t.shape[1], :]

    x = emb(params["inp_emb"], x_tok)
    for lp in params["encoder"]:
        m = _mha_ref(lp["mha"], x, x, x, h=h, d_model=d_model, causal=False)
        n1 = _layer_norm_ref(x + m, lp["ln1"]["g"], lp["ln1"]["b"])
        x = _layer_norm_ref(n1 + _ff_ref(lp, n1), lp["ln2"]["g"], lp["ln2"]["b"])
    y = emb(params["out_emb"], y_tok)
    for lp in params["decoder"]:
        m1 = _mha_ref(lp["mmha"], y, y, y, h=h, d_model=d_model, causal=True)
        n1 = _layer_norm_ref(y + m1, lp["ln1"]["g"], lp["ln1"]["b"])
        m2 = _mha_ref(lp["mha"], n1, x, x, h=h, d_model=d_model, causal=False)
        n2 = _layer_norm_ref(n1 + m2, lp["ln2"]["g"], lp["ln2"]["b"])
        y = _layer_norm_ref(n2 + _ff_ref(lp, n2), lp["ln3"]["g"], lp["ln3"]["b"])
    logits = _linear_ref(y, params["proj"])
    return jax.nn.softmax(logits, axis=1)


if __name__ == "__main__":
    # Small stand-in for config(vocab_size, seq_length, d_model=512, num_heads=8, n_x=6)
    B, S = 2, 8
    D_MODEL, N_HEADS, D_FF, VOCAB, N_X = 32, 4, 64, 32, 2

    key = jax.random.PRNGKey(0)
    kp, kx, ky = jax.random.split(key, 3)
    raw_params = init_transformer(kp, vocab=VOCAB, seq_len=S, d_model=D_MODEL,
                                  d_ff=D_FF, n_x=N_X)
    x_tok = jax.random.randint(kx, (B, S), 0, VOCAB, dtype=jnp.int32)
    y_tok = jax.random.randint(ky, (B, S), 0, VOCAB, dtype=jnp.int32)

    # One-time weight padding + bf16 cast (outside the jitted forward).
    prepared = prepare_params(raw_params, dtype=jnp.bfloat16)

    fwd = jax.jit(functools.partial(transformer_forward, h=N_HEADS,
                                    d_model=D_MODEL, vocab=VOCAB))
    out = jax.block_until_ready(fwd(prepared, x_tok, y_tok))
    assert out.shape == (B, S, VOCAB)

    # ---- Unit check: LayerNorm kernel (f32, tight tolerance) ----------------
    ka, kb = jax.random.split(kx)
    r = jax.random.normal(ka, (B, S, D_MODEL), jnp.float32)
    z = jax.random.normal(kb, (B, S, D_MODEL), jnp.float32)
    g = jnp.ones((D_MODEL,), jnp.float32)
    bta = jnp.zeros((D_MODEL,), jnp.float32)
    ln_out = jax.block_until_ready(layer_norm(r + z, g, bta))
    ln_ref = _layer_norm_ref(r + z, g, bta)
    assert jnp.allclose(ln_out, ln_ref, atol=1e-4, rtol=1e-4), "LayerNorm mismatch"

    # ---- Unit check: flash attention kernel (f32, causal) -------------------
    dk = D_MODEL // N_HEADS
    kq, kk, kv = jax.random.split(ky, 3)
    qa = jax.random.normal(kq, (B * N_HEADS, S, dk), jnp.float32)
    ka_ = jax.random.normal(kk, (B * N_HEADS, S, dk), jnp.float32)
    va = jax.random.normal(kv, (B * N_HEADS, S, dk), jnp.float32)
    att = jax.block_until_ready(
        dot_product_attention(qa, ka_, va, scale=1.0 / math.sqrt(D_MODEL),
                              causal=True))
    s_ref = jnp.einsum("bqd,bkd->bqk", qa, ka_) / math.sqrt(D_MODEL)
    tri = jnp.tril(jnp.ones((S, S)))
    s_ref = jnp.where(tri == 0, -jnp.inf, s_ref)
    att_ref = jnp.einsum("bqk,bkd->bqd", jax.nn.softmax(s_ref, axis=-1), va)
    assert jnp.allclose(att, att_ref, atol=1e-2, rtol=1e-2), "attention mismatch"

    # ---- End-to-end vs pure-JAX f32 reference (bf16 tolerance) --------------
    ref = transformer_ref(raw_params, x_tok, y_tok, h=N_HEADS, d_model=D_MODEL)
    max_diff = float(jnp.max(jnp.abs(out - ref)))
    assert max_diff < 3e-2, f"transformer output mismatch: {max_diff}"
    assert bool(jnp.all(jnp.isfinite(out)))
    print("KERNEL_OK")
</pallas_src>

<mosaic_0001>
module attributes {stable_mosaic.version = 11 : i64} {
  func.func @_matmul_kernel(%arg0: i32, %arg1: i32, %arg2: i32, %arg3: memref<16x128xbf16, #tpu.memory_space<vmem>>, %arg4: memref<128x128xbf16, #tpu.memory_space<vmem>>, %arg5: memref<1x128xf32, #tpu.memory_space<vmem>>, %arg6: memref<16x128xbf16, #tpu.memory_space<vmem>>, %arg7: memref<16x128xf32, #tpu.memory_space<vmem>>) attributes {dimension_semantics = [#tpu.dimension_semantics<parallel>, #tpu.dimension_semantics<parallel>, #tpu.dimension_semantics<arbitrary>], iteration_bounds = array<i64: 1, 3, 1>, scalar_prefetch = 0 : i64, scratch_operands = 1 : i64, tpu.core_type = #tpu.core_type<tc>, window_params = [{transform_indices = @transform_0, window_bounds = array<i64: 16, 128>}, {transform_indices = @transform_1, window_bounds = array<i64: 128, 128>}, {transform_indices = @transform_2, window_bounds = array<i64: 1, 128>}, {transform_indices = @transform_3, window_bounds = array<i64: 16, 128>}]} {
    %c0_i32 = arith.constant 0 : i32
    %0 = arith.cmpi eq, %arg2, %c0_i32 : i32
    %1 = arith.extui %0 : i1 to i32
    %c0_i32_0 = arith.constant 0 : i32
    %2 = arith.cmpi ne, %1, %c0_i32_0 : i32
    scf.if %2 {
      %cst_10 = arith.constant 0.000000e+00 : f32
      %12 = vector.broadcast %cst_10 : f32 to vector<16x128xf32>
      %c0_11 = arith.constant 0 : index
      %c0_12 = arith.constant 0 : index
      %13 = vector.load %arg7[%c0_11, %c0_12] : memref<16x128xf32, #tpu.memory_space<vmem>>, vector<16x128xf32>
      tpu.vector_store %arg7[%c0_11, %c0_12], %12 {strides = array<i32>} : memref<16x128xf32, #tpu.memory_space<vmem>>, vector<16x128xf32>,
    } else {
    }
    %c0 = arith.constant 0 : index
    %c0_1 = arith.constant 0 : index
    %3 = vector.load %arg7[%c0, %c0_1] : memref<16x128xf32, #tpu.memory_space<vmem>>, vector<16x128xf32>
    %c0_2 = arith.constant 0 : index
    %c0_3 = arith.constant 0 : index
    %4 = vector.load %arg3[%c0_2, %c0_3] : memref<16x128xbf16, #tpu.memory_space<vmem>>, vector<16x128xbf16>
    %c0_4 = arith.constant 0 : index
    %c0_5 = arith.constant 0 : index
    %5 = vector.load %arg4[%c0_4, %c0_5] : memref<128x128xbf16, #tpu.memory_space<vmem>>, vector<128x128xbf16>
    %cst = arith.constant dense<0.000000e+00> : vector<16x128xf32>
    %6 = tpu.matmul %4, %5, %cst {dimension_numbers = #tpu.dot_dimension_numbers<[1], [0], [0], [1], [0, 0, 1, 1], [], []>} : vector<16x128xbf16>, vector<128x128xbf16>, vector<16x128xf32> -> vector<16x128xf32>
    %7 = arith.addf %3, %6 : vector<16x128xf32>
    %c0_6 = arith.constant 0 : index
    %c0_7 = arith.constant 0 : index
    %8 = vector.load %arg7[%c0_6, %c0_7] : memref<16x128xf32, #tpu.memory_space<vmem>>, vector<16x128xf32>
    tpu.vector_store %arg7[%c0_6, %c0_7], %7 {strides = array<i32>} : memref<16x128xf32, #tpu.memory_space<vmem>>, vector<16x128xf32>,
    %c0_i32_8 = arith.constant 0 : i32
    %9 = arith.cmpi eq, %arg2, %c0_i32_8 : i32
    %10 = arith.extui %9 : i1 to i32
    %c0_i32_9 = arith.constant 0 : i32
    %11 = arith.cmpi ne, %10, %c0_i32_9 : i32
    scf.if %11 {
      %c0_10 = arith.constant 0 : index
      %c0_11 = arith.constant 0 : index
      %12 = vector.load %arg7[%c0_10, %c0_11] : memref<16x128xf32, #tpu.memory_space<vmem>>, vector<16x128xf32>
      %c0_12 = arith.constant 0 : index
      %c0_13 = arith.constant 0 : index
      %13 = vector.load %arg5[%c0_12, %c0_13] : memref<1x128xf32, #tpu.memory_space<vmem>>, vector<1x128xf32>
      %14 = vector.broadcast %13 : vector<1x128xf32> to vector<16x128xf32>
      %15 = arith.addf %12, %14 : vector<16x128xf32>
      %16 = arith.truncf %15 : vector<16x128xf32> to vector<16x128xbf16>
      %c0_14 = arith.constant 0 : index
      %c0_15 = arith.constant 0 : index
      %17 = vector.load %arg6[%c0_14, %c0_15] : memref<16x128xbf16, #tpu.memory_space<vmem>>, vector<16x128xbf16>
      tpu.vector_store %arg6[%c0_14, %c0_15], %16 {strides = array<i32>} : memref<16x128xbf16, #tpu.memory_space<vmem>>, vector<16x128xbf16>,
    } else {
    }
    return
  }
  func.func @transform_0(%arg0: i32, %arg1: i32, %arg2: i32) -> (i32, i32) {
    %c0_i32 = arith.constant 0 : i32
    return %arg0, %arg2 : i32, i32
  }
  func.func @transform_1(%arg0: i32, %arg1: i32, %arg2: i32) -> (i32, i32) {
    %c0_i32 = arith.constant 0 : i32
    return %arg2, %arg1 : i32, i32
  }
  func.func @transform_2(%arg0: i32, %arg1: i32, %arg2: i32) -> (i32, i32) {
    %c0_i32 = arith.constant 0 : i32
    %c0_i32_0 = arith.constant 0 : i32
    return %c0_i32, %arg1 : i32, i32
  }
  func.func @transform_3(%arg0: i32, %arg1: i32, %arg2: i32) -> (i32, i32) {
    %c0_i32 = arith.constant 0 : i32
    return %arg0, %arg1 : i32, i32
  }
}

module attributes {stable_mosaic.version = 11 : i64} {
  func.func @_flash_attn_kernel(%arg0: i32, %arg1: i32, %arg2: i32, %arg3: memref<8x8x8xbf16, #tpu.memory_space<vmem>>, %arg4: memref<8x8x8xbf16, #tpu.memory_space<vmem>>, %arg5: memref<8x8x8xbf16, #tpu.memory_space<vmem>>, %arg6: memref<8x8x8xbf16, #tpu.memory_space<vmem>>, %arg7: memref<8x8x1xf32, #tpu.memory_space<vmem>>, %arg8: memref<8x8x1xf32, #tpu.memory_space<vmem>>, %arg9: memref<8x8x8xf32, #tpu.memory_space<vmem>>) attributes {dimension_semantics = [#tpu.dimension_semantics<parallel>, #tpu.dimension_semantics<parallel>, #tpu.dimension_semantics<arbitrary>], iteration_bounds = array<i64: 1, 1, 1>, scalar_prefetch = 0 : i64, scratch_operands = 3 : i64, tpu.core_type = #tpu.core_type<tc>, window_params = [{transform_indices = @transform_0, window_bounds = array<i64: 8, 8, 8>}, {transform_indices = @transform_1, window_bounds = array<i64: 8, 8, 8>}, {transform_indices = @transform_2, window_bounds = array<i64: 8, 8, 8>}, {transform_indices = @transform_3, window_bounds = array<i64: 8, 8, 8>}]} {
    %c0_i32 = arith.constant 0 : i32
    %0 = arith.cmpi eq, %arg2, %c0_i32 : i32
    %1 = arith.extui %0 : i1 to i32
    %c0_i32_0 = arith.constant 0 : i32
    %2 = arith.cmpi ne, %1, %c0_i32_0 : i32
    scf.if %2 {
      %cst_37 = arith.constant -1.000000e+30 : f32
      %51 = vector.broadcast %cst_37 : f32 to vector<8x8x1xf32>
      %c0_38 = arith.constant 0 : index
      %c0_39 = arith.constant 0 : index
      %c0_40 = arith.constant 0 : index
      %52 = vector.load %arg7[%c0_38, %c0_39, %c0_40] : memref<8x8x1xf32, #tpu.memory_space<vmem>>, vector<8x8x1xf32>
      tpu.vector_store %arg7[%c0_38, %c0_39, %c0_40], %51 {strides = array<i32>} : memref<8x8x1xf32, #tpu.memory_space<vmem>>, vector<8x8x1xf32>,
      %cst_41 = arith.constant 0.000000e+00 : f32
      %53 = vector.broadcast %cst_41 : f32 to vector<8x8x1xf32>
      %c0_42 = arith.constant 0 : index
      %c0_43 = arith.constant 0 : index
      %c0_44 = arith.constant 0 : index
      %54 = vector.load %arg8[%c0_42, %c0_43, %c0_44] : memref<8x8x1xf32, #tpu.memory_space<vmem>>, vector<8x8x1xf32>
      tpu.vector_store %arg8[%c0_42, %c0_43, %c0_44], %53 {strides = array<i32>} : memref<8x8x1xf32, #tpu.memory_space<vmem>>, vector<8x8x1xf32>,
      %cst_45 = arith.constant 0.000000e+00 : f32
      %55 = vector.broadcast %cst_45 : f32 to vector<8x8x8xf32>
      %c0_46 = arith.constant 0 : index
      %c0_47 = arith.constant 0 : index
      %c0_48 = arith.constant 0 : index
      %56 = vector.load %arg9[%c0_46, %c0_47, %c0_48] : memref<8x8x8xf32, #tpu.memory_space<vmem>>, vector<8x8x8xf32>
      tpu.vector_store %arg9[%c0_46, %c0_47, %c0_48], %55 {strides = array<i32>} : memref<8x8x8xf32, #tpu.memory_space<vmem>>, vector<8x8x8xf32>,
    } else {
    }
    %c0 = arith.constant 0 : index
    %c0_1 = arith.constant 0 : index
    %c0_2 = arith.constant 0 : index
    %3 = vector.load %arg3[%c0, %c0_1, %c0_2] : memref<8x8x8xbf16, #tpu.memory_space<vmem>>, vector<8x8x8xbf16>
    %c0_3 = arith.constant 0 : index
    %c0_4 = arith.constant 0 : index
    %c0_5 = arith.constant 0 : index
    %4 = vector.load %arg4[%c0_3, %c0_4, %c0_5] : memref<8x8x8xbf16, #tpu.memory_space<vmem>>, vector<8x8x8xbf16>
    "tpu.trace_start"() <{level = 10 : i32, message = "gqd,gdk->gqk"}> : () -> ()
    %cst = arith.constant dense<0.000000e+00> : vector<8x8x8xf32>
    %5 = tpu.matmul %3, %4, %cst {dimension_numbers = #tpu.dot_dimension_numbers<[2], [1], [1], [2], [0, 0, 0, 1, 1, 2], [0], [0]>} : vector<8x8x8xbf16>, vector<8x8x8xbf16>, vector<8x8x8xf32> -> vector<8x8x8xf32>
    "tpu.trace_stop"() : () -> ()
    %cst_6 = arith.constant 0.176776692 : f32
    %6 = vector.broadcast %cst_6 : f32 to vector<8x8x8xf32>
    %7 = arith.mulf %5, %6 : vector<8x8x8xf32>
    %c8_i32 = arith.constant 8 : i32
    %8 = arith.muli %arg1, %c8_i32 : i32
    %9 = tpu.iota {dimensions = array<i32: 1>} : vector<8x8x8xi32>
    %10 = vector.broadcast %8 : i32 to vector<8x8x8xi32>
    %11 = arith.addi %10, %9 : vector<8x8x8xi32>
    %c8_i32_7 = arith.constant 8 : i32
    %12 = arith.muli %arg2, %c8_i32_7 : i32
    %13 = tpu.iota {dimensions = array<i32: 2>} : vector<8x8x8xi32>
    %14 = vector.broadcast %12 : i32 to vector<8x8x8xi32>
    %15 = arith.addi %14, %13 : vector<8x8x8xi32>
    %c8_i32_8 = arith.constant 8 : i32
    %16 = vector.broadcast %c8_i32_8 : i32 to vector<8x8x8xi32>
    %17 = arith.cmpi slt, %15, %16 : vector<8x8x8xi32>
    %18 = arith.cmpi sle, %15, %11 : vector<8x8x8xi32>
    %19 = arith.andi %17, %18 : vector<8x8x8xi1>
    %cst_9 = arith.constant -1.000000e+30 : f32
    %20 = vector.broadcast %cst_9 : f32 to vector<8x8x8xf32>
    %21 = arith.select %19, %7, %20 : vector<8x8x8xi1>, vector<8x8x8xf32>
    %c0_10 = arith.constant 0 : index
    %c0_11 = arith.constant 0 : index
    %c0_12 = arith.constant 0 : index
    %22 = vector.load %arg7[%c0_10, %c0_11, %c0_12] : memref<8x8x1xf32, #tpu.memory_space<vmem>>, vector<8x8x1xf32>
    %cst_13 = arith.constant dense<0xFF800000> : vector<8x8xf32>
    %23 = vector.multi_reduction <maximumf>, %21, %cst_13 [2] : vector<8x8x8xf32> to vector<8x8xf32>
    %24 = vector.shape_cast %23 : vector<8x8xf32> to vector<8x8x1xf32>
    %25 = arith.maximumf %22, %24 : vector<8x8x1xf32>
    %26 = arith.subf %22, %25 : vector<8x8x1xf32>
    %27 = math.exp %26 : vector<8x8x1xf32>
    %28 = vector.broadcast %25 : vector<8x8x1xf32> to vector<8x8x8xf32>
    %29 = arith.subf %21, %28 : vector<8x8x8xf32>
    %30 = math.exp %29 : vector<8x8x8xf32>
    %cst_14 = arith.constant 0.000000e+00 : f32
    %31 = vector.broadcast %cst_14 : f32 to vector<8x8x8xf32>
    %32 = arith.select %19, %30, %31 : vector<8x8x8xi1>, vector<8x8x8xf32>
    %c0_15 = arith.constant 0 : index
    %c0_16 = arith.constant 0 : index
    %c0_17 = arith.constant 0 : index
    %33 = vector.load %arg8[%c0_15, %c0_16, %c0_17] : memref<8x8x1xf32, #tpu.memory_space<vmem>>, vector<8x8x1xf32>
    %34 = arith.mulf %27, %33 : vector<8x8x1xf32>
    %cst_18 = arith.constant dense<0.000000e+00> : vector<8x8xf32>
    %35 = vector.multi_reduction <add>, %32, %cst_18 [2] : vector<8x8x8xf32> to vector<8x8xf32>
    %36 = vector.shape_cast %35 : vector<8x8xf32> to vector<8x8x1xf32>
    %37 = arith.addf %34, %36 : vector<8x8x1xf32>
    %c0_19 = arith.constant 0 : index
    %c0_20 = arith.constant 0 : index
    %c0_21 = arith.constant 0 : index
    %38 = vector.load %arg8[%c0_19, %c0_20, %c0_21] : memref<8x8x1xf32, #tpu.memory_space<vmem>>, vector<8x8x1xf32>
    tpu.vector_store %arg8[%c0_19, %c0_20, %c0_21], %37 {strides = array<i32>} : memref<8x8x1xf32, #tpu.memory_space<vmem>>, vector<8x8x1xf32>,
    %c0_22 = arith.constant 0 : index
    %c0_23 = arith.constant 0 : index
    %c0_24 = arith.constant 0 : index
    %39 = vector.load %arg9[%c0_22, %c0_23, %c0_24] : memref<8x8x8xf32, #tpu.memory_space<vmem>>, vector<8x8x8xf32>
    %40 = vector.broadcast %27 : vector<8x8x1xf32> to vector<8x8x8xf32>
    %41 = arith.mulf %40, %39 : vector<8x8x8xf32>
    %42 = arith.truncf %32 : vector<8x8x8xf32> to vector<8x8x8xbf16>
    %c0_25 = arith.constant 0 : index
    %c0_26 = arith.constant 0 : index
    %c0_27 = arith.constant 0 : index
    %43 = vector.load %arg5[%c0_25, %c0_26, %c0_27] : memref<8x8x8xbf16, #tpu.memory_space<vmem>>, vector<8x8x8xbf16>
    "tpu.trace_start"() <{level = 10 : i32, message = "gqk,gkd->gqd"}> : () -> ()
    %cst_28 = arith.constant dense<0.000000e+00> : vector<8x8x8xf32>
    %44 = tpu.matmul %42, %43, %cst_28 {dimension_numbers = #tpu.dot_dimension_numbers<[2], [1], [1], [2], [0, 0, 0, 1, 1, 2], [0], [0]>} : vector<8x8x8xbf16>, vector<8x8x8xbf16>, vector<8x8x8xf32> -> vector<8x8x8xf32>
    "tpu.trace_stop"() : () -> ()
    %45 = arith.addf %41, %44 : vector<8x8x8xf32>
    %c0_29 = arith.constant 0 : index
    %c0_30 = arith.constant 0 : index
    %c0_31 = arith.constant 0 : index
    %46 = vector.load %arg9[%c0_29, %c0_30, %c0_31] : memref<8x8x8xf32, #tpu.memory_space<vmem>>, vector<8x8x8xf32>
    tpu.vector_store %arg9[%c0_29, %c0_30, %c0_31], %45 {strides = array<i32>} : memref<8x8x8xf32, #tpu.memory_space<vmem>>, vector<8x8x8xf32>,
    %c0_32 = arith.constant 0 : index
    %c0_33 = arith.constant 0 : index
    %c0_34 = arith.constant 0 : index
    %47 = vector.load %arg7[%c0_32, %c0_33, %c0_34] : memref<8x8x1xf32, #tpu.memory_space<vmem>>, vector<8x8x1xf32>
    tpu.vector_store %arg7[%c0_32, %c0_33, %c0_34], %25 {strides = array<i32>} : memref<8x8x1xf32, #tpu.memory_space<vmem>>, vector<8x8x1xf32>,
    %c0_i32_35 = arith.constant 0 : i32
    %48 = arith.cmpi eq, %arg2, %c0_i32_35 : i32
    %49 = arith.extui %48 : i1 to i32
    %c0_i32_36 = arith.constant 0 : i32
    %50 = arith.cmpi ne, %49, %c0_i32_36 : i32
    scf.if %50 {
      %c0_37 = arith.constant 0 : index
      %c0_38 = arith.constant 0 : index
      %c0_39 = arith.constant 0 : index
      %51 = vector.load %arg8[%c0_37, %c0_38, %c0_39] : memref<8x8x1xf32, #tpu.memory_space<vmem>>, vector<8x8x1xf32>
      %52 = tpu.reciprocal %51 {approx = true} : vector<8x8x1xf32> -> vector<8x8x1xf32>
      %c0_40 = arith.constant 0 : index
      %c0_41 = arith.constant 0 : index
      %c0_42 = arith.constant 0 : index
      %53 = vector.load %arg9[%c0_40, %c0_41, %c0_42] : memref<8x8x8xf32, #tpu.memory_space<vmem>>, vector<8x8x8xf32>
      %54 = vector.broadcast %52 : vector<8x8x1xf32> to vector<8x8x8xf32>
      %55 = arith.mulf %53, %54 : vector<8x8x8xf32>
      %56 = arith.truncf %55 : vector<8x8x8xf32> to vector<8x8x8xbf16>
      %c0_43 = arith.constant 0 : index
      %c0_44 = arith.constant 0 : index
      %c0_45 = arith.constant 0 : index
      %57 = vector.load %arg6[%c0_43, %c0_44, %c0_45] : memref<8x8x8xbf16, #tpu.memory_space<vmem>>, vector<8x8x8xbf16>
      tpu.vector_store %arg6[%c0_43, %c0_44, %c0_45], %56 {strides = array<i32>} : memref<8x8x8xbf16, #tpu.memory_space<vmem>>, vector<8x8x8xbf16>,
    } else {
    }
    return
  }
  func.func @transform_0(%arg0: i32, %arg1: i32, %arg2: i32) -> (i32, i32, i32) {
    %c0_i32 = arith.constant 0 : i32
    %c0_i32_0 = arith.constant 0 : i32
    return %arg0, %arg1, %c0_i32 : i32, i32, i32
  }
  func.func @transform_1(%arg0: i32, %arg1: i32, %arg2: i32) -> (i32, i32, i32) {
    %c0_i32 = arith.constant 0 : i32
    %c0_i32_0 = arith.constant 0 : i32
    return %arg0, %c0_i32, %arg2 : i32, i32, i32
  }
  func.func @transform_2(%arg0: i32, %arg1: i32, %arg2: i32) -> (i32, i32, i32) {
    %c0_i32 = arith.constant 0 : i32
    %c0_i32_0 = arith.constant 0 : i32
    return %arg0, %arg2, %c0_i32 : i32, i32, i32
  }
  func.func @transform_3(%arg0: i32, %arg1: i32, %arg2: i32) -> (i32, i32, i32) {
    %c0_i32 = arith.constant 0 : i32
    %c0_i32_0 = arith.constant 0 : i32
    return %arg0, %arg1, %c0_i32 : i32, i32, i32
  }
}

module attributes {stable_mosaic.version = 11 : i64} {
  func.func @_matmul_res_kernel(%arg0: i32, %arg1: i32, %arg2: i32, %arg3: memref<16x128xbf16, #tpu.memory_space<vmem>>, %arg4: memref<128x128xbf16, #tpu.memory_space<vmem>>, %arg5: memref<1x128xf32, #tpu.memory_space<vmem>>, %arg6: memref<16x128xbf16, #tpu.memory_space<vmem>>, %arg7: memref<16x128xbf16, #tpu.memory_space<vmem>>, %arg8: memref<16x128xf32, #tpu.memory_space<vmem>>) attributes {dimension_semantics = [#tpu.dimension_semantics<parallel>, #tpu.dimension_semantics<parallel>, #tpu.dimension_semantics<arbitrary>], iteration_bounds = array<i64: 1, 1, 1>, scalar_prefetch = 0 : i64, scratch_operands = 1 : i64, tpu.core_type = #tpu.core_type<tc>, window_params = [{transform_indices = @transform_0, window_bounds = array<i64: 16, 128>}, {transform_indices = @transform_1, window_bounds = array<i64: 128, 128>}, {transform_indices = @transform_2, window_bounds = array<i64: 1, 128>}, {transform_indices = @transform_3, window_bounds = array<i64: 16, 128>}, {transform_indices = @transform_4, window_bounds = array<i64: 16, 128>}]} {
    %c0_i32 = arith.constant 0 : i32
    %0 = arith.cmpi eq, %arg2, %c0_i32 : i32
    %1 = arith.extui %0 : i1 to i32
    %c0_i32_0 = arith.constant 0 : i32
    %2 = arith.cmpi ne, %1, %c0_i32_0 : i32
    scf.if %2 {
      %cst_10 = arith.constant 0.000000e+00 : f32
      %12 = vector.broadcast %cst_10 : f32 to vector<16x128xf32>
      %c0_11 = arith.constant 0 : index
      %c0_12 = arith.constant 0 : index
      %13 = vector.load %arg8[%c0_11, %c0_12] : memref<16x128xf32, #tpu.memory_space<vmem>>, vector<16x128xf32>
      tpu.vector_store %arg8[%c0_11, %c0_12], %12 {strides = array<i32>} : memref<16x128xf32, #tpu.memory_space<vmem>>, vector<16x128xf32>,
    } else {
    }
    %c0 = arith.constant 0 : index
    %c0_1 = arith.constant 0 : index
    %3 = vector.load %arg8[%c0, %c0_1] : memref<16x128xf32, #tpu.memory_space<vmem>>, vector<16x128xf32>
    %c0_2 = arith.constant 0 : index
    %c0_3 = arith.constant 0 : index
    %4 = vector.load %arg3[%c0_2, %c0_3] : memref<16x128xbf16, #tpu.memory_space<vmem>>, vector<16x128xbf16>
    %c0_4 = arith.constant 0 : index
    %c0_5 = arith.constant 0 : index
    %5 = vector.load %arg4[%c0_4, %c0_5] : memref<128x128xbf16, #tpu.memory_space<vmem>>, vector<128x128xbf16>
    %cst = arith.constant dense<0.000000e+00> : vector<16x128xf32>
    %6 = tpu.matmul %4, %5, %cst {dimension_numbers = #tpu.dot_dimension_numbers<[1], [0], [0], [1], [0, 0, 1, 1], [], []>} : vector<16x128xbf16>, vector<128x128xbf16>, vector<16x128xf32> -> vector<16x128xf32>
    %7 = arith.addf %3, %6 : vector<16x128xf32>
    %c0_6 = arith.constant 0 : index
    %c0_7 = arith.constant 0 : index
    %8 = vector.load %arg8[%c0_6, %c0_7] : memref<16x128xf32, #tpu.memory_space<vmem>>, vector<16x128xf32>
    tpu.vector_store %arg8[%c0_6, %c0_7], %7 {strides = array<i32>} : memref<16x128xf32, #tpu.memory_space<vmem>>, vector<16x128xf32>,
    %c0_i32_8 = arith.constant 0 : i32
    %9 = arith.cmpi eq, %arg2, %c0_i32_8 : i32
    %10 = arith.extui %9 : i1 to i32
    %c0_i32_9 = arith.constant 0 : i32
    %11 = arith.cmpi ne, %10, %c0_i32_9 : i32
    scf.if %11 {
      %c0_10 = arith.constant 0 : index
      %c0_11 = arith.constant 0 : index
      %12 = vector.load %arg8[%c0_10, %c0_11] : memref<16x128xf32, #tpu.memory_space<vmem>>, vector<16x128xf32>
      %c0_12 = arith.constant 0 : index
      %c0_13 = arith.constant 0 : index
      %13 = vector.load %arg5[%c0_12, %c0_13] : memref<1x128xf32, #tpu.memory_space<vmem>>, vector<1x128xf32>
      %14 = vector.broadcast %13 : vector<1x128xf32> to vector<16x128xf32>
      %15 = arith.addf %12, %14 : vector<16x128xf32>
      %c0_14 = arith.constant 0 : index
      %c0_15 = arith.constant 0 : index
      %16 = vector.load %arg6[%c0_14, %c0_15] : memref<16x128xbf16, #tpu.memory_space<vmem>>, vector<16x128xbf16>
      %17 = arith.extf %16 : vector<16x128xbf16> to vector<16x128xf32>
      %18 = arith.addf %15, %17 : vector<16x128xf32>
      %19 = arith.truncf %18 : vector<16x128xf32> to vector<16x128xbf16>
      %c0_16 = arith.constant 0 : index
      %c0_17 = arith.constant 0 : index
      %20 = vector.load %arg7[%c0_16, %c0_17] : memref<16x128xbf16, #tpu.memory_space<vmem>>, vector<16x128xbf16>
      tpu.vector_store %arg7[%c0_16, %c0_17], %19 {strides = array<i32>} : memref<16x128xbf16, #tpu.memory_space<vmem>>, vector<16x128xbf16>,
    } else {
    }
    return
  }
  func.func @transform_0(%arg0: i32, %arg1: i32, %arg2: i32) -> (i32, i32) {
    %c0_i32 = arith.constant 0 : i32
    return %arg0, %arg2 : i32, i32
  }
  func.func @transform_1(%arg0: i32, %arg1: i32, %arg2: i32) -> (i32, i32) {
    %c0_i32 = arith.constant 0 : i32
    return %arg2, %arg1 : i32, i32
  }
  func.func @transform_2(%arg0: i32, %arg1: i32, %arg2: i32) -> (i32, i32) {
    %c0_i32 = arith.constant 0 : i32
    %c0_i32_0 = arith.constant 0 : i32
    return %c0_i32, %arg1 : i32, i32
  }
  func.func @transform_3(%arg0: i32, %arg1: i32, %arg2: i32) -> (i32, i32) {
    %c0_i32 = arith.constant 0 : i32
    return %arg0, %arg1 : i32, i32
  }
  func.func @transform_4(%arg0: i32, %arg1: i32, %arg2: i32) -> (i32, i32) {
    %c0_i32 = arith.constant 0 : i32
    return %arg0, %arg1 : i32, i32
  }
}

module attributes {stable_mosaic.version = 11 : i64} {
  func.func @_ln_kernel(%arg0: i32, %arg1: memref<16x32xbf16, #tpu.memory_space<vmem>>, %arg2: memref<1x32xf32, #tpu.memory_space<vmem>>, %arg3: memref<1x32xf32, #tpu.memory_space<vmem>>, %arg4: memref<16x32xbf16, #tpu.memory_space<vmem>>) attributes {dimension_semantics = [#tpu.dimension_semantics<parallel>], iteration_bounds = array<i64: 1>, scalar_prefetch = 0 : i64, scratch_operands = 0 : i64, tpu.core_type = #tpu.core_type<tc>, window_params = [{transform_indices = @transform_0, window_bounds = array<i64: 16, 32>}, {pipeline_mode = #tpu.pipeline_mode<synchronous>, transform_indices = @transform_1, window_bounds = array<i64: 1, 32>}, {pipeline_mode = #tpu.pipeline_mode<synchronous>, transform_indices = @transform_2, window_bounds = array<i64: 1, 32>}, {transform_indices = @transform_3, window_bounds = array<i64: 16, 32>}]} {
    %c0 = arith.constant 0 : index
    %c0_0 = arith.constant 0 : index
    %0 = vector.load %arg1[%c0, %c0_0] : memref<16x32xbf16, #tpu.memory_space<vmem>>, vector<16x32xbf16>
    %1 = arith.extf %0 : vector<16x32xbf16> to vector<16x32xf32>
    %cst = arith.constant dense<0.000000e+00> : vector<16xf32>
    %2 = vector.multi_reduction <add>, %1, %cst [1] : vector<16x32xf32> to vector<16xf32>
    %3 = vector.shape_cast %2 : vector<16xf32> to vector<16x1xf32>
    %cst_1 = arith.constant 3.125000e-02 : f32
    %4 = vector.broadcast %cst_1 : f32 to vector<16x1xf32>
    %5 = arith.mulf %3, %4 : vector<16x1xf32>
    %6 = vector.broadcast %5 : vector<16x1xf32> to vector<16x32xf32>
    %7 = arith.subf %1, %6 : vector<16x32xf32>
    %8 = arith.mulf %7, %7 : vector<16x32xf32>
    %cst_2 = arith.constant dense<0.000000e+00> : vector<16xf32>
    %9 = vector.multi_reduction <add>, %8, %cst_2 [1] : vector<16x32xf32> to vector<16xf32>
    %10 = vector.shape_cast %9 : vector<16xf32> to vector<16x1xf32>
    %cst_3 = arith.constant 3.125000e-02 : f32
    %11 = vector.broadcast %cst_3 : f32 to vector<16x1xf32>
    %12 = arith.mulf %10, %11 : vector<16x1xf32>
    %cst_4 = arith.constant 9.99999974E-6 : f32
    %13 = vector.broadcast %cst_4 : f32 to vector<16x1xf32>
    %14 = arith.addf %12, %13 : vector<16x1xf32>
    %15 = math.rsqrt %14 : vector<16x1xf32>
    %16 = vector.broadcast %15 : vector<16x1xf32> to vector<16x32xf32>
    %17 = arith.mulf %7, %16 : vector<16x32xf32>
    %c0_5 = arith.constant 0 : index
    %c0_6 = arith.constant 0 : index
    %18 = vector.load %arg2[%c0_5, %c0_6] : memref<1x32xf32, #tpu.memory_space<vmem>>, vector<1x32xf32>
    %19 = vector.broadcast %18 : vector<1x32xf32> to vector<16x32xf32>
    %20 = arith.mulf %17, %19 : vector<16x32xf32>
    %c0_7 = arith.constant 0 : index
    %c0_8 = arith.constant 0 : index
    %21 = vector.load %arg3[%c0_7, %c0_8] : memref<1x32xf32, #tpu.memory_space<vmem>>, vector<1x32xf32>
    %22 = vector.broadcast %21 : vector<1x32xf32> to vector<16x32xf32>
    %23 = arith.addf %20, %22 : vector<16x32xf32>
    %24 = arith.truncf %23 : vector<16x32xf32> to vector<16x32xbf16>
    %c0_9 = arith.constant 0 : index
    %c0_10 = arith.constant 0 : index
    %25 = vector.load %arg4[%c0_9, %c0_10] : memref<16x32xbf16, #tpu.memory_space<vmem>>, vector<16x32xbf16>
    tpu.vector_store %arg4[%c0_9, %c0_10], %24 {strides = array<i32>} : memref<16x32xbf16, #tpu.memory_space<vmem>>, vector<16x32xbf16>,
    return
  }
  func.func @transform_0(%arg0: i32) -> (i32, i32) {
    %c0_i32 = arith.constant 0 : i32
    %c0_i32_0 = arith.constant 0 : i32
    return %arg0, %c0_i32 : i32, i32
  }
  func.func @transform_1(%arg0: i32) -> (i32, i32) {
    %c0_i32 = arith.constant 0 : i32
    %c0_i32_0 = arith.constant 0 : i32
    %c0_i32_1 = arith.constant 0 : i32
    return %c0_i32, %c0_i32_0 : i32, i32
  }
  func.func @transform_2(%arg0: i32) -> (i32, i32) {
    %c0_i32 = arith.constant 0 : i32
    %c0_i32_0 = arith.constant 0 : i32
    %c0_i32_1 = arith.constant 0 : i32
    return %c0_i32, %c0_i32_0 : i32, i32
  }
  func.func @transform_3(%arg0: i32) -> (i32, i32) {
    %c0_i32 = arith.constant 0 : i32
    %c0_i32_0 = arith.constant 0 : i32
    return %arg0, %c0_i32 : i32, i32
  }
}

module attributes {stable_mosaic.version = 11 : i64} {
  func.func @_matmul_kernel(%arg0: i32, %arg1: i32, %arg2: i32, %arg3: memref<16x128xbf16, #tpu.memory_space<vmem>>, %arg4: memref<128x128xbf16, #tpu.memory_space<vmem>>, %arg5: memref<1x128xf32, #tpu.memory_space<vmem>>, %arg6: memref<16x128xbf16, #tpu.memory_space<vmem>>, %arg7: memref<16x128xf32, #tpu.memory_space<vmem>>) attributes {dimension_semantics = [#tpu.dimension_semantics<parallel>, #tpu.dimension_semantics<parallel>, #tpu.dimension_semantics<arbitrary>], iteration_bounds = array<i64: 1, 1, 1>, scalar_prefetch = 0 : i64, scratch_operands = 1 : i64, tpu.core_type = #tpu.core_type<tc>, window_params = [{transform_indices = @transform_0, window_bounds = array<i64: 16, 128>}, {transform_indices = @transform_1, window_bounds = array<i64: 128, 128>}, {transform_indices = @transform_2, window_bounds = array<i64: 1, 128>}, {transform_indices = @transform_3, window_bounds = array<i64: 16, 128>}]} {
    %c0_i32 = arith.constant 0 : i32
    %0 = arith.cmpi eq, %arg2, %c0_i32 : i32
    %1 = arith.extui %0 : i1 to i32
    %c0_i32_0 = arith.constant 0 : i32
    %2 = arith.cmpi ne, %1, %c0_i32_0 : i32
    scf.if %2 {
      %cst_10 = arith.constant 0.000000e+00 : f32
      %12 = vector.broadcast %cst_10 : f32 to vector<16x128xf32>
      %c0_11 = arith.constant 0 : index
      %c0_12 = arith.constant 0 : index
      %13 = vector.load %arg7[%c0_11, %c0_12] : memref<16x128xf32, #tpu.memory_space<vmem>>, vector<16x128xf32>
      tpu.vector_store %arg7[%c0_11, %c0_12], %12 {strides = array<i32>} : memref<16x128xf32, #tpu.memory_space<vmem>>, vector<16x128xf32>,
    } else {
    }
    %c0 = arith.constant 0 : index
    %c0_1 = arith.constant 0 : index
    %3 = vector.load %arg7[%c0, %c0_1] : memref<16x128xf32, #tpu.memory_space<vmem>>, vector<16x128xf32>
    %c0_2 = arith.constant 0 : index
    %c0_3 = arith.constant 0 : index
    %4 = vector.load %arg3[%c0_2, %c0_3] : memref<16x128xbf16, #tpu.memory_space<vmem>>, vector<16x128xbf16>
    %c0_4 = arith.constant 0 : index
    %c0_5 = arith.constant 0 : index
    %5 = vector.load %arg4[%c0_4, %c0_5] : memref<128x128xbf16, #tpu.memory_space<vmem>>, vector<128x128xbf16>
    %cst = arith.constant dense<0.000000e+00> : vector<16x128xf32>
    %6 = tpu.matmul %4, %5, %cst {dimension_numbers = #tpu.dot_dimension_numbers<[1], [0], [0], [1], [0, 0, 1, 1], [], []>} : vector<16x128xbf16>, vector<128x128xbf16>, vector<16x128xf32> -> vector<16x128xf32>
    %7 = arith.addf %3, %6 : vector<16x128xf32>
    %c0_6 = arith.constant 0 : index
    %c0_7 = arith.constant 0 : index
    %8 = vector.load %arg7[%c0_6, %c0_7] : memref<16x128xf32, #tpu.memory_space<vmem>>, vector<16x128xf32>
    tpu.vector_store %arg7[%c0_6, %c0_7], %7 {strides = array<i32>} : memref<16x128xf32, #tpu.memory_space<vmem>>, vector<16x128xf32>,
    %c0_i32_8 = arith.constant 0 : i32
    %9 = arith.cmpi eq, %arg2, %c0_i32_8 : i32
    %10 = arith.extui %9 : i1 to i32
    %c0_i32_9 = arith.constant 0 : i32
    %11 = arith.cmpi ne, %10, %c0_i32_9 : i32
    scf.if %11 {
      %c0_10 = arith.constant 0 : index
      %c0_11 = arith.constant 0 : index
      %12 = vector.load %arg7[%c0_10, %c0_11] : memref<16x128xf32, #tpu.memory_space<vmem>>, vector<16x128xf32>
      %c0_12 = arith.constant 0 : index
      %c0_13 = arith.constant 0 : index
      %13 = vector.load %arg5[%c0_12, %c0_13] : memref<1x128xf32, #tpu.memory_space<vmem>>, vector<1x128xf32>
      %14 = vector.broadcast %13 : vector<1x128xf32> to vector<16x128xf32>
      %15 = arith.addf %12, %14 : vector<16x128xf32>
      %16 = arith.truncf %15 : vector<16x128xf32> to vector<16x128xbf16>
      %c0_14 = arith.constant 0 : index
      %c0_15 = arith.constant 0 : index
      %17 = vector.load %arg6[%c0_14, %c0_15] : memref<16x128xbf16, #tpu.memory_space<vmem>>, vector<16x128xbf16>
      tpu.vector_store %arg6[%c0_14, %c0_15], %16 {strides = array<i32>} : memref<16x128xbf16, #tpu.memory_space<vmem>>, vector<16x128xbf16>,
    } else {
    }
    return
  }
  func.func @transform_0(%arg0: i32, %arg1: i32, %arg2: i32) -> (i32, i32) {
    %c0_i32 = arith.constant 0 : i32
    return %arg0, %arg2 : i32, i32
  }
  func.func @transform_1(%arg0: i32, %arg1: i32, %arg2: i32) -> (i32, i32) {
    %c0_i32 = arith.constant 0 : i32
    return %arg2, %arg1 : i32, i32
  }
  func.func @transform_2(%arg0: i32, %arg1: i32, %arg2: i32) -> (i32, i32) {
    %c0_i32 = arith.constant 0 : i32
    %c0_i32_0 = arith.constant 0 : i32
    return %c0_i32, %arg1 : i32, i32
  }
  func.func @transform_3(%arg0: i32, %arg1: i32, %arg2: i32) -> (i32, i32) {
    %c0_i32 = arith.constant 0 : i32
    return %arg0, %arg1 : i32, i32
  }
}

module attributes {stable_mosaic.version = 11 : i64} {
  func.func @_matmul_kernel(%arg0: i32, %arg1: i32, %arg2: i32, %arg3: memref<16x128xbf16, #tpu.memory_space<vmem>>, %arg4: memref<128x128xbf16, #tpu.memory_space<vmem>>, %arg5: memref<1x128xf32, #tpu.memory_space<vmem>>, %arg6: memref<16x128xbf16, #tpu.memory_space<vmem>>, %arg7: memref<16x128xf32, #tpu.memory_space<vmem>>) attributes {dimension_semantics = [#tpu.dimension_semantics<parallel>, #tpu.dimension_semantics<parallel>, #tpu.dimension_semantics<arbitrary>], iteration_bounds = array<i64: 1, 1, 1>, scalar_prefetch = 0 : i64, scratch_operands = 1 : i64, tpu.core_type = #tpu.core_type<tc>, window_params = [{transform_indices = @transform_0, window_bounds = array<i64: 16, 128>}, {transform_indices = @transform_1, window_bounds = array<i64: 128, 128>}, {transform_indices = @transform_2, window_bounds = array<i64: 1, 128>}, {transform_indices = @transform_3, window_bounds = array<i64: 16, 128>}]} {
    %c0_i32 = arith.constant 0 : i32
    %0 = arith.cmpi eq, %arg2, %c0_i32 : i32
    %1 = arith.extui %0 : i1 to i32
    %c0_i32_0 = arith.constant 0 : i32
    %2 = arith.cmpi ne, %1, %c0_i32_0 : i32
    scf.if %2 {
      %cst_10 = arith.constant 0.000000e+00 : f32
      %12 = vector.broadcast %cst_10 : f32 to vector<16x128xf32>
      %c0_11 = arith.constant 0 : index
      %c0_12 = arith.constant 0 : index
      %13 = vector.load %arg7[%c0_11, %c0_12] : memref<16x128xf32, #tpu.memory_space<vmem>>, vector<16x128xf32>
      tpu.vector_store %arg7[%c0_11, %c0_12], %12 {strides = array<i32>} : memref<16x128xf32, #tpu.memory_space<vmem>>, vector<16x128xf32>,
    } else {
    }
    %c0 = arith.constant 0 : index
    %c0_1 = arith.constant 0 : index
    %3 = vector.load %arg7[%c0, %c0_1] : memref<16x128xf32, #tpu.memory_space<vmem>>, vector<16x128xf32>
    %c0_2 = arith.constant 0 : index
    %c0_3 = arith.constant 0 : index
    %4 = vector.load %arg3[%c0_2, %c0_3] : memref<16x128xbf16, #tpu.memory_space<vmem>>, vector<16x128xbf16>
    %c0_4 = arith.constant 0 : index
    %c0_5 = arith.constant 0 : index
    %5 = vector.load %arg4[%c0_4, %c0_5] : memref<128x128xbf16, #tpu.memory_space<vmem>>, vector<128x128xbf16>
    %cst = arith.constant dense<0.000000e+00> : vector<16x128xf32>
    %6 = tpu.matmul %4, %5, %cst {dimension_numbers = #tpu.dot_dimension_numbers<[1], [0], [0], [1], [0, 0, 1, 1], [], []>} : vector<16x128xbf16>, vector<128x128xbf16>, vector<16x128xf32> -> vector<16x128xf32>
    %7 = arith.addf %3, %6 : vector<16x128xf32>
    %c0_6 = arith.constant 0 : index
    %c0_7 = arith.constant 0 : index
    %8 = vector.load %arg7[%c0_6, %c0_7] : memref<16x128xf32, #tpu.memory_space<vmem>>, vector<16x128xf32>
    tpu.vector_store %arg7[%c0_6, %c0_7], %7 {strides = array<i32>} : memref<16x128xf32, #tpu.memory_space<vmem>>, vector<16x128xf32>,
    %c0_i32_8 = arith.constant 0 : i32
    %9 = arith.cmpi eq, %arg2, %c0_i32_8 : i32
    %10 = arith.extui %9 : i1 to i32
    %c0_i32_9 = arith.constant 0 : i32
    %11 = arith.cmpi ne, %10, %c0_i32_9 : i32
    scf.if %11 {
      %c0_10 = arith.constant 0 : index
      %c0_11 = arith.constant 0 : index
      %12 = vector.load %arg7[%c0_10, %c0_11] : memref<16x128xf32, #tpu.memory_space<vmem>>, vector<16x128xf32>
      %c0_12 = arith.constant 0 : index
      %c0_13 = arith.constant 0 : index
      %13 = vector.load %arg5[%c0_12, %c0_13] : memref<1x128xf32, #tpu.memory_space<vmem>>, vector<1x128xf32>
      %14 = vector.broadcast %13 : vector<1x128xf32> to vector<16x128xf32>
      %15 = arith.addf %12, %14 : vector<16x128xf32>
      %cst_14 = arith.constant 0.000000e+00 : f32
      %16 = vector.broadcast %cst_14 : f32 to vector<16x128xf32>
      %17 = arith.maximumf %15, %16 : vector<16x128xf32>
      %18 = arith.truncf %17 : vector<16x128xf32> to vector<16x128xbf16>
      %c0_15 = arith.constant 0 : index
      %c0_16 = arith.constant 0 : index
      %19 = vector.load %arg6[%c0_15, %c0_16] : memref<16x128xbf16, #tpu.memory_space<vmem>>, vector<16x128xbf16>
      tpu.vector_store %arg6[%c0_15, %c0_16], %18 {strides = array<i32>} : memref<16x128xbf16, #tpu.memory_space<vmem>>, vector<16x128xbf16>,
    } else {
    }
    return
  }
  func.func @transform_0(%arg0: i32, %arg1: i32, %arg2: i32) -> (i32, i32) {
    %c0_i32 = arith.constant 0 : i32
    return %arg0, %arg2 : i32, i32
  }
  func.func @transform_1(%arg0: i32, %arg1: i32, %arg2: i32) -> (i32, i32) {
    %c0_i32 = arith.constant 0 : i32
    return %arg2, %arg1 : i32, i32
  }
  func.func @transform_2(%arg0: i32, %arg1: i32, %arg2: i32) -> (i32, i32) {
    %c0_i32 = arith.constant 0 : i32
    %c0_i32_0 = arith.constant 0 : i32
    return %c0_i32, %arg1 : i32, i32
  }
  func.func @transform_3(%arg0: i32, %arg1: i32, %arg2: i32) -> (i32, i32) {
    %c0_i32 = arith.constant 0 : i32
    return %arg0, %arg1 : i32, i32
  }
}

module attributes {stable_mosaic.version = 11 : i64} {
  func.func @_flash_attn_kernel(%arg0: i32, %arg1: i32, %arg2: i32, %arg3: memref<8x8x8xbf16, #tpu.memory_space<vmem>>, %arg4: memref<8x8x8xbf16, #tpu.memory_space<vmem>>, %arg5: memref<8x8x8xbf16, #tpu.memory_space<vmem>>, %arg6: memref<8x8x8xbf16, #tpu.memory_space<vmem>>, %arg7: memref<8x8x1xf32, #tpu.memory_space<vmem>>, %arg8: memref<8x8x1xf32, #tpu.memory_space<vmem>>, %arg9: memref<8x8x8xf32, #tpu.memory_space<vmem>>) attributes {dimension_semantics = [#tpu.dimension_semantics<parallel>, #tpu.dimension_semantics<parallel>, #tpu.dimension_semantics<arbitrary>], iteration_bounds = array<i64: 1, 1, 1>, scalar_prefetch = 0 : i64, scratch_operands = 3 : i64, tpu.core_type = #tpu.core_type<tc>, window_params = [{transform_indices = @transform_0, window_bounds = array<i64: 8, 8, 8>}, {transform_indices = @transform_1, window_bounds = array<i64: 8, 8, 8>}, {transform_indices = @transform_2, window_bounds = array<i64: 8, 8, 8>}, {transform_indices = @transform_3, window_bounds = array<i64: 8, 8, 8>}]} {
    %c0_i32 = arith.constant 0 : i32
    %0 = arith.cmpi eq, %arg2, %c0_i32 : i32
    %1 = arith.extui %0 : i1 to i32
    %c0_i32_0 = arith.constant 0 : i32
    %2 = arith.cmpi ne, %1, %c0_i32_0 : i32
    scf.if %2 {
      %cst_33 = arith.constant -1.000000e+30 : f32
      %35 = vector.broadcast %cst_33 : f32 to vector<8x8x1xf32>
      %c0_34 = arith.constant 0 : index
      %c0_35 = arith.constant 0 : index
      %c0_36 = arith.constant 0 : index
      %36 = vector.load %arg7[%c0_34, %c0_35, %c0_36] : memref<8x8x1xf32, #tpu.memory_space<vmem>>, vector<8x8x1xf32>
      tpu.vector_store %arg7[%c0_34, %c0_35, %c0_36], %35 {strides = array<i32>} : memref<8x8x1xf32, #tpu.memory_space<vmem>>, vector<8x8x1xf32>,
      %cst_37 = arith.constant 0.000000e+00 : f32
      %37 = vector.broadcast %cst_37 : f32 to vector<8x8x1xf32>
      %c0_38 = arith.constant 0 : index
      %c0_39 = arith.constant 0 : index
      %c0_40 = arith.constant 0 : index
      %38 = vector.load %arg8[%c0_38, %c0_39, %c0_40] : memref<8x8x1xf32, #tpu.memory_space<vmem>>, vector<8x8x1xf32>
      tpu.vector_store %arg8[%c0_38, %c0_39, %c0_40], %37 {strides = array<i32>} : memref<8x8x1xf32, #tpu.memory_space<vmem>>, vector<8x8x1xf32>,
      %cst_41 = arith.constant 0.000000e+00 : f32
      %39 = vector.broadcast %cst_41 : f32 to vector<8x8x8xf32>
      %c0_42 = arith.constant 0 : index
      %c0_43 = arith.constant 0 : index
      %c0_44 = arith.constant 0 : index
      %40 = vector.load %arg9[%c0_42, %c0_43, %c0_44] : memref<8x8x8xf32, #tpu.memory_space<vmem>>, vector<8x8x8xf32>
      tpu.vector_store %arg9[%c0_42, %c0_43, %c0_44], %39 {strides = array<i32>} : memref<8x8x8xf32, #tpu.memory_space<vmem>>, vector<8x8x8xf32>,
    } else {
    }
    %c0 = arith.constant 0 : index
    %c0_1 = arith.constant 0 : index
    %c0_2 = arith.constant 0 : index
    %3 = vector.load %arg3[%c0, %c0_1, %c0_2] : memref<8x8x8xbf16, #tpu.memory_space<vmem>>, vector<8x8x8xbf16>
    %c0_3 = arith.constant 0 : index
    %c0_4 = arith.constant 0 : index
    %c0_5 = arith.constant 0 : index
    %4 = vector.load %arg4[%c0_3, %c0_4, %c0_5] : memref<8x8x8xbf16, #tpu.memory_space<vmem>>, vector<8x8x8xbf16>
    "tpu.trace_start"() <{level = 10 : i32, message = "gqd,gdk->gqk"}> : () -> ()
    %cst = arith.constant dense<0.000000e+00> : vector<8x8x8xf32>
    %5 = tpu.matmul %3, %4, %cst {dimension_numbers = #tpu.dot_dimension_numbers<[2], [1], [1], [2], [0, 0, 0, 1, 1, 2], [0], [0]>} : vector<8x8x8xbf16>, vector<8x8x8xbf16>, vector<8x8x8xf32> -> vector<8x8x8xf32>
    "tpu.trace_stop"() : () -> ()
    %cst_6 = arith.constant 0.176776692 : f32
    %6 = vector.broadcast %cst_6 : f32 to vector<8x8x8xf32>
    %7 = arith.mulf %5, %6 : vector<8x8x8xf32>
    %c0_7 = arith.constant 0 : index
    %c0_8 = arith.constant 0 : index
    %c0_9 = arith.constant 0 : index
    %8 = vector.load %arg7[%c0_7, %c0_8, %c0_9] : memref<8x8x1xf32, #tpu.memory_space<vmem>>, vector<8x8x1xf32>
    %cst_10 = arith.constant dense<0xFF800000> : vector<8x8xf32>
    %9 = vector.multi_reduction <maximumf>, %7, %cst_10 [2] : vector<8x8x8xf32> to vector<8x8xf32>
    %10 = vector.shape_cast %9 : vector<8x8xf32> to vector<8x8x1xf32>
    %11 = arith.maximumf %8, %10 : vector<8x8x1xf32>
    %12 = arith.subf %8, %11 : vector<8x8x1xf32>
    %13 = math.exp %12 : vector<8x8x1xf32>
    %14 = vector.broadcast %11 : vector<8x8x1xf32> to vector<8x8x8xf32>
    %15 = arith.subf %7, %14 : vector<8x8x8xf32>
    %16 = math.exp %15 : vector<8x8x8xf32>
    %c0_11 = arith.constant 0 : index
    %c0_12 = arith.constant 0 : index
    %c0_13 = arith.constant 0 : index
    %17 = vector.load %arg8[%c0_11, %c0_12, %c0_13] : memref<8x8x1xf32, #tpu.memory_space<vmem>>, vector<8x8x1xf32>
    %18 = arith.mulf %13, %17 : vector<8x8x1xf32>
    %cst_14 = arith.constant dense<0.000000e+00> : vector<8x8xf32>
    %19 = vector.multi_reduction <add>, %16, %cst_14 [2] : vector<8x8x8xf32> to vector<8x8xf32>
    %20 = vector.shape_cast %19 : vector<8x8xf32> to vector<8x8x1xf32>
    %21 = arith.addf %18, %20 : vector<8x8x1xf32>
    %c0_15 = arith.constant 0 : index
    %c0_16 = arith.constant 0 : index
    %c0_17 = arith.constant 0 : index
    %22 = vector.load %arg8[%c0_15, %c0_16, %c0_17] : memref<8x8x1xf32, #tpu.memory_space<vmem>>, vector<8x8x1xf32>
    tpu.vector_store %arg8[%c0_15, %c0_16, %c0_17], %21 {strides = array<i32>} : memref<8x8x1xf32, #tpu.memory_space<vmem>>, vector<8x8x1xf32>,
    %c0_18 = arith.constant 0 : index
    %c0_19 = arith.constant 0 : index
    %c0_20 = arith.constant 0 : index
    %23 = vector.load %arg9[%c0_18, %c0_19, %c0_20] : memref<8x8x8xf32, #tpu.memory_space<vmem>>, vector<8x8x8xf32>
    %24 = vector.broadcast %13 : vector<8x8x1xf32> to vector<8x8x8xf32>
    %25 = arith.mulf %24, %23 : vector<8x8x8xf32>
    %26 = arith.truncf %16 : vector<8x8x8xf32> to vector<8x8x8xbf16>
    %c0_21 = arith.constant 0 : index
    %c0_22 = arith.constant 0 : index
    %c0_23 = arith.constant 0 : index
    %27 = vector.load %arg5[%c0_21, %c0_22, %c0_23] : memref<8x8x8xbf16, #tpu.memory_space<vmem>>, vector<8x8x8xbf16>
    "tpu.trace_start"() <{level = 10 : i32, message = "gqk,gkd->gqd"}> : () -> ()
    %cst_24 = arith.constant dense<0.000000e+00> : vector<8x8x8xf32>
    %28 = tpu.matmul %26, %27, %cst_24 {dimension_numbers = #tpu.dot_dimension_numbers<[2], [1], [1], [2], [0, 0, 0, 1, 1, 2], [0], [0]>} : vector<8x8x8xbf16>, vector<8x8x8xbf16>, vector<8x8x8xf32> -> vector<8x8x8xf32>
    "tpu.trace_stop"() : () -> ()
    %29 = arith.addf %25, %28 : vector<8x8x8xf32>
    %c0_25 = arith.constant 0 : index
    %c0_26 = arith.constant 0 : index
    %c0_27 = arith.constant 0 : index
    %30 = vector.load %arg9[%c0_25, %c0_26, %c0_27] : memref<8x8x8xf32, #tpu.memory_space<vmem>>, vector<8x8x8xf32>
    tpu.vector_store %arg9[%c0_25, %c0_26, %c0_27], %29 {strides = array<i32>} : memref<8x8x8xf32, #tpu.memory_space<vmem>>, vector<8x8x8xf32>,
    %c0_28 = arith.constant 0 : index
    %c0_29 = arith.constant 0 : index
    %c0_30 = arith.constant 0 : index
    %31 = vector.load %arg7[%c0_28, %c0_29, %c0_30] : memref<8x8x1xf32, #tpu.memory_space<vmem>>, vector<8x8x1xf32>
    tpu.vector_store %arg7[%c0_28, %c0_29, %c0_30], %11 {strides = array<i32>} : memref<8x8x1xf32, #tpu.memory_space<vmem>>, vector<8x8x1xf32>,
    %c0_i32_31 = arith.constant 0 : i32
    %32 = arith.cmpi eq, %arg2, %c0_i32_31 : i32
    %33 = arith.extui %32 : i1 to i32
    %c0_i32_32 = arith.constant 0 : i32
    %34 = arith.cmpi ne, %33, %c0_i32_32 : i32
    scf.if %34 {
      %c0_33 = arith.constant 0 : index
      %c0_34 = arith.constant 0 : index
      %c0_35 = arith.constant 0 : index
      %35 = vector.load %arg8[%c0_33, %c0_34, %c0_35] : memref<8x8x1xf32, #tpu.memory_space<vmem>>, vector<8x8x1xf32>
      %36 = tpu.reciprocal %35 {approx = true} : vector<8x8x1xf32> -> vector<8x8x1xf32>
      %c0_36 = arith.constant 0 : index
      %c0_37 = arith.constant 0 : index
      %c0_38 = arith.constant 0 : index
      %37 = vector.load %arg9[%c0_36, %c0_37, %c0_38] : memref<8x8x8xf32, #tpu.memory_space<vmem>>, vector<8x8x8xf32>
      %38 = vector.broadcast %36 : vector<8x8x1xf32> to vector<8x8x8xf32>
      %39 = arith.mulf %37, %38 : vector<8x8x8xf32>
      %40 = arith.truncf %39 : vector<8x8x8xf32> to vector<8x8x8xbf16>
      %c0_39 = arith.constant 0 : index
      %c0_40 = arith.constant 0 : index
      %c0_41 = arith.constant 0 : index
      %41 = vector.load %arg6[%c0_39, %c0_40, %c0_41] : memref<8x8x8xbf16, #tpu.memory_space<vmem>>, vector<8x8x8xbf16>
      tpu.vector_store %arg6[%c0_39, %c0_40, %c0_41], %40 {strides = array<i32>} : memref<8x8x8xbf16, #tpu.memory_space<vmem>>, vector<8x8x8xbf16>,
    } else {
    }
    return
  }
  func.func @transform_0(%arg0: i32, %arg1: i32, %arg2: i32) -> (i32, i32, i32) {
    %c0_i32 = arith.constant 0 : i32
    %c0_i32_0 = arith.constant 0 : i32
    return %arg0, %arg1, %c0_i32 : i32, i32, i32
  }
  func.func @transform_1(%arg0: i32, %arg1: i32, %arg2: i32) -> (i32, i32, i32) {
    %c0_i32 = arith.constant 0 : i32
    %c0_i32_0 = arith.constant 0 : i32
    return %arg0, %c0_i32, %arg2 : i32, i32, i32
  }
  func.func @transform_2(%arg0: i32, %arg1: i32, %arg2: i32) -> (i32, i32, i32) {
    %c0_i32 = arith.constant 0 : i32
    %c0_i32_0 = arith.constant 0 : i32
    return %arg0, %arg2, %c0_i32 : i32, i32, i32
  }
  func.func @transform_3(%arg0: i32, %arg1: i32, %arg2: i32) -> (i32, i32, i32) {
    %c0_i32 = arith.constant 0 : i32
    %c0_i32_0 = arith.constant 0 : i32
    return %arg0, %arg1, %c0_i32 : i32, i32, i32
  }
}

module attributes {stable_mosaic.version = 11 : i64} {
  func.func @_matmul_kernel(%arg0: i32, %arg1: i32, %arg2: i32, %arg3: memref<16x128xbf16, #tpu.memory_space<vmem>>, %arg4: memref<128x256xbf16, #tpu.memory_space<vmem>>, %arg5: memref<1x256xf32, #tpu.memory_space<vmem>>, %arg6: memref<16x256xbf16, #tpu.memory_space<vmem>>, %arg7: memref<16x256xf32, #tpu.memory_space<vmem>>) attributes {dimension_semantics = [#tpu.dimension_semantics<parallel>, #tpu.dimension_semantics<parallel>, #tpu.dimension_semantics<arbitrary>], iteration_bounds = array<i64: 1, 1, 1>, scalar_prefetch = 0 : i64, scratch_operands = 1 : i64, tpu.core_type = #tpu.core_type<tc>, window_params = [{transform_indices = @transform_0, window_bounds = array<i64: 16, 128>}, {transform_indices = @transform_1, window_bounds = array<i64: 128, 256>}, {transform_indices = @transform_2, window_bounds = array<i64: 1, 256>}, {transform_indices = @transform_3, window_bounds = array<i64: 16, 256>}]} {
    %c0_i32 = arith.constant 0 : i32
    %0 = arith.cmpi eq, %arg2, %c0_i32 : i32
    %1 = arith.extui %0 : i1 to i32
    %c0_i32_0 = arith.constant 0 : i32
    %2 = arith.cmpi ne, %1, %c0_i32_0 : i32
    scf.if %2 {
      %cst_10 = arith.constant 0.000000e+00 : f32
      %12 = vector.broadcast %cst_10 : f32 to vector<16x256xf32>
      %c0_11 = arith.constant 0 : index
      %c0_12 = arith.constant 0 : index
      %13 = vector.load %arg7[%c0_11, %c0_12] : memref<16x256xf32, #tpu.memory_space<vmem>>, vector<16x256xf32>
      tpu.vector_store %arg7[%c0_11, %c0_12], %12 {strides = array<i32>} : memref<16x256xf32, #tpu.memory_space<vmem>>, vector<16x256xf32>,
    } else {
    }
    %c0 = arith.constant 0 : index
    %c0_1 = arith.constant 0 : index
    %3 = vector.load %arg7[%c0, %c0_1] : memref<16x256xf32, #tpu.memory_space<vmem>>, vector<16x256xf32>
    %c0_2 = arith.constant 0 : index
    %c0_3 = arith.constant 0 : index
    %4 = vector.load %arg3[%c0_2, %c0_3] : memref<16x128xbf16, #tpu.memory_space<vmem>>, vector<16x128xbf16>
    %c0_4 = arith.constant 0 : index
    %c0_5 = arith.constant 0 : index
    %5 = vector.load %arg4[%c0_4, %c0_5] : memref<128x256xbf16, #tpu.memory_space<vmem>>, vector<128x256xbf16>
    %cst = arith.constant dense<0.000000e+00> : vector<16x256xf32>
    %6 = tpu.matmul %4, %5, %cst {dimension_numbers = #tpu.dot_dimension_numbers<[1], [0], [0], [1], [0, 0, 1, 1], [], []>} : vector<16x128xbf16>, vector<128x256xbf16>, vector<16x256xf32> -> vector<16x256xf32>
    %7 = arith.addf %3, %6 : vector<16x256xf32>
    %c0_6 = arith.constant 0 : index
    %c0_7 = arith.constant 0 : index
    %8 = vector.load %arg7[%c0_6, %c0_7] : memref<16x256xf32, #tpu.memory_space<vmem>>, vector<16x256xf32>
    tpu.vector_store %arg7[%c0_6, %c0_7], %7 {strides = array<i32>} : memref<16x256xf32, #tpu.memory_space<vmem>>, vector<16x256xf32>,
    %c0_i32_8 = arith.constant 0 : i32
    %9 = arith.cmpi eq, %arg2, %c0_i32_8 : i32
    %10 = arith.extui %9 : i1 to i32
    %c0_i32_9 = arith.constant 0 : i32
    %11 = arith.cmpi ne, %10, %c0_i32_9 : i32
    scf.if %11 {
      %c0_10 = arith.constant 0 : index
      %c0_11 = arith.constant 0 : index
      %12 = vector.load %arg7[%c0_10, %c0_11] : memref<16x256xf32, #tpu.memory_space<vmem>>, vector<16x256xf32>
      %c0_12 = arith.constant 0 : index
      %c0_13 = arith.constant 0 : index
      %13 = vector.load %arg5[%c0_12, %c0_13] : memref<1x256xf32, #tpu.memory_space<vmem>>, vector<1x256xf32>
      %14 = vector.broadcast %13 : vector<1x256xf32> to vector<16x256xf32>
      %15 = arith.addf %12, %14 : vector<16x256xf32>
      %16 = arith.truncf %15 : vector<16x256xf32> to vector<16x256xbf16>
      %c0_14 = arith.constant 0 : index
      %c0_15 = arith.constant 0 : index
      %17 = vector.load %arg6[%c0_14, %c0_15] : memref<16x256xbf16, #tpu.memory_space<vmem>>, vector<16x256xbf16>
      tpu.vector_store %arg6[%c0_14, %c0_15], %16 {strides = array<i32>} : memref<16x256xbf16, #tpu.memory_space<vmem>>, vector<16x256xbf16>,
    } else {
    }
    return
  }
  func.func @transform_0(%arg0: i32, %arg1: i32, %arg2: i32) -> (i32, i32) {
    %c0_i32 = arith.constant 0 : i32
    return %arg0, %arg2 : i32, i32
  }
  func.func @transform_1(%arg0: i32, %arg1: i32, %arg2: i32) -> (i32, i32) {
    %c0_i32 = arith.constant 0 : i32
    return %arg2, %arg1 : i32, i32
  }
  func.func @transform_2(%arg0: i32, %arg1: i32, %arg2: i32) -> (i32, i32) {
    %c0_i32 = arith.constant 0 : i32
    %c0_i32_0 = arith.constant 0 : i32
    return %c0_i32, %arg1 : i32, i32
  }
  func.func @transform_3(%arg0: i32, %arg1: i32, %arg2: i32) -> (i32, i32) {
    %c0_i32 = arith.constant 0 : i32
    return %arg0, %arg1 : i32, i32
  }
}

module attributes {stable_mosaic.version = 11 : i64} {
  func.func @_softmax_seq_kernel(%arg0: i32, %arg1: i32, %arg2: memref<1x8x32xbf16, #tpu.memory_space<vmem>>, %arg3: memref<1x8x32xf32, #tpu.memory_space<vmem>>) attributes {dimension_semantics = [#tpu.dimension_semantics<parallel>, #tpu.dimension_semantics<parallel>], iteration_bounds = array<i64: 2, 1>, scalar_prefetch = 0 : i64, scratch_operands = 0 : i64, tpu.core_type = #tpu.core_type<tc>, window_params = [{transform_indices = @transform_0, window_bounds = array<i64: 1, 8, 32>}, {transform_indices = @transform_1, window_bounds = array<i64: 1, 8, 32>}]} {
    %c0 = arith.constant 0 : index
    %c0_0 = arith.constant 0 : index
    %c0_1 = arith.constant 0 : index
    %0 = vector.load %arg2[%c0, %c0_0, %c0_1] : memref<1x8x32xbf16, #tpu.memory_space<vmem>>, vector<1x8x32xbf16>
    %1 = vector.shape_cast %0 : vector<1x8x32xbf16> to vector<8x32xbf16>
    %2 = arith.extf %1 : vector<8x32xbf16> to vector<8x32xf32>
    %cst = arith.constant dense<0xFF800000> : vector<32xf32>
    %3 = vector.multi_reduction <maximumf>, %2, %cst [0] : vector<8x32xf32> to vector<32xf32>
    %4 = vector.shape_cast %3 : vector<32xf32> to vector<1x32xf32>
    %5 = vector.broadcast %4 : vector<1x32xf32> to vector<8x32xf32>
    %6 = arith.subf %2, %5 : vector<8x32xf32>
    %7 = math.exp %6 : vector<8x32xf32>
    %cst_2 = arith.constant dense<0.000000e+00> : vector<32xf32>
    %8 = vector.multi_reduction <add>, %7, %cst_2 [0] : vector<8x32xf32> to vector<32xf32>
    %9 = vector.shape_cast %8 : vector<32xf32> to vector<1x32xf32>
    %10 = vector.broadcast %9 : vector<1x32xf32> to vector<8x32xf32>
    %11 = arith.divf %7, %10 : vector<8x32xf32>
    %c0_3 = arith.constant 0 : index
    %c0_4 = arith.constant 0 : index
    %c0_5 = arith.constant 0 : index
    %12 = vector.load %arg3[%c0_3, %c0_4, %c0_5] : memref<1x8x32xf32, #tpu.memory_space<vmem>>, vector<1x8x32xf32>
    %13 = vector.shape_cast %12 : vector<1x8x32xf32> to vector<8x32xf32>
    %14 = vector.shape_cast %11 : vector<8x32xf32> to vector<1x8x32xf32>
    tpu.vector_store %arg3[%c0_3, %c0_4, %c0_5], %14 {strides = array<i32>} : memref<1x8x32xf32, #tpu.memory_space<vmem>>, vector<1x8x32xf32>,
    return
  }
  func.func @transform_0(%arg0: i32, %arg1: i32) -> (i32, i32, i32) {
    %c0_i32 = arith.constant 0 : i32
    %c0_i32_0 = arith.constant 0 : i32
    return %arg0, %c0_i32, %arg1 : i32, i32, i32
  }
  func.func @transform_1(%arg0: i32, %arg1: i32) -> (i32, i32, i32) {
    %c0_i32 = arith.constant 0 : i32
    %c0_i32_0 = arith.constant 0 : i32
    return %arg0, %c0_i32, %arg1 : i32, i32, i32
  }
}

</mosaic_0001>

<llo_original>
// kernel: transformer_forward.54
$region0: #{transformer_forward.54}
  #allocation0 [shape = 'u32[]', space=smem, size = 0x4, offset = 0x4, fixed_abs, tag = 'smem constant byte address 0x4 - core index']
  #allocation1 [shape = 'u32[72,128]{1,0:T(1,128)}', space=vmem, size = 0x9000, scoped, tag = 'internal scratch']
  #allocation2 [shape = 'f32[16,128]{1,0:T(8,128)}', space=vmem, size = 0x2000, scoped, tag = 'scratch operand']
  %s0 = inlined_call_operand.vmem [shape: bf16[16,128], index: 0, kind: input, shape index: {}]
  %s1 = inlined_call_operand.vmem [shape: bf16[128,384], index: 1, kind: input, shape index: {}]
  %s2 = inlined_call_operand.vmem [shape: f32[1,384], index: 2, kind: input, shape index: {}]
  %s3 = inlined_call_operand.vmem [shape: bf16[16,384], index: 3, kind: output, shape index: {}]
  %s4 = sld [smem:[#allocation0]]
  $region131: #{transformer_forward.54} parent=0
    _
  %s6 = ssub.s32 1, %s4
  %s7 = scalar_select 0, %s6, %s4
  $region1: #{transformer_forward.54} parent=0
    #allocation3 [shape = 'u8[65536]{0}', space=vmem, size = 0x10000, scoped, tag = 'input window, operand 1']
    #allocation4 [shape = 'u8[8192]{0}', space=vmem, size = 0x2000, scoped, tag = 'output window, operand 0']
    loop: start=0, step=1, limit=5
    $region2: #{transformer_forward.54} parent=1 // loop_pre_header
      _
    $region3: #{transformer_forward.54} parent=1 // loop_header
      %s9 = sphi 0, %s13
      %p10 = scmp.ge.s32.totalorder %s9, 5
      %s16 = sphi 0, %s35
      %s17 = sphi 0, %s31
      %s18 = sphi 0, %s27
      %s19 = sphi 0, %s16
      %s20 = sphi 0, %s17
      %s21 = sphi 0, %s18
      %s22 = sphi 0, %s19
      %s23 = sphi 0, %s20
      %s24 = sphi 0, %s21
      %s40 = sphi 0, %s42
      %s43 = sphi 0, %s40
      %s44 = sphi 0, %s43
      %s60 = sphi 0, %s44
      %s68 = sphi 0, %s70
      %s71 = sphi 0, %s68
      %s72 = sphi 0, %s71
      %s88 = sphi 0, %s72
      %s94 = sphi 0, %s96
      %s97 = sphi 0, %s94
      %s98 = sphi 0, %s97
      %s114 = sphi 0, %s98
      %s122 = sphi 0, %s124
      %s125 = sphi 0, %s122
      %s126 = sphi 0, %s125
      %s142 = sphi 0, %s126
    $region4: #{transformer_forward.54} parent=1 // loop_header_branch
      %12 = sbr.rel (%p10) target = $region8
    $region5: #{transformer_forward.54} parent=1 // loop_body
      %s14 = ssub.s32 %s9, 1
      %s15 = ssub.s32 %s9, 2
      %s25 = sadd.s32 1, %s18
      %p26 = scmp.ge.s32.totalorder %s25, 1
      %s27 = scalar_select %p26, 0, %s25
      %s28 = sadd.s32 1, %s17
      %s29 = scalar_select %p26, %s28, %s17
      %p30 = scmp.ge.s32.totalorder %s29, 3
      %s31 = scalar_select %p30, 0, %s29
      %s32 = sadd.s32 1, %s16
      %s33 = scalar_select %p30, %s32, %s16
      %p34 = scmp.ge.s32.totalorder %s33, 1
      %s35 = scalar_select %p34, 0, %s33
      %s36 = ssub.s32 %s16, %s35
      %s37 = ssub.s32 %s18, %s27
      %s38 = sor.u32 %s36, %s37
      %p39 = scmp.eq.s32.totalorder %s38, 0
      %s41 = sadd.s32 %s40, 1
      %s42 = scalar_select %p39, %s40, %s41
      %p45 = pneg %p39
      %p46 = scmp.eq.s32.totalorder %s9, 2
      %p47 = por %p45, %p46
      %p48 = scmp.ne.s32.totalorder %s40, %s43
      %p49 = scmp.eq.s32.totalorder %s9, 0
      %p50 = por %p48, %p49
      %p51 = scmp.ne.s32.totalorder %s40, %s43
      %p52 = scmp.eq.s32.totalorder %s14, 2
      %p53 = por %p51, %p52
      %p54 = scmp.ne.s32.totalorder %s43, %s44
      %p55 = scmp.eq.s32.totalorder %s14, 0
      %p56 = por %p54, %p55
      %p57 = scmp.ne.s32.totalorder %s43, %s44
      %p58 = scmp.eq.s32.totalorder %s15, 2
      %p59 = por %p57, %p58
      %p61 = scmp.ne.s32.totalorder %s44, %s60
      %p62 = scmp.eq.s32.totalorder %s15, 0
      %p63 = por %p61, %p62
      %s64 = ssub.s32 %s18, %s27
      %s65 = ssub.s32 %s17, %s31
      %s66 = sor.u32 %s64, %s65
      %p67 = scmp.eq.s32.totalorder %s66, 0
      %s69 = sadd.s32 %s68, 1
      %s70 = scalar_select %p67, %s68, %s69
      %p73 = pneg %p67
      %p74 = scmp.eq.s32.totalorder %s9, 2
      %p75 = por %p73, %p74
      %p76 = scmp.ne.s32.totalorder %s68, %s71
      %p77 = scmp.eq.s32.totalorder %s9, 0
      %p78 = por %p76, %p77
      %p79 = scmp.ne.s32.totalorder %s68, %s71
      %p80 = scmp.eq.s32.totalorder %s14, 2
      %p81 = por %p79, %p80
      %p82 = scmp.ne.s32.totalorder %s71, %s72
      %p83 = scmp.eq.s32.totalorder %s14, 0
      %p84 = por %p82, %p83
      %p85 = scmp.ne.s32.totalorder %s71, %s72
      %p86 = scmp.eq.s32.totalorder %s15, 2
      %p87 = por %p85, %p86
      %p89 = scmp.ne.s32.totalorder %s72, %s88
      %p90 = scmp.eq.s32.totalorder %s15, 0
      %p91 = por %p89, %p90
      %s92 = ssub.s32 %s17, %s31
      %p93 = scmp.eq.s32.totalorder %s92, 0
      %s95 = sadd.s32 %s94, 1
      %s96 = scalar_select %p93, %s94, %s95
      %p99 = pneg %p93
      %p100 = scmp.eq.s32.totalorder %s9, 2
      %p101 = por %p99, %p100
      %p102 = scmp.ne.s32.totalorder %s94, %s97
      %p103 = scmp.eq.s32.totalorder %s9, 0
      %p104 = por %p102, %p103
      %p105 = scmp.ne.s32.totalorder %s94, %s97
      %p106 = scmp.eq.s32.totalorder %s14, 2
      %p107 = por %p105, %p106
      %p108 = scmp.ne.s32.totalorder %s97, %s98
      %p109 = scmp.eq.s32.totalorder %s14, 0
      %p110 = por %p108, %p109
      %p111 = scmp.ne.s32.totalorder %s97, %s98
      %p112 = scmp.eq.s32.totalorder %s15, 2
      %p113 = por %p111, %p112
      %p115 = scmp.ne.s32.totalorder %s98, %s114
      %p116 = scmp.eq.s32.totalorder %s15, 0
      %p117 = por %p115, %p116
      %s118 = ssub.s32 %s16, %s35
      %s119 = ssub.s32 %s17, %s31
      %s120 = sor.u32 %s118, %s119
      %p121 = scmp.eq.s32.totalorder %s120, 0
      %s123 = sadd.s32 %s122, 1
      %s124 = scalar_select %p121, %s122, %s123
      %p127 = pneg %p121
      %p128 = scmp.eq.s32.totalorder %s9, 2
      %p129 = por %p127, %p128
      %p130 = scmp.ne.s32.totalorder %s122, %s125
      %p131 = scmp.eq.s32.totalorder %s9, 0
      %p132 = por %p130, %p131
      %p133 = scmp.ne.s32.totalorder %s122, %s125
      %p134 = scmp.eq.s32.totalorder %s14, 2
      %p135 = por %p133, %p134
      %p136 = scmp.ne.s32.totalorder %s125, %s126
      %p137 = scmp.eq.s32.totalorder %s14, 0
      %p138 = por %p136, %p137
      %p139 = scmp.ne.s32.totalorder %s125, %s126
      %p140 = scmp.eq.s32.totalorder %s15, 2
      %p141 = por %p139, %p140
      %p143 = scmp.ne.s32.totalorder %s126, %s142
      %p144 = scmp.eq.s32.totalorder %s15, 0
      %p145 = por %p143, %p144
      %p146 = scmp.le.s32.totalorder 1, %s9
      %p147 = scmp.lt.s32.totalorder %s9, 4
      %p148 = pnand %p146, %p147
      %p149 = pneg %p148
      // Predicated region
      $region9: #{transformer_forward.54} parent=5 // pred_check
        _
      $region10: #{transformer_forward.54} parent=5 // pred_check_branch
        %151 = sbr.rel (%p148) target = $region12
      $region11: #{transformer_forward.54} parent=5 // pred_region
        %s152 = ssub.s32 %s9, 1
        // Predicated region
        $region13: #{transformer_forward.54} parent=11 // pred_check
          %p153 = pneg %p56
        $region14: #{transformer_forward.54} parent=11 // pred_check_branch
          %155 = sbr.rel (%p153) target = $region16
        $region15: #{transformer_forward.54} parent=11 // pred_region
          %s156 = smul.u32 2, %s19
          %p157 = scmp.lt.s32.totalorder %s156, 1
          %s158 = scalar_select %p157, %s156, 1
          %p159 = scmp.lt.s32.totalorder %s21, 0
          %s160 = scalar_select %p159, %s21, 0
          %s161 = sadd.s32 %s160, %s158
          %s162 = smul.addr %s161, 4
          %s163 = scalar_lea.vmem %s0, %s162
          %s164 = smul.u32 2, %s19
        $region16: #{transformer_forward.54} parent=11 // pred_fallthru
          _
      $region12: #{transformer_forward.54} parent=5 // pred_fallthru
        _
      %p165 = scmp.lt.s32.totalorder %s9, 3
      // Predicated region
      $region17: #{transformer_forward.54} parent=5 // pred_check
        %p166 = pneg %p165
      $region18: #{transformer_forward.54} parent=5 // pred_check_branch
        %168 = sbr.rel (%p166) target = $region20
      $region19: #{transformer_forward.54} parent=5 // pred_region
        // Predicated region
        $region21: #{transformer_forward.54} parent=19 // pred_check
          %p169 = pneg %p78
        $region22: #{transformer_forward.54} parent=19 // pred_check_branch
          %171 = sbr.rel (%p169) target = $region24
        $region23: #{transformer_forward.54} parent=19 // pred_region
          %s172 = sand.u32 %s68, 1
          %s173 = sand.u32 %s68, 1
          %s174 = smul.addr %s173, 64
          %s175 = scalar_lea.vmem [#allocation3], %s174
          %s176 = smul.u32 16, %s18
          %s177 = smul.addr %s176, 3
          %s178 = sadd.s32 %s17, %s177
          %s179 = smul.addr %s178, 4
          %s180 = scalar_lea.vmem %s1, %s179
          // Predicated region
          $region25: #{transformer_forward.54} parent=23 // pred_check
            _
          $region26: #{transformer_forward.54} parent=23 // pred_check_branch
            %182 = sbr.rel (0) target = $region28
          $region27: #{transformer_forward.54} parent=23 // pred_region
            // Predicated region
            $region29: #{transformer_forward.54} parent=27 // pred_check
              _
            $region30: #{transformer_forward.54} parent=27 // pred_check_branch
              %184 = sbr.rel target = $region32
            $region31: #{transformer_forward.54} parent=27 // pred_region
              // Predicated region
              $region44: #{transformer_forward.54} parent=31 // pred_check
                _
              $region45: #{transformer_forward.54} parent=31 // pred_check_branch
                %230 = sbr.rel (0) target = $region47
              $region46: #{transformer_forward.54} parent=31 // pred_region
                loop: start=0, step=1, limit=1
                $region48: #{transformer_forward.54} parent=46 // loop_pre_header
                  _
                $region49: #{transformer_forward.54} parent=46 // loop_header
                  %s232 = sphi 0, %s236
                  %p233 = scmp.ge.s32.totalorder %s232, 1
                  %s237 = sphi %s180, %s180
                  %s238 = sphi %s175, %s175
                $region50: #{transformer_forward.54} parent=46 // loop_header_branch
                  %235 = sbr.rel (%p233) target = $region54
                $region51: #{transformer_forward.54} parent=46 // loop_body
                  _
                $region52: #{transformer_forward.54} parent=46 // loop_footer
                  %s236 = sadd.s32 1, %s232
                $region53: #{transformer_forward.54} parent=46 // loop_footer_branch
                  %231 = sbr.rel target = $region49
                $region54: #{transformer_forward.54} parent=46 // loop_exit
                  _
                %s240 = ssub.s32 16, 1
                loop: start=0, step=1, limit=1
                $region55: #{transformer_forward.54} parent=46 // loop_pre_header
                  _
                $region56: #{transformer_forward.54} parent=46 // loop_header
                  %s242 = sphi 0, %s246
                  %p243 = scmp.ge.s32.totalorder %s242, 1
                  %s247 = sphi %s180, %s180
                  %s248 = sphi %s175, %s175
                $region57: #{transformer_forward.54} parent=46 // loop_header_branch
                  %245 = sbr.rel (%p243) target = $region61
                $region58: #{transformer_forward.54} parent=46 // loop_body
                  %v249 = vld [vmem:[%s247] sm:%s240]
                  %250 = vst [vmem:[%s248] sm:%s240] %v249
                  %v251 = vld [vmem:[%s247 + $0xc] sm:%s240]
                  %252 = vst [vmem:[%s248 + $0x4] sm:%s240] %v251
                  %v253 = vld [vmem:[%s247 + $0x18] sm:%s240]
                  %254 = vst [vmem:[%s248 + $0x8] sm:%s240] %v253
                  %v255 = vld [vmem:[%s247 + $0x24] sm:%s240]
                  %256 = vst [vmem:[%s248 + $0xc] sm:%s240] %v255
                  %v257 = vld [vmem:[%s247 + $0x30] sm:%s240]
                  %258 = vst [vmem:[%s248 + $0x10] sm:%s240] %v257
                  %v259 = vld [vmem:[%s247 + $0x3c] sm:%s240]
                  %260 = vst [vmem:[%s248 + $0x14] sm:%s240] %v259
                  %v261 = vld [vmem:[%s247 + $0x48] sm:%s240]
                  %262 = vst [vmem:[%s248 + $0x18] sm:%s240] %v261
                  %v263 = vld [vmem:[%s247 + $0x54] sm:%s240]
                  %264 = vst [vmem:[%s248 + $0x1c] sm:%s240] %v263
                  %v265 = vld [vmem:[%s247 + $0x60] sm:%s240]
                  %266 = vst [vmem:[%s248 + $0x20] sm:%s240] %v265
                  %v267 = vld [vmem:[%s247 + $0x6c] sm:%s240]
                  %268 = vst [vmem:[%s248 + $0x24] sm:%s240] %v267
                  %v269 = vld [vmem:[%s247 + $0x78] sm:%s240]
                  %270 = vst [vmem:[%s248 + $0x28] sm:%s240] %v269
                  %v271 = vld [vmem:[%s247 + $0x84] sm:%s240]
                  %272 = vst [vmem:[%s248 + $0x2c] sm:%s240] %v271
                  %v273 = vld [vmem:[%s247 + $0x90] sm:%s240]
                  %274 = vst [vmem:[%s248 + $0x30] sm:%s240] %v273
                  %v275 = vld [vmem:[%s247 + $0x9c] sm:%s240]
                  %276 = vst [vmem:[%s248 + $0x34] sm:%s240] %v275
                  %v277 = vld [vmem:[%s247 + $0xa8] sm:%s240]
                  %278 = vst [vmem:[%s248 + $0x38] sm:%s240] %v277
                  %v279 = vld [vmem:[%s247 + $0xb4] sm:%s240]
                  %280 = vst [vmem:[%s248 + $0x3c] sm:%s240] %v279
                $region59: #{transformer_forward.54} parent=46 // loop_footer
                  %s246 = sadd.s32 1, %s242
                $region60: #{transformer_forward.54} parent=46 // loop_footer_branch
                  %241 = sbr.rel target = $region56
                $region61: #{transformer_forward.54} parent=46 // loop_exit
                  _
              $region47: #{transformer_forward.54} parent=31 // pred_fallthru
                _
            $region32: #{transformer_forward.54} parent=27 // pred_fallthru
              _
            // Predicated region
            $region33: #{transformer_forward.54} parent=27 // pred_check
              _
            $region34: #{transformer_forward.54} parent=27 // pred_check_branch
              %186 = sbr.rel (0) target = $region36
            $region35: #{transformer_forward.54} parent=27 // pred_region
              %s188 = ssub.s32 16, 1
              loop: start=0, step=1, limit=1
              $region37: #{transformer_forward.54} parent=35 // loop_pre_header
                _
              $region38: #{transformer_forward.54} parent=35 // loop_header
                %s190 = sphi 0, %s194
                %p191 = scmp.ge.s32.totalorder %s190, 1
                %s195 = sphi %s180, %s180
                %s196 = sphi %s175, %s175
              $region39: #{transformer_forward.54} parent=35 // loop_header_branch
                %193 = sbr.rel (%p191) target = $region43
              $region40: #{transformer_forward.54} parent=35 // loop_body
                %v197 = vld [vmem:[%s195] sm:%s188]
                %198 = vst [vmem:[%s196] sm:%s188] %v197
                %v199 = vld [vmem:[%s195 + $0xc] sm:%s188]
                %200 = vst [vmem:[%s196 + $0x4] sm:%s188] %v199
                %v201 = vld [vmem:[%s195 + $0x18] sm:%s188]
                %202 = vst [vmem:[%s196 + $0x8] sm:%s188] %v201
                %v203 = vld [vmem:[%s195 + $0x24] sm:%s188]
                %204 = vst [vmem:[%s196 + $0xc] sm:%s188] %v203
                %v205 = vld [vmem:[%s195 + $0x30] sm:%s188]
                %206 = vst [vmem:[%s196 + $0x10] sm:%s188] %v205
                %v207 = vld [vmem:[%s195 + $0x3c] sm:%s188]
                %208 = vst [vmem:[%s196 + $0x14] sm:%s188] %v207
                %v209 = vld [vmem:[%s195 + $0x48] sm:%s188]
                %210 = vst [vmem:[%s196 + $0x18] sm:%s188] %v209
                %v211 = vld [vmem:[%s195 + $0x54] sm:%s188]
                %212 = vst [vmem:[%s196 + $0x1c] sm:%s188] %v211
                %v213 = vld [vmem:[%s195 + $0x60] sm:%s188]
                %214 = vst [vmem:[%s196 + $0x20] sm:%s188] %v213
                %v215 = vld [vmem:[%s195 + $0x6c] sm:%s188]
                %216 = vst [vmem:[%s196 + $0x24] sm:%s188] %v215
                %v217 = vld [vmem:[%s195 + $0x78] sm:%s188]
                %218 = vst [vmem:[%s196 + $0x28] sm:%s188] %v217
                %v219 = vld [vmem:[%s195 + $0x84] sm:%s188]
                %220 = vst [vmem:[%s196 + $0x2c] sm:%s188] %v219
                %v221 = vld [vmem:[%s195 + $0x90] sm:%s188]
                %222 = vst [vmem:[%s196 + $0x30] sm:%s188] %v221
                %v223 = vld [vmem:[%s195 + $0x9c] sm:%s188]
                %224 = vst [vmem:[%s196 + $0x34] sm:%s188] %v223
                %v225 = vld [vmem:[%s195 + $0xa8] sm:%s188]
                %226 = vst [vmem:[%s196 + $0x38] sm:%s188] %v225
                %v227 = vld [vmem:[%s195 + $0xb4] sm:%s188]
                %228 = vst [vmem:[%s196 + $0x3c] sm:%s188] %v227
              $region41: #{transformer_forward.54} parent=35 // loop_footer
                %s194 = sadd.s32 1, %s190
              $region42: #{transformer_forward.54} parent=35 // loop_footer_branch
                %189 = sbr.rel target = $region38
              $region43: #{transformer_forward.54} parent=35 // loop_exit
                _
            $region36: #{transformer_forward.54} parent=27 // pred_fallthru
              _
          $region28: #{transformer_forward.54} parent=23 // pred_fallthru
            _
          %281 = vnop
        $region24: #{transformer_forward.54} parent=19 // pred_fallthru
          _
        // Predicated region
        $region62: #{transformer_forward.54} parent=19 // pred_check
          %p282 = pneg %p104
        $region63: #{transformer_forward.54} parent=19 // pred_check_branch
          %284 = sbr.rel (%p282) target = $region65
        $region64: #{transformer_forward.54} parent=19 // pred_region
          %p285 = scmp.lt.s32.totalorder %s17, 2
          %s286 = scalar_select %p285, %s17, 2
          %s287 = scalar_lea.vmem %s2, %s286
        $region65: #{transformer_forward.54} parent=19 // pred_fallthru
          _
      $region20: #{transformer_forward.54} parent=5 // pred_fallthru
        _
      %p288 = scmp.le.s32.totalorder 1, %s9
      %p289 = scmp.lt.s32.totalorder %s9, 4
      %p290 = pnand %p288, %p289
      %p291 = pneg %p290
      // Predicated region
      $region66: #{transformer_forward.54} parent=5 // pred_check
        _
      $region67: #{transformer_forward.54} parent=5 // pred_check_branch
        %293 = sbr.rel (%p290) target = $region69
      $region68: #{transformer_forward.54} parent=5 // pred_region
        %s294 = ssub.s32 %s9, 1
        %s295 = sand.u32 %s71, 1
        %s296 = sand.u32 %s71, 1
        %s297 = smul.addr %s296, 64
        %s298 = scalar_lea.vmem [#allocation3], %s297
        // Predicated region
        $region70: #{transformer_forward.54} parent=68 // pred_check
          %p299 = pneg %p84
        $region71: #{transformer_forward.54} parent=68 // pred_check_branch
          %301 = sbr.rel (%p299) target = $region73
        $region72: #{transformer_forward.54} parent=68 // pred_region
          _
        $region73: #{transformer_forward.54} parent=68 // pred_fallthru
          _
        %s302 = smul.u32 2, %s19
        %p303 = scmp.lt.s32.totalorder %s302, 1
        %s304 = scalar_select %p303, %s302, 1
        %p305 = scmp.lt.s32.totalorder %s21, 0
        %s306 = scalar_select %p305, %s21, 0
        %s307 = sadd.s32 %s306, %s304
        %s308 = smul.addr %s307, 4
        %s309 = scalar_lea.vmem %s0, %s308
        %p310 = pneg %p56
        %p311 = pneg %p53
        %s312 = sand.u32 %s71, 1
        %s313 = sand.u32 %s71, 1
        %s314 = smul.addr %s313, 64
        %s315 = scalar_lea.vmem [#allocation3], %s314
        %p316 = pneg %p84
        %p317 = pneg %p81
        %p318 = scmp.lt.s32.totalorder %s20, 2
        %s319 = scalar_select %p318, %s20, 2
        %s320 = scalar_lea.vmem %s2, %s319
        %p321 = pneg %p110
        %p322 = pneg %p107
        %p323 = pneg %p138
        %p324 = pneg %p135
        %s325 = sand.u32 %s125, 1
        %s326 = sand.u32 %s125, 1
        %s327 = smul.addr %s326, 8
        %s328 = scalar_lea.vmem [#allocation4], %s327
        %s329 = smul.u32 2, %s19
        %p330 = scmp.lt.s32.totalorder %s329, 1
        %s331 = scalar_select %p330, %s329, 1
        %p332 = scmp.lt.s32.totalorder %s21, 0
        %s333 = scalar_select %p332, %s21, 0
        %s334 = sadd.s32 %s333, %s331
        %s335 = smul.addr %s334, 4
        %s336 = scalar_lea.vmem %s0, %s335
        %s337 = smul.u32 2, %s19
        %s338 = smul.u32 16, %s21
        %p339 = scmp.lt.s32.totalorder %s20, 2
        %s340 = scalar_select %p339, %s20, 2
        %s341 = scalar_lea.vmem %s2, %s340
        %s342 = smul.u32 2, %s19
        %p343 = scmp.eq.s32.totalorder %s21, 0
        // Predicated region
        $region74: #{transformer_forward.54} parent=68 // pred_check
          %p344 = pneg %p343
        $region75: #{transformer_forward.54} parent=68 // pred_check_branch
          %346 = sbr.rel (%p344) target = $region77
        $region76: #{transformer_forward.54} parent=68 // pred_region
          %347 = vst [vmem:[#allocation2] sm:$0xff] 0.0
          %348 = vst [vmem:[#allocation2 + $0x8] sm:$0xff] 0.0
        $region77: #{transformer_forward.54} parent=68 // pred_fallthru
          _
        %v349 = vld [vmem:[#allocation2] sm:$0xff]
        %v350 = vld [vmem:[#allocation2 + $0x8] sm:$0xff]
        %v351 = vld [vmem:[%s336] sm:$0xf]
        %v352 = vld [vmem:[%s336 + $0x4] sm:$0xf]
        %v353 = vld [vmem:[%s298] sm:$0xf]
        %v354 = vld [vmem:[%s298 + $0x4] sm:$0xf]
        %v355 = vld [vmem:[%s298 + $0x8] sm:$0xf]
        %v356 = vld [vmem:[%s298 + $0xc] sm:$0xf]
        %v357 = vld [vmem:[%s298 + $0x10] sm:$0xf]
        %v358 = vld [vmem:[%s298 + $0x14] sm:$0xf]
        %v359 = vld [vmem:[%s298 + $0x18] sm:$0xf]
        %v360 = vld [vmem:[%s298 + $0x1c] sm:$0xf]
        %v361 = vld [vmem:[%s298 + $0x20] sm:$0xf]
        %v362 = vld [vmem:[%s298 + $0x24] sm:$0xf]
        %v363 = vld [vmem:[%s298 + $0x28] sm:$0xf]
        %v364 = vld [vmem:[%s298 + $0x2c] sm:$0xf]
        %v365 = vld [vmem:[%s298 + $0x30] sm:$0xf]
        %v366 = vld [vmem:[%s298 + $0x34] sm:$0xf]
        %v367 = vld [vmem:[%s298 + $0x38] sm:$0xf]
        %v368 = vld [vmem:[%s298 + $0x3c] sm:$0xf]
        %v371 = vunpack.c.l.b16 %v351
        %v372 = vunpack.c.l.b16 %v352
        %v373 = vpack.c.b16 %v372, %v371
        %v391 = vunpack.c.l.b16 %v353
        %v392 = vunpack.c.l.b16 %v354
        %v393 = vunpack.c.l.b16 %v355
        %v394 = vunpack.c.l.b16 %v356
        %v395 = vunpack.c.l.b16 %v357
        %v396 = vunpack.c.l.b16 %v358
        %v397 = vunpack.c.l.b16 %v359
        %v398 = vunpack.c.l.b16 %v360
        %v399 = vunpack.c.l.b16 %v361
        %v400 = vunpack.c.l.b16 %v362
        %v401 = vunpack.c.l.b16 %v363
        %v402 = vunpack.c.l.b16 %v364
        %v403 = vunpack.c.l.b16 %v365
        %v404 = vunpack.c.l.b16 %v366
        %v405 = vunpack.c.l.b16 %v367
        %v406 = vunpack.c.l.b16 %v368
        %v407 = vpack.c.b16 %v392, %v391
        %v408 = vpack.c.b16 %v394, %v393
        %v409 = vpack.c.b16 %v396, %v395
        %v410 = vpack.c.b16 %v398, %v397
        %v411 = vpack.c.b16 %v400, %v399
        %v412 = vpack.c.b16 %v402, %v401
        %v413 = vpack.c.b16 %v404, %v403
        %v414 = vpack.c.b16 %v406, %v405
        %423 = vmatpush.bf16.msra.mxu0 %v414
        %424 = vmatpush.bf16.msra.mxu0 %v413
        %425 = vmatpush.bf16.msra.mxu0 %v412
        %426 = vmatpush.bf16.msra.mxu0 %v411
        %427 = vmatpush.bf16.msra.mxu0 %v410
        %428 = vmatpush.bf16.msra.mxu0 %v409
        %429 = vmatpush.bf16.msra.mxu0 %v408
        %430 = vmatpush.bf16.msra.mxu0 %v407
        %431 = vmatmul.bf16.gmra.mxu0 %v373
        %v432 = vpop.f32.mrf.mxu0
        %v433 = vadd.f32 0.0, %v432
        %v434 = vpop.f32.mrf.mxu0
        %v435 = vadd.f32 0.0, %v434
        %436 = vdwg.mxu0
        %v437 = vadd.f32 %v349, %v433
        %v438 = vadd.f32 %v350, %v435
        %439 = vst [vmem:[#allocation2] sm:$0xff] %v437
        %440 = vst [vmem:[#allocation2 + $0x8] sm:$0xff] %v438
        // Predicated region
        $region78: #{transformer_forward.54} parent=68 // pred_check
          %p441 = pneg %p343
        $region79: #{transformer_forward.54} parent=68 // pred_check_branch
          %443 = sbr.rel (%p441) target = $region81
        $region80: #{transformer_forward.54} parent=68 // pred_region
          %v444 = vld [vmem:[#allocation2] sm:$0xff]
          %v445 = vld [vmem:[#allocation2 + $0x8] sm:$0xff]
          %v446 = vld [vmem:[%s341] sm:$0x1]
          %v448 = vperm.slane %v446, 0
          %v450 = vadd.f32 %v444, %v448
          %v451 = vadd.f32 %v445, %v448
          %v452 = vpack.c.bf16 %v450, %v450
          %v453 = vpack.c.bf16 %v451, %v451
          %454 = vst [vmem:[%s328] sm:$0xf] %v452
          %455 = vst [vmem:[%s328 + $0x4] sm:$0xf] %v453
        $region81: #{transformer_forward.54} parent=68 // pred_fallthru
          _
        %s456 = sand.u32 %s125, 1
        %s457 = sand.u32 %s125, 1
        %s458 = smul.addr %s457, 8
        %s459 = scalar_lea.vmem [#allocation4], %s458
        // Predicated region
        $region82: #{transformer_forward.54} parent=68 // pred_check
          %p460 = pneg %p135
        $region83: #{transformer_forward.54} parent=68 // pred_check_branch
          %462 = sbr.rel (%p460) target = $region85
        $region84: #{transformer_forward.54} parent=68 // pred_region
          %s463 = smul.u32 2, %s19
          %s464 = smul.addr %s463, 3
          %s465 = sadd.s32 %s20, %s464
          %s466 = smul.addr %s465, 4
          %s467 = scalar_lea.vmem %s3, %s466
          // Predicated region
          $region86: #{transformer_forward.54} parent=84 // pred_check
            _
          $region87: #{transformer_forward.54} parent=84 // pred_check_branch
            %469 = sbr.rel (0) target = $region89
          $region88: #{transformer_forward.54} parent=84 // pred_region
            // Predicated region
            $region90: #{transformer_forward.54} parent=88 // pred_check
              _
            $region91: #{transformer_forward.54} parent=88 // pred_check_branch
              %471 = sbr.rel target = $region93
            $region92: #{transformer_forward.54} parent=88 // pred_region
              // Predicated region
              $region105: #{transformer_forward.54} parent=92 // pred_check
                _
              $region106: #{transformer_forward.54} parent=92 // pred_check_branch
                %489 = sbr.rel (0) target = $region108
              $region107: #{transformer_forward.54} parent=92 // pred_region
                loop: start=0, step=1, limit=1
                $region109: #{transformer_forward.54} parent=107 // loop_pre_header
                  _
                $region110: #{transformer_forward.54} parent=107 // loop_header
                  %s491 = sphi 0, %s495
                  %p492 = scmp.ge.s32.totalorder %s491, 1
                  %s496 = sphi %s459, %s459
                  %s497 = sphi %s467, %s467
                $region111: #{transformer_forward.54} parent=107 // loop_header_branch
                  %494 = sbr.rel (%p492) target = $region115
                $region112: #{transformer_forward.54} parent=107 // loop_body
                  _
                $region113: #{transformer_forward.54} parent=107 // loop_footer
                  %s495 = sadd.s32 1, %s491
                $region114: #{transformer_forward.54} parent=107 // loop_footer_branch
                  %490 = sbr.rel target = $region110
                $region115: #{transformer_forward.54} parent=107 // loop_exit
                  _
                %s499 = ssub.s32 16, 1
                loop: start=0, step=1, limit=1
                $region116: #{transformer_forward.54} parent=107 // loop_pre_header
                  _
                $region117: #{transformer_forward.54} parent=107 // loop_header
                  %s501 = sphi 0, %s505
                  %p502 = scmp.ge.s32.totalorder %s501, 1
                  %s506 = sphi %s459, %s459
                  %s507 = sphi %s467, %s467
                $region118: #{transformer_forward.54} parent=107 // loop_header_branch
                  %504 = sbr.rel (%p502) target = $region122
                $region119: #{transformer_forward.54} parent=107 // loop_body
                  %v508 = vld [vmem:[%s506] sm:%s499]
                  %509 = vst [vmem:[%s507] sm:%s499] %v508
                  %v510 = vld [vmem:[%s506 + $0x4] sm:%s499]
                  %511 = vst [vmem:[%s507 + $0xc] sm:%s499] %v510
                $region120: #{transformer_forward.54} parent=107 // loop_footer
                  %s505 = sadd.s32 1, %s501
                $region121: #{transformer_forward.54} parent=107 // loop_footer_branch
                  %500 = sbr.rel target = $region117
                $region122: #{transformer_forward.54} parent=107 // loop_exit
                  _
              $region108: #{transformer_forward.54} parent=92 // pred_fallthru
                _
            $region93: #{transformer_forward.54} parent=88 // pred_fallthru
              _
            // Predicated region
            $region94: #{transformer_forward.54} parent=88 // pred_check
              _
            $region95: #{transformer_forward.54} parent=88 // pred_check_branch
              %473 = sbr.rel (0) target = $region97
            $region96: #{transformer_forward.54} parent=88 // pred_region
              %s475 = ssub.s32 16, 1
              loop: start=0, step=1, limit=1
              $region98: #{transformer_forward.54} parent=96 // loop_pre_header
                _
              $region99: #{transformer_forward.54} parent=96 // loop_header
                %s477 = sphi 0, %s481
                %p478 = scmp.ge.s32.totalorder %s477, 1
                %s482 = sphi %s459, %s459
                %s483 = sphi %s467, %s467
              $region100: #{transformer_forward.54} parent=96 // loop_header_branch
                %480 = sbr.rel (%p478) target = $region104
              $region101: #{transformer_forward.54} parent=96 // loop_body
                %v484 = vld [vmem:[%s482] sm:%s475]
                %485 = vst [vmem:[%s483] sm:%s475] %v484
                %v486 = vld [vmem:[%s482 + $0x4] sm:%s475]
                %487 = vst [vmem:[%s483 + $0xc] sm:%s475] %v486
              $region102: #{transformer_forward.54} parent=96 // loop_footer
                %s481 = sadd.s32 1, %s477
              $region103: #{transformer_forward.54} parent=96 // loop_footer_branch
                %476 = sbr.rel target = $region99
              $region104: #{transformer_forward.54} parent=96 // loop_exit
                _
            $region97: #{transformer_forward.54} parent=88 // pred_fallthru
              _
          $region89: #{transformer_forward.54} parent=84 // pred_fallthru
            _
          %512 = vnop
        $region85: #{transformer_forward.54} parent=68 // pred_fallthru
          _
      $region69: #{transformer_forward.54} parent=5 // pred_fallthru
        _
      %p513 = scmp.le.s32.totalorder 2, %s9
      // Predicated region
      $region123: #{transformer_forward.54} parent=5 // pred_check
        %p514 = pneg %p513
      $region124: #{transformer_forward.54} parent=5 // pred_check_branch
        %516 = sbr.rel (%p514) target = $region126
      $region125: #{transformer_forward.54} parent=5 // pred_region
        %s517 = ssub.s32 %s9, 2
        // Predicated region
        $region127: #{transformer_forward.54} parent=125 // pred_check
          %p518 = pneg %p141
        $region128: #{transformer_forward.54} parent=125 // pred_check_branch
          %520 = sbr.rel (%p518) target = $region130
        $region129: #{transformer_forward.54} parent=125 // pred_region
          %s521 = sand.u32 %s126, 1
          %s522 = sand.u32 %s126, 1
          %s523 = smul.addr %s522, 8
          %s524 = scalar_lea.vmem [#allocation4], %s523
        $region130: #{transformer_forward.54} parent=125 // pred_fallthru
          _
      $region126: #{transformer_forward.54} parent=5 // pred_fallthru
        _
    $region6: #{transformer_forward.54} parent=1 // loop_footer
      %s13 = sadd.s32 1, %s9
    $region7: #{transformer_forward.54} parent=1 // loop_footer_branch
      %8 = sbr.rel target = $region3
    $region8: #{transformer_forward.54} parent=1 // loop_exit
      _

// kernel: transformer_forward.56
$region0: #{transformer_forward.56}
  #allocation0 [shape = 'u32[]', space=smem, size = 0x4, offset = 0x4, fixed_abs, tag = 'smem constant byte address 0x4 - core index']
  #allocation1 [shape = 'u32[72,128]{1,0:T(1,128)}', space=vmem, size = 0x9000, scoped, tag = 'internal scratch']
  #allocation2 [shape = 'f32[16,128]{1,0:T(8,128)}', space=vmem, size = 0x2000, scoped, tag = 'scratch operand']
  %s0 = inlined_call_operand.vmem [shape: bf16[16,128], index: 0, kind: input, shape index: {}]
  %s1 = inlined_call_operand.vmem [shape: bf16[128,128], index: 1, kind: input, shape index: {}]
  %s2 = inlined_call_operand.vmem [shape: f32[1,128], index: 2, kind: input, shape index: {}]
  %s3 = inlined_call_operand.vmem [shape: bf16[16,128], index: 3, kind: input, shape index: {}]
  %s4 = inlined_call_operand.vmem [shape: bf16[16,128], index: 4, kind: output, shape index: {}]
  %s5 = sld [smem:[#allocation0]]
  $region34: #{transformer_forward.56} parent=0
    _
  %s7 = ssub.s32 1, %s5
  %s8 = scalar_select 0, %s7, %s5
  // Predicated region
  $region2: #{transformer_forward.56} parent=0 // pred_check
    _
  $region3: #{transformer_forward.56} parent=0 // pred_check_branch
    %10 = sbr.rel (0) target = $region5
  $region4: #{transformer_forward.56} parent=0 // pred_region
    _
  $region5: #{transformer_forward.56} parent=0 // pred_fallthru
    _
  // Predicated region
  $region6: #{transformer_forward.56} parent=0 // pred_check
    _
  $region7: #{transformer_forward.56} parent=0 // pred_check_branch
    %12 = sbr.rel (0) target = $region9
  $region8: #{transformer_forward.56} parent=0 // pred_region
    _
  $region9: #{transformer_forward.56} parent=0 // pred_fallthru
    _
  // Predicated region
  $region10: #{transformer_forward.56} parent=0 // pred_check
    _
  $region11: #{transformer_forward.56} parent=0 // pred_check_branch
    %14 = sbr.rel (0) target = $region13
  $region12: #{transformer_forward.56} parent=0 // pred_region
    _
  $region13: #{transformer_forward.56} parent=0 // pred_fallthru
    _
  // Predicated region
  $region14: #{transformer_forward.56} parent=0 // pred_check
    _
  $region15: #{transformer_forward.56} parent=0 // pred_check_branch
    %16 = sbr.rel (0) target = $region17
  $region16: #{transformer_forward.56} parent=0 // pred_region
    _
  $region17: #{transformer_forward.56} parent=0 // pred_fallthru
    _
  %p17 = scmp.eq.s32.totalorder 0, 0
  // Predicated region
  $region18: #{transformer_forward.56} parent=0 // pred_check
    %p18 = pneg %p17
  $region19: #{transformer_forward.56} parent=0 // pred_check_branch
    %20 = sbr.rel (%p18) target = $region21
  $region20: #{transformer_forward.56} parent=0 // pred_region
    %21 = vst [vmem:[#allocation2] sm:$0xff] 0.0
    %22 = vst [vmem:[#allocation2 + $0x8] sm:$0xff] 0.0
  $region21: #{transformer_forward.56} parent=0 // pred_fallthru
    _
  %v23 = vld [vmem:[#allocation2] sm:$0xff]
  %v24 = vld [vmem:[#allocation2 + $0x8] sm:$0xff]
  %v25 = vld [vmem:[%s0] sm:$0xf]
  %v26 = vld [vmem:[%s0 + $0x4] sm:$0xf]
  %v27 = vld [vmem:[%s1] sm:$0xf]
  %v28 = vld [vmem:[%s1 + $0x4] sm:$0xf]
  %v29 = vld [vmem:[%s1 + $0x8] sm:$0xf]
  %v30 = vld [vmem:[%s1 + $0xc] sm:$0xf]
  %v31 = vld [vmem:[%s1 + $0x10] sm:$0xf]
  %v32 = vld [vmem:[%s1 + $0x14] sm:$0xf]
  %v33 = vld [vmem:[%s1 + $0x18] sm:$0xf]
  %v34 = vld [vmem:[%s1 + $0x1c] sm:$0xf]
  %v35 = vld [vmem:[%s1 + $0x20] sm:$0xf]
  %v36 = vld [vmem:[%s1 + $0x24] sm:$0xf]
  %v37 = vld [vmem:[%s1 + $0x28] sm:$0xf]
  %v38 = vld [vmem:[%s1 + $0x2c] sm:$0xf]
  %v39 = vld [vmem:[%s1 + $0x30] sm:$0xf]
  %v40 = vld [vmem:[%s1 + $0x34] sm:$0xf]
  %v41 = vld [vmem:[%s1 + $0x38] sm:$0xf]
  %v42 = vld [vmem:[%s1 + $0x3c] sm:$0xf]
  %v45 = vunpack.c.l.b16 %v25
  %v46 = vunpack.c.l.b16 %v26
  %v47 = vpack.c.b16 %v46, %v45
  %v65 = vunpack.c.l.b16 %v27
  %v66 = vunpack.c.l.b16 %v28
  %v67 = vunpack.c.l.b16 %v29
  %v68 = vunpack.c.l.b16 %v30
  %v69 = vunpack.c.l.b16 %v31
  %v70 = vunpack.c.l.b16 %v32
  %v71 = vunpack.c.l.b16 %v33
  %v72 = vunpack.c.l.b16 %v34
  %v73 = vunpack.c.l.b16 %v35
  %v74 = vunpack.c.l.b16 %v36
  %v75 = vunpack.c.l.b16 %v37
  %v76 = vunpack.c.l.b16 %v38
  %v77 = vunpack.c.l.b16 %v39
  %v78 = vunpack.c.l.b16 %v40
  %v79 = vunpack.c.l.b16 %v41
  %v80 = vunpack.c.l.b16 %v42
  %v81 = vpack.c.b16 %v66, %v65
  %v82 = vpack.c.b16 %v68, %v67
  %v83 = vpack.c.b16 %v70, %v69
  %v84 = vpack.c.b16 %v72, %v71
  %v85 = vpack.c.b16 %v74, %v73
  %v86 = vpack.c.b16 %v76, %v75
  %v87 = vpack.c.b16 %v78, %v77
  %v88 = vpack.c.b16 %v80, %v79
  %97 = vmatpush.bf16.msra.mxu0 %v88
  %98 = vmatpush.bf16.msra.mxu0 %v87
  %99 = vmatpush.bf16.msra.mxu0 %v86
  %100 = vmatpush.bf16.msra.mxu0 %v85
  %101 = vmatpush.bf16.msra.mxu0 %v84
  %102 = vmatpush.bf16.msra.mxu0 %v83
  %103 = vmatpush.bf16.msra.mxu0 %v82
  %104 = vmatpush.bf16.msra.mxu0 %v81
  %105 = vmatmul.bf16.gmra.mxu0 %v47
  %v106 = vpop.f32.mrf.mxu0
  %v107 = vadd.f32 0.0, %v106
  %v108 = vpop.f32.mrf.mxu0
  %v109 = vadd.f32 0.0, %v108
  %110 = vdwg.mxu0
  %v111 = vadd.f32 %v23, %v107
  %v112 = vadd.f32 %v24, %v109
  %113 = vst [vmem:[#allocation2] sm:$0xff] %v111
  %114 = vst [vmem:[#allocation2 + $0x8] sm:$0xff] %v112
  // Predicated region
  $region22: #{transformer_forward.56} parent=0 // pred_check
    %p115 = pneg %p17
  $region23: #{transformer_forward.56} parent=0 // pred_check_branch
    %117 = sbr.rel (%p115) target = $region25
  $region24: #{transformer_forward.56} parent=0 // pred_region
    %v118 = vld [vmem:[#allocation2] sm:$0xff]
    %v119 = vld [vmem:[#allocation2 + $0x8] sm:$0xff]
    %v120 = vld [vmem:[%s2] sm:$0x1]
    %v122 = vperm.slane %v120, 0
    %v124 = vadd.f32 %v118, %v122
    %v125 = vadd.f32 %v119, %v122
    %v126 = vld [vmem:[%s3] sm:$0xf]
    %v127 = vld [vmem:[%s3 + $0x4] sm:$0xf]
    %v128 = vunpack.c.l.bf16 %v126
    %v129 = vunpack.c.l.bf16 %v127
    %v130 = vadd.f32 %v124, %v128
    %v131 = vadd.f32 %v125, %v129
    %v132 = vpack.c.bf16 %v130, %v130
    %v133 = vpack.c.bf16 %v131, %v131
    %134 = vst [vmem:[%s4] sm:$0xf] %v132
    %135 = vst [vmem:[%s4 + $0x4] sm:$0xf] %v133
  $region25: #{transformer_forward.56} parent=0 // pred_fallthru
    _
  // Predicated region
  $region26: #{transformer_forward.56} parent=0 // pred_check
    _
  $region27: #{transformer_forward.56} parent=0 // pred_check_branch
    %137 = sbr.rel (0) target = $region29
  $region28: #{transformer_forward.56} parent=0 // pred_region
    _
  $region29: #{transformer_forward.56} parent=0 // pred_fallthru
    _
  // Predicated region
  $region30: #{transformer_forward.56} parent=0 // pred_check
    _
  $region31: #{transformer_forward.56} parent=0 // pred_check_branch
    %139 = sbr.rel (0) target = $region33
  $region32: #{transformer_forward.56} parent=0 // pred_region
    _
  $region33: #{transformer_forward.56} parent=0 // pred_fallthru
    _

// kernel: transformer_forward.57
$region0: #{transformer_forward.57}
  #allocation0 [shape = 'u32[]', space=smem, size = 0x4, offset = 0x4, fixed_abs, tag = 'smem constant byte address 0x4 - core index']
  #allocation1 [shape = 'u32[72,128]{1,0:T(1,128)}', space=vmem, size = 0x9000, scoped, tag = 'internal scratch']
  %s0 = inlined_call_operand.vmem [shape: bf16[16,32], index: 0, kind: input, shape index: {}]
  %s1 = inlined_call_operand.vmem [shape: f32[1,32], index: 1, kind: input, shape index: {}]
  %s2 = inlined_call_operand.vmem [shape: f32[1,32], index: 2, kind: input, shape index: {}]
  %s3 = inlined_call_operand.vmem [shape: bf16[16,32], index: 3, kind: output, shape index: {}]
  %s4 = sld [smem:[#allocation0]]
  $region22: #{transformer_forward.57} parent=0
    _
  %s6 = ssub.s32 1, %s4
  %s7 = scalar_select 0, %s6, %s4
  // Predicated region
  $region2: #{transformer_forward.57} parent=0 // pred_check
    _
  $region3: #{transformer_forward.57} parent=0 // pred_check_branch
    %9 = sbr.rel (0) target = $region5
  $region4: #{transformer_forward.57} parent=0 // pred_region
    _
  $region5: #{transformer_forward.57} parent=0 // pred_fallthru
    _
  // Predicated region
  $region6: #{transformer_forward.57} parent=0 // pred_check
    _
  $region7: #{transformer_forward.57} parent=0 // pred_check_branch
    %11 = sbr.rel (0) target = $region9
  $region8: #{transformer_forward.57} parent=0 // pred_region
    _
  $region9: #{transformer_forward.57} parent=0 // pred_fallthru
    _
  // Predicated region
  $region10: #{transformer_forward.57} parent=0 // pred_check
    _
  $region11: #{transformer_forward.57} parent=0 // pred_check_branch
    %13 = sbr.rel (0) target = $region13
  $region12: #{transformer_forward.57} parent=0 // pred_region
    _
  $region13: #{transformer_forward.57} parent=0 // pred_fallthru
    _
  %v14 = vld [vmem:[%s0] sm:$0xf]
  %v15 = vld [vmem:[%s0 + $0x4] sm:$0xf]
  %v16 = vunpack.c.l.bf16 %v14
  %v17 = vunpack.c.l.bf16 %v15
  %vm18 = vcmask 261120
  %v19 = vsel %vm18, %v16, 0.0
  %20 = vadd.xlane.f32.xlu0 %v19
  %v21 = vpop.xlane.xlu0 %20
  %v22 = vsel %vm18, %v17, 0.0
  %23 = vadd.xlane.f32.xlu0 %v22
  %v24 = vpop.xlane.xlu0 %23
  %v25 = vmul.f32 %v21, 0.03125
  %v26 = vmul.f32 %v24, 0.03125
  %v27 = vsub.f32 %v16, %v25
  %v28 = vsub.f32 %v17, %v26
  %v29 = vmul.f32 %v27, %v27
  %v30 = vmul.f32 %v28, %v28
  %v31 = vsel %vm18, %v29, 0.0
  %32 = vadd.xlane.f32.xlu0 %v31
  %v33 = vpop.xlane.xlu0 %32
  %v34 = vsel %vm18, %v30, 0.0
  %35 = vadd.xlane.f32.xlu0 %v34
  %v36 = vpop.xlane.xlu0 %35
  %v37 = vmul.f32 %v33, 0.03125
  %v38 = vmul.f32 %v36, 0.03125
  %v39 = vadd.f32 %v37, 1e-05
  %v40 = vadd.f32 %v38, 1e-05
  %v41 = vrsqrt.pop %v39
  %v42 = vmul.f32 %v41, %v39
  %v43 = vmul.f32 %v42, %v41
  %v44 = vmul.f32 0.5, %v43
  %v45 = vsub.f32 1.5, %v44
  %v46 = vmul.f32 %v41, %v45
  %vm47 = vweird.f32 %v39
  %vm48 = vweird.f32 %v41
  %vm49 = vmor %vm47, %vm48
  %v50 = vsel %vm49, %v41, %v46
  %v51 = vrsqrt.pop %v40
  %v52 = vmul.f32 %v51, %v40
  %v53 = vmul.f32 %v52, %v51
  %v54 = vmul.f32 0.5, %v53
  %v55 = vsub.f32 1.5, %v54
  %v56 = vmul.f32 %v51, %v55
  %vm57 = vweird.f32 %v40
  %vm58 = vweird.f32 %v51
  %vm59 = vmor %vm57, %vm58
  %v60 = vsel %vm59, %v51, %v56
  %v61 = vmul.f32 %v27, %v50
  %v62 = vmul.f32 %v28, %v60
  %v63 = vld [vmem:[%s1] sm:$0x1]
  %v65 = vperm.slane %v63, 0
  %v67 = vmul.f32 %v61, %v65
  %v68 = vmul.f32 %v62, %v65
  %v69 = vld [vmem:[%s2] sm:$0x1]
  %v71 = vperm.slane %v69, 0
  %v73 = vadd.f32 %v67, %v71
  %v74 = vadd.f32 %v68, %v71
  %v75 = vpack.c.bf16 %v73, %v73
  %v76 = vpack.c.bf16 %v74, %v74
  %vm77 = vcmask 257024
  %78 = vst.msk [vmem:[%s3] sm:$0xf] %vm77, %v75
  %79 = vst.msk [vmem:[%s3 + $0x4] sm:$0xf] %vm77, %v76
  // Predicated region
  $region14: #{transformer_forward.57} parent=0 // pred_check
    _
  $region15: #{transformer_forward.57} parent=0 // pred_check_branch
    %81 = sbr.rel (0) target = $region17
  $region16: #{transformer_forward.57} parent=0 // pred_region
    _
  $region17: #{transformer_forward.57} parent=0 // pred_fallthru
    _
  // Predicated region
  $region18: #{transformer_forward.57} parent=0 // pred_check
    _
  $region19: #{transformer_forward.57} parent=0 // pred_check_branch
    %83 = sbr.rel (0) target = $region21
  $region20: #{transformer_forward.57} parent=0 // pred_region
    _
  $region21: #{transformer_forward.57} parent=0 // pred_fallthru
    _

// kernel: transformer_forward.58
$region0: #{transformer_forward.58}
  #allocation0 [shape = 'u32[]', space=smem, size = 0x4, offset = 0x4, fixed_abs, tag = 'smem constant byte address 0x4 - core index']
  #allocation1 [shape = 'u32[72,128]{1,0:T(1,128)}', space=vmem, size = 0x9000, scoped, tag = 'internal scratch']
  #allocation2 [shape = 'f32[16,128]{1,0:T(8,128)}', space=vmem, size = 0x2000, scoped, tag = 'scratch operand']
  %s0 = inlined_call_operand.vmem [shape: bf16[16,128], index: 0, kind: input, shape index: {}]
  %s1 = inlined_call_operand.vmem [shape: bf16[128,128], index: 1, kind: input, shape index: {}]
  %s2 = inlined_call_operand.vmem [shape: f32[1,128], index: 2, kind: input, shape index: {}]
  %s3 = inlined_call_operand.vmem [shape: bf16[16,128], index: 3, kind: output, shape index: {}]
  %s4 = sld [smem:[#allocation0]]
  $region30: #{transformer_forward.58} parent=0
    _
  %s6 = ssub.s32 1, %s4
  %s7 = scalar_select 0, %s6, %s4
  // Predicated region
  $region2: #{transformer_forward.58} parent=0 // pred_check
    _
  $region3: #{transformer_forward.58} parent=0 // pred_check_branch
    %9 = sbr.rel (0) target = $region5
  $region4: #{transformer_forward.58} parent=0 // pred_region
    _
  $region5: #{transformer_forward.58} parent=0 // pred_fallthru
    _
  // Predicated region
  $region6: #{transformer_forward.58} parent=0 // pred_check
    _
  $region7: #{transformer_forward.58} parent=0 // pred_check_branch
    %11 = sbr.rel (0) target = $region9
  $region8: #{transformer_forward.58} parent=0 // pred_region
    _
  $region9: #{transformer_forward.58} parent=0 // pred_fallthru
    _
  // Predicated region
  $region10: #{transformer_forward.58} parent=0 // pred_check
    _
  $region11: #{transformer_forward.58} parent=0 // pred_check_branch
    %13 = sbr.rel (0) target = $region13
  $region12: #{transformer_forward.58} parent=0 // pred_region
    _
  $region13: #{transformer_forward.58} parent=0 // pred_fallthru
    _
  %p14 = scmp.eq.s32.totalorder 0, 0
  // Predicated region
  $region14: #{transformer_forward.58} parent=0 // pred_check
    %p15 = pneg %p14
  $region15: #{transformer_forward.58} parent=0 // pred_check_branch
    %17 = sbr.rel (%p15) target = $region17
  $region16: #{transformer_forward.58} parent=0 // pred_region
    %18 = vst [vmem:[#allocation2] sm:$0xff] 0.0
    %19 = vst [vmem:[#allocation2 + $0x8] sm:$0xff] 0.0
  $region17: #{transformer_forward.58} parent=0 // pred_fallthru
    _
  %v20 = vld [vmem:[#allocation2] sm:$0xff]
  %v21 = vld [vmem:[#allocation2 + $0x8] sm:$0xff]
  %v22 = vld [vmem:[%s0] sm:$0xf]
  %v23 = vld [vmem:[%s0 + $0x4] sm:$0xf]
  %v24 = vld [vmem:[%s1] sm:$0xf]
  %v25 = vld [vmem:[%s1 + $0x4] sm:$0xf]
  %v26 = vld [vmem:[%s1 + $0x8] sm:$0xf]
  %v27 = vld [vmem:[%s1 + $0xc] sm:$0xf]
  %v28 = vld [vmem:[%s1 + $0x10] sm:$0xf]
  %v29 = vld [vmem:[%s1 + $0x14] sm:$0xf]
  %v30 = vld [vmem:[%s1 + $0x18] sm:$0xf]
  %v31 = vld [vmem:[%s1 + $0x1c] sm:$0xf]
  %v32 = vld [vmem:[%s1 + $0x20] sm:$0xf]
  %v33 = vld [vmem:[%s1 + $0x24] sm:$0xf]
  %v34 = vld [vmem:[%s1 + $0x28] sm:$0xf]
  %v35 = vld [vmem:[%s1 + $0x2c] sm:$0xf]
  %v36 = vld [vmem:[%s1 + $0x30] sm:$0xf]
  %v37 = vld [vmem:[%s1 + $0x34] sm:$0xf]
  %v38 = vld [vmem:[%s1 + $0x38] sm:$0xf]
  %v39 = vld [vmem:[%s1 + $0x3c] sm:$0xf]
  %v42 = vunpack.c.l.b16 %v22
  %v43 = vunpack.c.l.b16 %v23
  %v44 = vpack.c.b16 %v43, %v42
  %v62 = vunpack.c.l.b16 %v24
  %v63 = vunpack.c.l.b16 %v25
  %v64 = vunpack.c.l.b16 %v26
  %v65 = vunpack.c.l.b16 %v27
  %v66 = vunpack.c.l.b16 %v28
  %v67 = vunpack.c.l.b16 %v29
  %v68 = vunpack.c.l.b16 %v30
  %v69 = vunpack.c.l.b16 %v31
  %v70 = vunpack.c.l.b16 %v32
  %v71 = vunpack.c.l.b16 %v33
  %v72 = vunpack.c.l.b16 %v34
  %v73 = vunpack.c.l.b16 %v35
  %v74 = vunpack.c.l.b16 %v36
  %v75 = vunpack.c.l.b16 %v37
  %v76 = vunpack.c.l.b16 %v38
  %v77 = vunpack.c.l.b16 %v39
  %v78 = vpack.c.b16 %v63, %v62
  %v79 = vpack.c.b16 %v65, %v64
  %v80 = vpack.c.b16 %v67, %v66
  %v81 = vpack.c.b16 %v69, %v68
  %v82 = vpack.c.b16 %v71, %v70
  %v83 = vpack.c.b16 %v73, %v72
  %v84 = vpack.c.b16 %v75, %v74
  %v85 = vpack.c.b16 %v77, %v76
  %94 = vmatpush.bf16.msra.mxu0 %v85
  %95 = vmatpush.bf16.msra.mxu0 %v84
  %96 = vmatpush.bf16.msra.mxu0 %v83
  %97 = vmatpush.bf16.msra.mxu0 %v82
  %98 = vmatpush.bf16.msra.mxu0 %v81
  %99 = vmatpush.bf16.msra.mxu0 %v80
  %100 = vmatpush.bf16.msra.mxu0 %v79
  %101 = vmatpush.bf16.msra.mxu0 %v78
  %102 = vmatmul.bf16.gmra.mxu0 %v44
  %v103 = vpop.f32.mrf.mxu0
  %v104 = vadd.f32 0.0, %v103
  %v105 = vpop.f32.mrf.mxu0
  %v106 = vadd.f32 0.0, %v105
  %107 = vdwg.mxu0
  %v108 = vadd.f32 %v20, %v104
  %v109 = vadd.f32 %v21, %v106
  %110 = vst [vmem:[#allocation2] sm:$0xff] %v108
  %111 = vst [vmem:[#allocation2 + $0x8] sm:$0xff] %v109
  // Predicated region
  $region18: #{transformer_forward.58} parent=0 // pred_check
    %p112 = pneg %p14
  $region19: #{transformer_forward.58} parent=0 // pred_check_branch
    %114 = sbr.rel (%p112) target = $region21
  $region20: #{transformer_forward.58} parent=0 // pred_region
    %v115 = vld [vmem:[#allocation2] sm:$0xff]
    %v116 = vld [vmem:[#allocation2 + $0x8] sm:$0xff]
    %v117 = vld [vmem:[%s2] sm:$0x1]
    %v119 = vperm.slane %v117, 0
    %v121 = vadd.f32 %v115, %v119
    %v122 = vadd.f32 %v116, %v119
    %v123 = vpack.c.bf16 %v121, %v121
    %v124 = vpack.c.bf16 %v122, %v122
    %125 = vst [vmem:[%s3] sm:$0xf] %v123
    %126 = vst [vmem:[%s3 + $0x4] sm:$0xf] %v124
  $region21: #{transformer_forward.58} parent=0 // pred_fallthru
    _
  // Predicated region
  $region22: #{transformer_forward.58} parent=0 // pred_check
    _
  $region23: #{transformer_forward.58} parent=0 // pred_check_branch
    %128 = sbr.rel (0) target = $region25
  $region24: #{transformer_forward.58} parent=0 // pred_region
    _
  $region25: #{transformer_forward.58} parent=0 // pred_fallthru
    _
  // Predicated region
  $region26: #{transformer_forward.58} parent=0 // pred_check
    _
  $region27: #{transformer_forward.58} parent=0 // pred_check_branch
    %130 = sbr.rel (0) target = $region29
  $region28: #{transformer_forward.58} parent=0 // pred_region
    _
  $region29: #{transformer_forward.58} parent=0 // pred_fallthru
    _

// kernel: transformer_forward.55
$region0: #{transformer_forward.55}
  #allocation0 [shape = 'u32[]', space=smem, size = 0x4, offset = 0x4, fixed_abs, tag = 'smem constant byte address 0x4 - core index']
  #allocation1 [shape = 'u32[72,128]{1,0:T(1,128)}', space=vmem, size = 0x9000, scoped, tag = 'internal scratch']
  #allocation2 [shape = 'f32[8,8,1]{2,1,0:T(8,128)}', space=vmem, size = 0x8000, scoped, tag = 'scratch operand']
  #allocation3 [shape = 'f32[8,8,1]{2,1,0:T(8,128)}', space=vmem, size = 0x8000, scoped, tag = 'scratch operand']
  #allocation4 [shape = 'f32[8,8,8]{2,1,0:T(8,128)}', space=vmem, size = 0x8000, scoped, tag = 'scratch operand']
  %s0 = inlined_call_operand.vmem [shape: bf16[8,8,8], index: 0, kind: input, shape index: {}]
  %s1 = inlined_call_operand.vmem [shape: bf16[8,8,8], index: 1, kind: input, shape index: {}]
  %s2 = inlined_call_operand.vmem [shape: bf16[8,8,8], index: 2, kind: input, shape index: {}]
  %s3 = inlined_call_operand.vmem [shape: bf16[8,8,8], index: 3, kind: output, shape index: {}]
  %s4 = sld [smem:[#allocation0]]
  $region30: #{transformer_forward.55} parent=0
    _
  %s6 = ssub.s32 1, %s4
  %s7 = scalar_select 0, %s6, %s4
  // Predicated region
  $region2: #{transformer_forward.55} parent=0 // pred_check
    _
  $region3: #{transformer_forward.55} parent=0 // pred_check_branch
    %9 = sbr.rel (0) target = $region5
  $region4: #{transformer_forward.55} parent=0 // pred_region
    _
  $region5: #{transformer_forward.55} parent=0 // pred_fallthru
    _
  // Predicated region
  $region6: #{transformer_forward.55} parent=0 // pred_check
    _
  $region7: #{transformer_forward.55} parent=0 // pred_check_branch
    %11 = sbr.rel (0) target = $region9
  $region8: #{transformer_forward.55} parent=0 // pred_region
    _
  $region9: #{transformer_forward.55} parent=0 // pred_fallthru
    _
  // Predicated region
  $region10: #{transformer_forward.55} parent=0 // pred_check
    _
  $region11: #{transformer_forward.55} parent=0 // pred_check_branch
    %13 = sbr.rel (0) target = $region13
  $region12: #{transformer_forward.55} parent=0 // pred_region
    _
  $region13: #{transformer_forward.55} parent=0 // pred_fallthru
    _
  %p15 = scmp.eq.s32.totalorder 0, 0
  // Predicated region
  $region14: #{transformer_forward.55} parent=0 // pred_check
    %p16 = pneg %p15
  $region15: #{transformer_forward.55} parent=0 // pred_check_branch
    %18 = sbr.rel (%p16) target = $region17
  $region16: #{transformer_forward.55} parent=0 // pred_region
    %vm19 = vcmask 7168
    %20 = vst.msk [vmem:[#allocation2] sm:$0xff] %vm19, -1e+30
    %21 = vst.msk [vmem:[#allocation2 + $0x8] sm:$0xff] %vm19, -1e+30
    %22 = vst.msk [vmem:[#allocation2 + $0x10] sm:$0xff] %vm19, -1e+30
    %23 = vst.msk [vmem:[#allocation2 + $0x18] sm:$0xff] %vm19, -1e+30
    %24 = vst.msk [vmem:[#allocation2 + $0x20] sm:$0xff] %vm19, -1e+30
    %25 = vst.msk [vmem:[#allocation2 + $0x28] sm:$0xff] %vm19, -1e+30
    %26 = vst.msk [vmem:[#allocation2 + $0x30] sm:$0xff] %vm19, -1e+30
    %27 = vst.msk [vmem:[#allocation2 + $0x38] sm:$0xff] %vm19, -1e+30
    %28 = vst.msk [vmem:[#allocation3] sm:$0xff] %vm19, 0.0
    %29 = vst.msk [vmem:[#allocation3 + $0x8] sm:$0xff] %vm19, 0.0
    %30 = vst.msk [vmem:[#allocation3 + $0x10] sm:$0xff] %vm19, 0.0
    %31 = vst.msk [vmem:[#allocation3 + $0x18] sm:$0xff] %vm19, 0.0
    %32 = vst.msk [vmem:[#allocation3 + $0x20] sm:$0xff] %vm19, 0.0
    %33 = vst.msk [vmem:[#allocation3 + $0x28] sm:$0xff] %vm19, 0.0
    %34 = vst.msk [vmem:[#allocation3 + $0x30] sm:$0xff] %vm19, 0.0
    %35 = vst.msk [vmem:[#allocation3 + $0x38] sm:$0xff] %vm19, 0.0
    %vm36 = vcmask 64512
    %37 = vst.msk [vmem:[#allocation4] sm:$0xff] %vm36, 0.0
    %38 = vst.msk [vmem:[#allocation4 + $0x8] sm:$0xff] %vm36, 0.0
    %39 = vst.msk [vmem:[#allocation4 + $0x10] sm:$0xff] %vm36, 0.0
    %40 = vst.msk [vmem:[#allocation4 + $0x18] sm:$0xff] %vm36, 0.0
    %41 = vst.msk [vmem:[#allocation4 + $0x20] sm:$0xff] %vm36, 0.0
    %42 = vst.msk [vmem:[#allocation4 + $0x28] sm:$0xff] %vm36, 0.0
    %43 = vst.msk [vmem:[#allocation4 + $0x30] sm:$0xff] %vm36, 0.0
    %44 = vst.msk [vmem:[#allocation4 + $0x38] sm:$0xff] %vm36, 0.0
  $region17: #{transformer_forward.55} parent=0 // pred_fallthru
    _
  %v45 = vld [vmem:[%s0] sm:$0xf]
  %v46 = vld [vmem:[%s0 + $0x4] sm:$0xf]
  %v47 = vld [vmem:[%s0 + $0x8] sm:$0xf]
  %v48 = vld [vmem:[%s0 + $0xc] sm:$0xf]
  %v49 = vld [vmem:[%s0 + $0x10] sm:$0xf]
  %v50 = vld [vmem:[%s0 + $0x14] sm:$0xf]
  %v51 = vld [vmem:[%s0 + $0x18] sm:$0xf]
  %v52 = vld [vmem:[%s0 + $0x1c] sm:$0xf]
  %v53 = vld [vmem:[%s1] sm:$0xf]
  %v54 = vld [vmem:[%s1 + $0x4] sm:$0xf]
  %v55 = vld [vmem:[%s1 + $0x8] sm:$0xf]
  %v56 = vld [vmem:[%s1 + $0xc] sm:$0xf]
  %v57 = vld [vmem:[%s1 + $0x10] sm:$0xf]
  %v58 = vld [vmem:[%s1 + $0x14] sm:$0xf]
  %v59 = vld [vmem:[%s1 + $0x18] sm:$0xf]
  %v60 = vld [vmem:[%s1 + $0x1c] sm:$0xf]
  %vm61 = vcmask 64512
  %v63 = vsel %vm61, %v45, 0
  %vm65 = vcmask 1043456
  %v67 = vsel %vm65, %v53, 0
  %69 = vmatpush.bf16.msra.mxu0 0
  %70 = vmatpush.bf16.msra.mxu0 0
  %71 = vmatpush.bf16.msra.mxu0 0
  %72 = vmatpush.bf16.msra.mxu0 0
  %73 = vmatpush.bf16.msra.mxu0 0
  %74 = vmatpush.bf16.msra.mxu0 0
  %75 = vmatpush.bf16.msra.mxu0 0
  %76 = vmatpush.bf16.msra.mxu0 %v67
  %77 = vmatmul.bf16.gmra.mxu0 %v63
  %v78 = vpop.f32.mrf.mxu0
  %v79 = vadd.f32 0.0, %v78
  %v80 = vpop.f32.mrf.mxu0
  %81 = vdwg.mxu0
  %v83 = vsel %vm61, %v46, 0
  %v86 = vsel %vm65, %v54, 0
  %88 = vmatpush.bf16.msra.mxu0 0
  %89 = vmatpush.bf16.msra.mxu0 0
  %90 = vmatpush.bf16.msra.mxu0 0
  %91 = vmatpush.bf16.msra.mxu0 0
  %92 = vmatpush.bf16.msra.mxu0 0
  %93 = vmatpush.bf16.msra.mxu0 0
  %94 = vmatpush.bf16.msra.mxu0 0
  %95 = vmatpush.bf16.msra.mxu0 %v86
  %96 = vmatmul.bf16.gmra.mxu0 %v83
  %v97 = vpop.f32.mrf.mxu0
  %v98 = vadd.f32 0.0, %v97
  %v99 = vpop.f32.mrf.mxu0
  %100 = vdwg.mxu0
  %v102 = vsel %vm61, %v47, 0
  %v105 = vsel %vm65, %v55, 0
  %107 = vmatpush.bf16.msra.mxu0 0
  %108 = vmatpush.bf16.msra.mxu0 0
  %109 = vmatpush.bf16.msra.mxu0 0
  %110 = vmatpush.bf16.msra.mxu0 0
  %111 = vmatpush.bf16.msra.mxu0 0
  %112 = vmatpush.bf16.msra.mxu0 0
  %113 = vmatpush.bf16.msra.mxu0 0
  %114 = vmatpush.bf16.msra.mxu0 %v105
  %115 = vmatmul.bf16.gmra.mxu0 %v102
  %v116 = vpop.f32.mrf.mxu0
  %v117 = vadd.f32 0.0, %v116
  %v118 = vpop.f32.mrf.mxu0
  %119 = vdwg.mxu0
  %v121 = vsel %vm61, %v48, 0
  %v124 = vsel %vm65, %v56, 0
  %126 = vmatpush.bf16.msra.mxu0 0
  %127 = vmatpush.bf16.msra.mxu0 0
  %128 = vmatpush.bf16.msra.mxu0 0
  %129 = vmatpush.bf16.msra.mxu0 0
  %130 = vmatpush.bf16.msra.mxu0 0
  %131 = vmatpush.bf16.msra.mxu0 0
  %132 = vmatpush.bf16.msra.mxu0 0
  %133 = vmatpush.bf16.msra.mxu0 %v124
  %134 = vmatmul.bf16.gmra.mxu0 %v121
  %v135 = vpop.f32.mrf.mxu0
  %v136 = vadd.f32 0.0, %v135
  %v137 = vpop.f32.mrf.mxu0
  %138 = vdwg.mxu0
  %v140 = vsel %vm61, %v49, 0
  %v143 = vsel %vm65, %v57, 0
  %145 = vmatpush.bf16.msra.mxu0 0
  %146 = vmatpush.bf16.msra.mxu0 0
  %147 = vmatpush.bf16.msra.mxu0 0
  %148 = vmatpush.bf16.msra.mxu0 0
  %149 = vmatpush.bf16.msra.mxu0 0
  %150 = vmatpush.bf16.msra.mxu0 0
  %151 = vmatpush.bf16.msra.mxu0 0
  %152 = vmatpush.bf16.msra.mxu0 %v143
  %153 = vmatmul.bf16.gmra.mxu0 %v140
  %v154 = vpop.f32.mrf.mxu0
  %v155 = vadd.f32 0.0, %v154
  %v156 = vpop.f32.mrf.mxu0
  %157 = vdwg.mxu0
  %v159 = vsel %vm61, %v50, 0
  %v162 = vsel %vm65, %v58, 0
  %164 = vmatpush.bf16.msra.mxu0 0
  %165 = vmatpush.bf16.msra.mxu0 0
  %166 = vmatpush.bf16.msra.mxu0 0
  %167 = vmatpush.bf16.msra.mxu0 0
  %168 = vmatpush.bf16.msra.mxu0 0
  %169 = vmatpush.bf16.msra.mxu0 0
  %170 = vmatpush.bf16.msra.mxu0 0
  %171 = vmatpush.bf16.msra.mxu0 %v162
  %172 = vmatmul.bf16.gmra.mxu0 %v159
  %v173 = vpop.f32.mrf.mxu0
  %v174 = vadd.f32 0.0, %v173
  %v175 = vpop.f32.mrf.mxu0
  %176 = vdwg.mxu0
  %v178 = vsel %vm61, %v51, 0
  %v181 = vsel %vm65, %v59, 0
  %183 = vmatpush.bf16.msra.mxu0 0
  %184 = vmatpush.bf16.msra.mxu0 0
  %185 = vmatpush.bf16.msra.mxu0 0
  %186 = vmatpush.bf16.msra.mxu0 0
  %187 = vmatpush.bf16.msra.mxu0 0
  %188 = vmatpush.bf16.msra.mxu0 0
  %189 = vmatpush.bf16.msra.mxu0 0
  %190 = vmatpush.bf16.msra.mxu0 %v181
  %191 = vmatmul.bf16.gmra.mxu0 %v178
  %v192 = vpop.f32.mrf.mxu0
  %v193 = vadd.f32 0.0, %v192
  %v194 = vpop.f32.mrf.mxu0
  %195 = vdwg.mxu0
  %v197 = vsel %vm61, %v52, 0
  %v200 = vsel %vm65, %v60, 0
  %202 = vmatpush.bf16.msra.mxu0 0
  %203 = vmatpush.bf16.msra.mxu0 0
  %204 = vmatpush.bf16.msra.mxu0 0
  %205 = vmatpush.bf16.msra.mxu0 0
  %206 = vmatpush.bf16.msra.mxu0 0
  %207 = vmatpush.bf16.msra.mxu0 0
  %208 = vmatpush.bf16.msra.mxu0 0
  %209 = vmatpush.bf16.msra.mxu0 %v200
  %210 = vmatmul.bf16.gmra.mxu0 %v197
  %v211 = vpop.f32.mrf.mxu0
  %v212 = vadd.f32 0.0, %v211
  %v213 = vpop.f32.mrf.mxu0
  %214 = vdwg.mxu0
  %v215 = vmul.f32 %v79, 0.17677669
  %v216 = vmul.f32 %v98, 0.17677669
  %v217 = vmul.f32 %v117, 0.17677669
  %v218 = vmul.f32 %v136, 0.17677669
  %v219 = vmul.f32 %v155, 0.17677669
  %v220 = vmul.f32 %v174, 0.17677669
  %v221 = vmul.f32 %v193, 0.17677669
  %v222 = vmul.f32 %v212, 0.17677669
  %s223 = smul.u32 0, 8
  %v224 = vlaneseq
  %v225 = vshrl.u32 %v224, 7
  %v226 = vstv %s223
  %v227 = vadd.s32 %v226, %v225
  %s228 = smul.u32 0, 8
  %v229 = vlaneseq
  %v230 = vand.u32 %v229, 127
  %v231 = vstv %s228
  %v232 = vadd.s32 %v231, %v230
  %vm233 = vcmp.lt.s32.totalorder %v232, 8
  %vm234 = vcmp.le.s32.totalorder %v232, %v227
  %vm235 = vmand %vm233, %vm234
  %v236 = vsel %vm235, %v215, -1e+30
  %v237 = vsel %vm235, %v216, -1e+30
  %v238 = vsel %vm235, %v217, -1e+30
  %v239 = vsel %vm235, %v218, -1e+30
  %v240 = vsel %vm235, %v219, -1e+30
  %v241 = vsel %vm235, %v220, -1e+30
  %v242 = vsel %vm235, %v221, -1e+30
  %v243 = vsel %vm235, %v222, -1e+30
  %v244 = vld [vmem:[#allocation2] sm:$0xff]
  %v245 = vld [vmem:[#allocation2 + $0x8] sm:$0xff]
  %v246 = vld [vmem:[#allocation2 + $0x10] sm:$0xff]
  %v247 = vld [vmem:[#allocation2 + $0x18] sm:$0xff]
  %v248 = vld [vmem:[#allocation2 + $0x20] sm:$0xff]
  %v249 = vld [vmem:[#allocation2 + $0x28] sm:$0xff]
  %v250 = vld [vmem:[#allocation2 + $0x30] sm:$0xff]
  %v251 = vld [vmem:[#allocation2 + $0x38] sm:$0xff]
  %v252 = vsel %vm61, %v236, -inf
  %253 = vmax.xlane.f32.xlu0 %v252
  %v254 = vpop.xlane.xlu0 %253
  %v255 = vsel %vm61, %v237, -inf
  %256 = vmax.xlane.f32.xlu0 %v255
  %v257 = vpop.xlane.xlu0 %256
  %v258 = vsel %vm61, %v238, -inf
  %259 = vmax.xlane.f32.xlu0 %v258
  %v260 = vpop.xlane.xlu0 %259
  %v261 = vsel %vm61, %v239, -inf
  %262 = vmax.xlane.f32.xlu0 %v261
  %v263 = vpop.xlane.xlu0 %262
  %v264 = vsel %vm61, %v240, -inf
  %265 = vmax.xlane.f32.xlu0 %v264
  %v266 = vpop.xlane.xlu0 %265
  %v267 = vsel %vm61, %v241, -inf
  %268 = vmax.xlane.f32.xlu0 %v267
  %v269 = vpop.xlane.xlu0 %268
  %v270 = vsel %vm61, %v242, -inf
  %271 = vmax.xlane.f32.xlu0 %v270
  %v272 = vpop.xlane.xlu0 %271
  %v273 = vsel %vm61, %v243, -inf
  %274 = vmax.xlane.f32.xlu0 %v273
  %v275 = vpop.xlane.xlu0 %274
  %v276 = vmax.f32 %v244, %v254
  %v277 = vmax.f32 %v245, %v257
  %v278 = vmax.f32 %v246, %v260
  %v279 = vmax.f32 %v247, %v263
  %v280 = vmax.f32 %v248, %v266
  %v281 = vmax.f32 %v249, %v269
  %v282 = vmax.f32 %v250, %v272
  %v283 = vmax.f32 %v251, %v275
  %v284 = vsub.f32 %v244, %v276
  %v285 = vsub.f32 %v245, %v277
  %v286 = vsub.f32 %v246, %v278
  %v287 = vsub.f32 %v247, %v279
  %v288 = vsub.f32 %v248, %v280
  %v289 = vsub.f32 %v249, %v281
  %v290 = vsub.f32 %v250, %v282
  %v291 = vsub.f32 %v251, %v283
  %v292 = vmul.f32 %v284, 1.442695
  %v293 = vpow.pop %v292
  %v294 = vmul.f32 %v285, 1.442695
  %v295 = vpow.pop %v294
  %v296 = vmul.f32 %v286, 1.442695
  %v297 = vpow.pop %v296
  %v298 = vmul.f32 %v287, 1.442695
  %v299 = vpow.pop %v298
  %v300 = vmul.f32 %v288, 1.442695
  %v301 = vpow.pop %v300
  %v302 = vmul.f32 %v289, 1.442695
  %v303 = vpow.pop %v302
  %v304 = vmul.f32 %v290, 1.442695
  %v305 = vpow.pop %v304
  %v306 = vmul.f32 %v291, 1.442695
  %v307 = vpow.pop %v306
  %309 = vset.pattern.permute.xlu0 0
  %310 = vperm.xlu0 %309, %v276
  %v311 = vpop.permute.xlu0 %310
  %314 = vset.pattern.permute.xlu0 0
  %315 = vperm.xlu0 %314, %v277
  %v316 = vpop.permute.xlu0 %315
  %319 = vset.pattern.permute.xlu0 0
  %320 = vperm.xlu0 %319, %v278
  %v321 = vpop.permute.xlu0 %320
  %324 = vset.pattern.permute.xlu0 0
  %325 = vperm.xlu0 %324, %v279
  %v326 = vpop.permute.xlu0 %325
  %329 = vset.pattern.permute.xlu0 0
  %330 = vperm.xlu0 %329, %v280
  %v331 = vpop.permute.xlu0 %330
  %334 = vset.pattern.permute.xlu0 0
  %335 = vperm.xlu0 %334, %v281
  %v336 = vpop.permute.xlu0 %335
  %339 = vset.pattern.permute.xlu0 0
  %340 = vperm.xlu0 %339, %v282
  %v341 = vpop.permute.xlu0 %340
  %344 = vset.pattern.permute.xlu0 0
  %345 = vperm.xlu0 %344, %v283
  %v346 = vpop.permute.xlu0 %345
  %v348 = vsub.f32 %v236, %v311
  %v349 = vsub.f32 %v237, %v316
  %v350 = vsub.f32 %v238, %v321
  %v351 = vsub.f32 %v239, %v326
  %v352 = vsub.f32 %v240, %v331
  %v353 = vsub.f32 %v241, %v336
  %v354 = vsub.f32 %v242, %v341
  %v355 = vsub.f32 %v243, %v346
  %v356 = vmul.f32 %v348, 1.442695
  %v357 = vpow.pop %v356
  %v358 = vmul.f32 %v349, 1.442695
  %v359 = vpow.pop %v358
  %v360 = vmul.f32 %v350, 1.442695
  %v361 = vpow.pop %v360
  %v362 = vmul.f32 %v351, 1.442695
  %v363 = vpow.pop %v362
  %v364 = vmul.f32 %v352, 1.442695
  %v365 = vpow.pop %v364
  %v366 = vmul.f32 %v353, 1.442695
  %v367 = vpow.pop %v366
  %v368 = vmul.f32 %v354, 1.442695
  %v369 = vpow.pop %v368
  %v370 = vmul.f32 %v355, 1.442695
  %v371 = vpow.pop %v370
  %v372 = vsel %vm235, %v357, 0.0
  %v373 = vsel %vm235, %v359, 0.0
  %v374 = vsel %vm235, %v361, 0.0
  %v375 = vsel %vm235, %v363, 0.0
  %v376 = vsel %vm235, %v365, 0.0
  %v377 = vsel %vm235, %v367, 0.0
  %v378 = vsel %vm235, %v369, 0.0
  %v379 = vsel %vm235, %v371, 0.0
  %v380 = vld [vmem:[#allocation3] sm:$0xff]
  %v381 = vld [vmem:[#allocation3 + $0x8] sm:$0xff]
  %v382 = vld [vmem:[#allocation3 + $0x10] sm:$0xff]
  %v383 = vld [vmem:[#allocation3 + $0x18] sm:$0xff]
  %v384 = vld [vmem:[#allocation3 + $0x20] sm:$0xff]
  %v385 = vld [vmem:[#allocation3 + $0x28] sm:$0xff]
  %v386 = vld [vmem:[#allocation3 + $0x30] sm:$0xff]
  %v387 = vld [vmem:[#allocation3 + $0x38] sm:$0xff]
  %v388 = vmul.f32 %v293, %v380
  %v389 = vmul.f32 %v295, %v381
  %v390 = vmul.f32 %v297, %v382
  %v391 = vmul.f32 %v299, %v383
  %v392 = vmul.f32 %v301, %v384
  %v393 = vmul.f32 %v303, %v385
  %v394 = vmul.f32 %v305, %v386
  %v395 = vmul.f32 %v307, %v387
  %v396 = vsel %vm61, %v372, 0.0
  %397 = vadd.xlane.f32.xlu0 %v396
  %v398 = vpop.xlane.xlu0 %397
  %v399 = vsel %vm61, %v373, 0.0
  %400 = vadd.xlane.f32.xlu0 %v399
  %v401 = vpop.xlane.xlu0 %400
  %v402 = vsel %vm61, %v374, 0.0
  %403 = vadd.xlane.f32.xlu0 %v402
  %v404 = vpop.xlane.xlu0 %403
  %v405 = vsel %vm61, %v375, 0.0
  %406 = vadd.xlane.f32.xlu0 %v405
  %v407 = vpop.xlane.xlu0 %406
  %v408 = vsel %vm61, %v376, 0.0
  %409 = vadd.xlane.f32.xlu0 %v408
  %v410 = vpop.xlane.xlu0 %409
  %v411 = vsel %vm61, %v377, 0.0
  %412 = vadd.xlane.f32.xlu0 %v411
  %v413 = vpop.xlane.xlu0 %412
  %v414 = vsel %vm61, %v378, 0.0
  %415 = vadd.xlane.f32.xlu0 %v414
  %v416 = vpop.xlane.xlu0 %415
  %v417 = vsel %vm61, %v379, 0.0
  %418 = vadd.xlane.f32.xlu0 %v417
  %v419 = vpop.xlane.xlu0 %418
  %v420 = vadd.f32 %v388, %v398
  %v421 = vadd.f32 %v389, %v401
  %v422 = vadd.f32 %v390, %v404
  %v423 = vadd.f32 %v391, %v407
  %v424 = vadd.f32 %v392, %v410
  %v425 = vadd.f32 %v393, %v413
  %v426 = vadd.f32 %v394, %v416
  %v427 = vadd.f32 %v395, %v419
  %vm428 = vcmask 7168
  %429 = vst.msk [vmem:[#allocation3] sm:$0xff] %vm428, %v420
  %430 = vst.msk [vmem:[#allocation3 + $0x8] sm:$0xff] %vm428, %v421
  %431 = vst.msk [vmem:[#allocation3 + $0x10] sm:$0xff] %vm428, %v422
  %432 = vst.msk [vmem:[#allocation3 + $0x18] sm:$0xff] %vm428, %v423
  %433 = vst.msk [vmem:[#allocation3 + $0x20] sm:$0xff] %vm428, %v424
  %434 = vst.msk [vmem:[#allocation3 + $0x28] sm:$0xff] %vm428, %v425
  %435 = vst.msk [vmem:[#allocation3 + $0x30] sm:$0xff] %vm428, %v426
  %436 = vst.msk [vmem:[#allocation3 + $0x38] sm:$0xff] %vm428, %v427
  %v437 = vld [vmem:[#allocation4] sm:$0xff]
  %v438 = vld [vmem:[#allocation4 + $0x8] sm:$0xff]
  %v439 = vld [vmem:[#allocation4 + $0x10] sm:$0xff]
  %v440 = vld [vmem:[#allocation4 + $0x18] sm:$0xff]
  %v441 = vld [vmem:[#allocation4 + $0x20] sm:$0xff]
  %v442 = vld [vmem:[#allocation4 + $0x28] sm:$0xff]
  %v443 = vld [vmem:[#allocation4 + $0x30] sm:$0xff]
  %v444 = vld [vmem:[#allocation4 + $0x38] sm:$0xff]
  %446 = vset.pattern.permute.xlu0 0
  %447 = vperm.xlu0 %446, %v293
  %v448 = vpop.permute.xlu0 %447
  %451 = vset.pattern.permute.xlu0 0
  %452 = vperm.xlu0 %451, %v295
  %v453 = vpop.permute.xlu0 %452
  %456 = vset.pattern.permute.xlu0 0
  %457 = vperm.xlu0 %456, %v297
  %v458 = vpop.permute.xlu0 %457
  %461 = vset.pattern.permute.xlu0 0
  %462 = vperm.xlu0 %461, %v299
  %v463 = vpop.permute.xlu0 %462
  %466 = vset.pattern.permute.xlu0 0
  %467 = vperm.xlu0 %466, %v301
  %v468 = vpop.permute.xlu0 %467
  %471 = vset.pattern.permute.xlu0 0
  %472 = vperm.xlu0 %471, %v303
  %v473 = vpop.permute.xlu0 %472
  %476 = vset.pattern.permute.xlu0 0
  %477 = vperm.xlu0 %476, %v305
  %v478 = vpop.permute.xlu0 %477
  %481 = vset.pattern.permute.xlu0 0
  %482 = vperm.xlu0 %481, %v307
  %v483 = vpop.permute.xlu0 %482
  %v485 = vmul.f32 %v448, %v437
  %v486 = vmul.f32 %v453, %v438
  %v487 = vmul.f32 %v458, %v439
  %v488 = vmul.f32 %v463, %v440
  %v489 = vmul.f32 %v468, %v441
  %v490 = vmul.f32 %v473, %v442
  %v491 = vmul.f32 %v478, %v443
  %v492 = vmul.f32 %v483, %v444
  %v493 = vpack.c.bf16 %v372, %v372
  %v494 = vpack.c.bf16 %v373, %v373
  %v495 = vpack.c.bf16 %v374, %v374
  %v496 = vpack.c.bf16 %v375, %v375
  %v497 = vpack.c.bf16 %v376, %v376
  %v498 = vpack.c.bf16 %v377, %v377
  %v499 = vpack.c.bf16 %v378, %v378
  %v500 = vpack.c.bf16 %v379, %v379
  %v501 = vld [vmem:[%s2] sm:$0xf]
  %v502 = vld [vmem:[%s2 + $0x4] sm:$0xf]
  %v503 = vld [vmem:[%s2 + $0x8] sm:$0xf]
  %v504 = vld [vmem:[%s2 + $0xc] sm:$0xf]
  %v505 = vld [vmem:[%s2 + $0x10] sm:$0xf]
  %v506 = vld [vmem:[%s2 + $0x14] sm:$0xf]
  %v507 = vld [vmem:[%s2 + $0x18] sm:$0xf]
  %v508 = vld [vmem:[%s2 + $0x1c] sm:$0xf]
  %v510 = vsel %vm61, %v493, 0
  %v513 = vsel %vm65, %v501, 0
  %515 = vmatpush.bf16.msra.mxu0 0
  %516 = vmatpush.bf16.msra.mxu0 0
  %517 = vmatpush.bf16.msra.mxu0 0
  %518 = vmatpush.bf16.msra.mxu0 0
  %519 = vmatpush.bf16.msra.mxu0 0
  %520 = vmatpush.bf16.msra.mxu0 0
  %521 = vmatpush.bf16.msra.mxu0 0
  %522 = vmatpush.bf16.msra.mxu0 %v513
  %523 = vmatmul.bf16.gmra.mxu0 %v510
  %v524 = vpop.f32.mrf.mxu0
  %v525 = vadd.f32 0.0, %v524
  %v526 = vpop.f32.mrf.mxu0
  %527 = vdwg.mxu0
  %v529 = vsel %vm61, %v494, 0
  %v532 = vsel %vm65, %v502, 0
  %534 = vmatpush.bf16.msra.mxu0 0
  %535 = vmatpush.bf16.msra.mxu0 0
  %536 = vmatpush.bf16.msra.mxu0 0
  %537 = vmatpush.bf16.msra.mxu0 0
  %538 = vmatpush.bf16.msra.mxu0 0
  %539 = vmatpush.bf16.msra.mxu0 0
  %540 = vmatpush.bf16.msra.mxu0 0
  %541 = vmatpush.bf16.msra.mxu0 %v532
  %542 = vmatmul.bf16.gmra.mxu0 %v529
  %v543 = vpop.f32.mrf.mxu0
  %v544 = vadd.f32 0.0, %v543
  %v545 = vpop.f32.mrf.mxu0
  %546 = vdwg.mxu0
  %v548 = vsel %vm61, %v495, 0
  %v551 = vsel %vm65, %v503, 0
  %553 = vmatpush.bf16.msra.mxu0 0
  %554 = vmatpush.bf16.msra.mxu0 0
  %555 = vmatpush.bf16.msra.mxu0 0
  %556 = vmatpush.bf16.msra.mxu0 0
  %557 = vmatpush.bf16.msra.mxu0 0
  %558 = vmatpush.bf16.msra.mxu0 0
  %559 = vmatpush.bf16.msra.mxu0 0
  %560 = vmatpush.bf16.msra.mxu0 %v551
  %561 = vmatmul.bf16.gmra.mxu0 %v548
  %v562 = vpop.f32.mrf.mxu0
  %v563 = vadd.f32 0.0, %v562
  %v564 = vpop.f32.mrf.mxu0
  %565 = vdwg.mxu0
  %v567 = vsel %vm61, %v496, 0
  %v570 = vsel %vm65, %v504, 0
  %572 = vmatpush.bf16.msra.mxu0 0
  %573 = vmatpush.bf16.msra.mxu0 0
  %574 = vmatpush.bf16.msra.mxu0 0
  %575 = vmatpush.bf16.msra.mxu0 0
  %576 = vmatpush.bf16.msra.mxu0 0
  %577 = vmatpush.bf16.msra.mxu0 0
  %578 = vmatpush.bf16.msra.mxu0 0
  %579 = vmatpush.bf16.msra.mxu0 %v570
  %580 = vmatmul.bf16.gmra.mxu0 %v567
  %v581 = vpop.f32.mrf.mxu0
  %v582 = vadd.f32 0.0, %v581
  %v583 = vpop.f32.mrf.mxu0
  %584 = vdwg.mxu0
  %v586 = vsel %vm61, %v497, 0
  %v589 = vsel %vm65, %v505, 0
  %591 = vmatpush.bf16.msra.mxu0 0
  %592 = vmatpush.bf16.msra.mxu0 0
  %593 = vmatpush.bf16.msra.mxu0 0
  %594 = vmatpush.bf16.msra.mxu0 0
  %595 = vmatpush.bf16.msra.mxu0 0
  %596 = vmatpush.bf16.msra.mxu0 0
  %597 = vmatpush.bf16.msra.mxu0 0
  %598 = vmatpush.bf16.msra.mxu0 %v589
  %599 = vmatmul.bf16.gmra.mxu0 %v586
  %v600 = vpop.f32.mrf.mxu0
  %v601 = vadd.f32 0.0, %v600
  %v602 = vpop.f32.mrf.mxu0
  %603 = vdwg.mxu0
  %v605 = vsel %vm61, %v498, 0
  %v608 = vsel %vm65, %v506, 0
  %610 = vmatpush.bf16.msra.mxu0 0
  %611 = vmatpush.bf16.msra.mxu0 0
  %612 = vmatpush.bf16.msra.mxu0 0
  %613 = vmatpush.bf16.msra.mxu0 0
  %614 = vmatpush.bf16.msra.mxu0 0
  %615 = vmatpush.bf16.msra.mxu0 0
  %616 = vmatpush.bf16.msra.mxu0 0
  %617 = vmatpush.bf16.msra.mxu0 %v608
  %618 = vmatmul.bf16.gmra.mxu0 %v605
  %v619 = vpop.f32.mrf.mxu0
  %v620 = vadd.f32 0.0, %v619
  %v621 = vpop.f32.mrf.mxu0
  %622 = vdwg.mxu0
  %v624 = vsel %vm61, %v499, 0
  %v627 = vsel %vm65, %v507, 0
  %629 = vmatpush.bf16.msra.mxu0 0
  %630 = vmatpush.bf16.msra.mxu0 0
  %631 = vmatpush.bf16.msra.mxu0 0
  %632 = vmatpush.bf16.msra.mxu0 0
  %633 = vmatpush.bf16.msra.mxu0 0
  %634 = vmatpush.bf16.msra.mxu0 0
  %635 = vmatpush.bf16.msra.mxu0 0
  %636 = vmatpush.bf16.msra.mxu0 %v627
  %637 = vmatmul.bf16.gmra.mxu0 %v624
  %v638 = vpop.f32.mrf.mxu0
  %v639 = vadd.f32 0.0, %v638
  %v640 = vpop.f32.mrf.mxu0
  %641 = vdwg.mxu0
  %v643 = vsel %vm61, %v500, 0
  %v646 = vsel %vm65, %v508, 0
  %648 = vmatpush.bf16.msra.mxu0 0
  %649 = vmatpush.bf16.msra.mxu0 0
  %650 = vmatpush.bf16.msra.mxu0 0
  %651 = vmatpush.bf16.msra.mxu0 0
  %652 = vmatpush.bf16.msra.mxu0 0
  %653 = vmatpush.bf16.msra.mxu0 0
  %654 = vmatpush.bf16.msra.mxu0 0
  %655 = vmatpush.bf16.msra.mxu0 %v646
  %656 = vmatmul.bf16.gmra.mxu0 %v643
  %v657 = vpop.f32.mrf.mxu0
  %v658 = vadd.f32 0.0, %v657
  %v659 = vpop.f32.mrf.mxu0
  %660 = vdwg.mxu0
  %v661 = vadd.f32 %v485, %v525
  %v662 = vadd.f32 %v486, %v544
  %v663 = vadd.f32 %v487, %v563
  %v664 = vadd.f32 %v488, %v582
  %v665 = vadd.f32 %v489, %v601
  %v666 = vadd.f32 %v490, %v620
  %v667 = vadd.f32 %v491, %v639
  %v668 = vadd.f32 %v492, %v658
  %669 = vst.msk [vmem:[#allocation4] sm:$0xff] %vm61, %v661
  %670 = vst.msk [vmem:[#allocation4 + $0x8] sm:$0xff] %vm61, %v662
  %671 = vst.msk [vmem:[#allocation4 + $0x10] sm:$0xff] %vm61, %v663
  %672 = vst.msk [vmem:[#allocation4 + $0x18] sm:$0xff] %vm61, %v664
  %673 = vst.msk [vmem:[#allocation4 + $0x20] sm:$0xff] %vm61, %v665
  %674 = vst.msk [vmem:[#allocation4 + $0x28] sm:$0xff] %vm61, %v666
  %675 = vst.msk [vmem:[#allocation4 + $0x30] sm:$0xff] %vm61, %v667
  %676 = vst.msk [vmem:[#allocation4 + $0x38] sm:$0xff] %vm61, %v668
  %677 = vst.msk [vmem:[#allocation2] sm:$0xff] %vm428, %v276
  %678 = vst.msk [vmem:[#allocation2 + $0x8] sm:$0xff] %vm428, %v277
  %679 = vst.msk [vmem:[#allocation2 + $0x10] sm:$0xff] %vm428, %v278
  %680 = vst.msk [vmem:[#allocation2 + $0x18] sm:$0xff] %vm428, %v279
  %681 = vst.msk [vmem:[#allocation2 + $0x20] sm:$0xff] %vm428, %v280
  %682 = vst.msk [vmem:[#allocation2 + $0x28] sm:$0xff] %vm428, %v281
  %683 = vst.msk [vmem:[#allocation2 + $0x30] sm:$0xff] %vm428, %v282
  %684 = vst.msk [vmem:[#allocation2 + $0x38] sm:$0xff] %vm428, %v283
  // Predicated region
  $region18: #{transformer_forward.55} parent=0 // pred_check
    %p685 = pneg %p15
  $region19: #{transformer_forward.55} parent=0 // pred_check_branch
    %687 = sbr.rel (%p685) target = $region21
  $region20: #{transformer_forward.55} parent=0 // pred_region
    %v688 = vld [vmem:[#allocation3] sm:$0xff]
    %v689 = vld [vmem:[#allocation3 + $0x8] sm:$0xff]
    %v690 = vld [vmem:[#allocation3 + $0x10] sm:$0xff]
    %v691 = vld [vmem:[#allocation3 + $0x18] sm:$0xff]
    %v692 = vld [vmem:[#allocation3 + $0x20] sm:$0xff]
    %v693 = vld [vmem:[#allocation3 + $0x28] sm:$0xff]
    %v694 = vld [vmem:[#allocation3 + $0x30] sm:$0xff]
    %v695 = vld [vmem:[#allocation3 + $0x38] sm:$0xff]
    %v696 = vrcp.pop %v688
    %v697 = vrcp.pop %v689
    %v698 = vrcp.pop %v690
    %v699 = vrcp.pop %v691
    %v700 = vrcp.pop %v692
    %v701 = vrcp.pop %v693
    %v702 = vrcp.pop %v694
    %v703 = vrcp.pop %v695
    %v704 = vld [vmem:[#allocation4] sm:$0xff]
    %v705 = vld [vmem:[#allocation4 + $0x8] sm:$0xff]
    %v706 = vld [vmem:[#allocation4 + $0x10] sm:$0xff]
    %v707 = vld [vmem:[#allocation4 + $0x18] sm:$0xff]
    %v708 = vld [vmem:[#allocation4 + $0x20] sm:$0xff]
    %v709 = vld [vmem:[#allocation4 + $0x28] sm:$0xff]
    %v710 = vld [vmem:[#allocation4 + $0x30] sm:$0xff]
    %v711 = vld [vmem:[#allocation4 + $0x38] sm:$0xff]
    %713 = vset.pattern.permute.xlu0 0
    %714 = vperm.xlu0 %713, %v696
    %v715 = vpop.permute.xlu0 %714
    %718 = vset.pattern.permute.xlu0 0
    %719 = vperm.xlu0 %718, %v697
    %v720 = vpop.permute.xlu0 %719
    %723 = vset.pattern.permute.xlu0 0
    %724 = vperm.xlu0 %723, %v698
    %v725 = vpop.permute.xlu0 %724
    %728 = vset.pattern.permute.xlu0 0
    %729 = vperm.xlu0 %728, %v699
    %v730 = vpop.permute.xlu0 %729
    %733 = vset.pattern.permute.xlu0 0
    %734 = vperm.xlu0 %733, %v700
    %v735 = vpop.permute.xlu0 %734
    %738 = vset.pattern.permute.xlu0 0
    %739 = vperm.xlu0 %738, %v701
    %v740 = vpop.permute.xlu0 %739
    %743 = vset.pattern.permute.xlu0 0
    %744 = vperm.xlu0 %743, %v702
    %v745 = vpop.permute.xlu0 %744
    %748 = vset.pattern.permute.xlu0 0
    %749 = vperm.xlu0 %748, %v703
    %v750 = vpop.permute.xlu0 %749
    %v752 = vmul.f32 %v704, %v715
    %v753 = vmul.f32 %v705, %v720
    %v754 = vmul.f32 %v706, %v725
    %v755 = vmul.f32 %v707, %v730
    %v756 = vmul.f32 %v708, %v735
    %v757 = vmul.f32 %v709, %v740
    %v758 = vmul.f32 %v710, %v745
    %v759 = vmul.f32 %v711, %v750
    %v760 = vpack.c.bf16 %v752, %v752
    %v761 = vpack.c.bf16 %v753, %v753
    %v762 = vpack.c.bf16 %v754, %v754
    %v763 = vpack.c.bf16 %v755, %v755
    %v764 = vpack.c.bf16 %v756, %v756
    %v765 = vpack.c.bf16 %v757, %v757
    %v766 = vpack.c.bf16 %v758, %v758
    %v767 = vpack.c.bf16 %v759, %v759
    %vm768 = vcmask 60416
    %769 = vst.msk [vmem:[%s3] sm:$0xf] %vm768, %v760
    %770 = vst.msk [vmem:[%s3 + $0x4] sm:$0xf] %vm768, %v761
    %771 = vst.msk [vmem:[%s3 + $0x8] sm:$0xf] %vm768, %v762
    %772 = vst.msk [vmem:[%s3 + $0xc] sm:$0xf] %vm768, %v763
    %773 = vst.msk [vmem:[%s3 + $0x10] sm:$0xf] %vm768, %v764
    %774 = vst.msk [vmem:[%s3 + $0x14] sm:$0xf] %vm768, %v765
    %775 = vst.msk [vmem:[%s3 + $0x18] sm:$0xf] %vm768, %v766
    %776 = vst.msk [vmem:[%s3 + $0x1c] sm:$0xf] %vm768, %v767
  $region21: #{transformer_forward.55} parent=0 // pred_fallthru
    _
  // Predicated region
  $region22: #{transformer_forward.55} parent=0 // pred_check
    _
  $region23: #{transformer_forward.55} parent=0 // pred_check_branch
    %778 = sbr.rel (0) target = $region25
  $region24: #{transformer_forward.55} parent=0 // pred_region
    _
  $region25: #{transformer_forward.55} parent=0 // pred_fallthru
    _
  // Predicated region
  $region26: #{transformer_forward.55} parent=0 // pred_check
    _
  $region27: #{transformer_forward.55} parent=0 // pred_check_branch
    %780 = sbr.rel (0) target = $region29
  $region28: #{transformer_forward.55} parent=0 // pred_region
    _
  $region29: #{transformer_forward.55} parent=0 // pred_fallthru
    _

// kernel: transformer_forward.44
$region0: #{transformer_forward.44}
  #allocation0 [shape = 'u32[]', space=smem, size = 0x4, offset = 0x4, fixed_abs, tag = 'smem constant byte address 0x4 - core index']
  #allocation1 [shape = 'u32[72,128]{1,0:T(1,128)}', space=vmem, size = 0x9000, scoped, tag = 'internal scratch']
  #allocation2 [shape = 'f32[16,128]{1,0:T(8,128)}', space=vmem, size = 0x2000, scoped, tag = 'scratch operand']
  %s0 = inlined_call_operand.vmem [shape: bf16[16,128], index: 0, kind: input, shape index: {}]
  %s1 = inlined_call_operand.vmem [shape: bf16[128,128], index: 1, kind: input, shape index: {}]
  %s2 = inlined_call_operand.vmem [shape: f32[1,128], index: 2, kind: input, shape index: {}]
  %s3 = inlined_call_operand.vmem [shape: bf16[16,128], index: 3, kind: output, shape index: {}]
  %s4 = sld [smem:[#allocation0]]
  $region30: #{transformer_forward.44} parent=0
    _
  %s6 = ssub.s32 1, %s4
  %s7 = scalar_select 0, %s6, %s4
  // Predicated region
  $region2: #{transformer_forward.44} parent=0 // pred_check
    _
  $region3: #{transformer_forward.44} parent=0 // pred_check_branch
    %9 = sbr.rel (0) target = $region5
  $region4: #{transformer_forward.44} parent=0 // pred_region
    _
  $region5: #{transformer_forward.44} parent=0 // pred_fallthru
    _
  // Predicated region
  $region6: #{transformer_forward.44} parent=0 // pred_check
    _
  $region7: #{transformer_forward.44} parent=0 // pred_check_branch
    %11 = sbr.rel (0) target = $region9
  $region8: #{transformer_forward.44} parent=0 // pred_region
    _
  $region9: #{transformer_forward.44} parent=0 // pred_fallthru
    _
  // Predicated region
  $region10: #{transformer_forward.44} parent=0 // pred_check
    _
  $region11: #{transformer_forward.44} parent=0 // pred_check_branch
    %13 = sbr.rel (0) target = $region13
  $region12: #{transformer_forward.44} parent=0 // pred_region
    _
  $region13: #{transformer_forward.44} parent=0 // pred_fallthru
    _
  %p14 = scmp.eq.s32.totalorder 0, 0
  // Predicated region
  $region14: #{transformer_forward.44} parent=0 // pred_check
    %p15 = pneg %p14
  $region15: #{transformer_forward.44} parent=0 // pred_check_branch
    %17 = sbr.rel (%p15) target = $region17
  $region16: #{transformer_forward.44} parent=0 // pred_region
    %18 = vst [vmem:[#allocation2] sm:$0xff] 0.0
    %19 = vst [vmem:[#allocation2 + $0x8] sm:$0xff] 0.0
  $region17: #{transformer_forward.44} parent=0 // pred_fallthru
    _
  %v20 = vld [vmem:[#allocation2] sm:$0xff]
  %v21 = vld [vmem:[#allocation2 + $0x8] sm:$0xff]
  %v22 = vld [vmem:[%s0] sm:$0xf]
  %v23 = vld [vmem:[%s0 + $0x4] sm:$0xf]
  %v24 = vld [vmem:[%s1] sm:$0xf]
  %v25 = vld [vmem:[%s1 + $0x4] sm:$0xf]
  %v26 = vld [vmem:[%s1 + $0x8] sm:$0xf]
  %v27 = vld [vmem:[%s1 + $0xc] sm:$0xf]
  %v28 = vld [vmem:[%s1 + $0x10] sm:$0xf]
  %v29 = vld [vmem:[%s1 + $0x14] sm:$0xf]
  %v30 = vld [vmem:[%s1 + $0x18] sm:$0xf]
  %v31 = vld [vmem:[%s1 + $0x1c] sm:$0xf]
  %v32 = vld [vmem:[%s1 + $0x20] sm:$0xf]
  %v33 = vld [vmem:[%s1 + $0x24] sm:$0xf]
  %v34 = vld [vmem:[%s1 + $0x28] sm:$0xf]
  %v35 = vld [vmem:[%s1 + $0x2c] sm:$0xf]
  %v36 = vld [vmem:[%s1 + $0x30] sm:$0xf]
  %v37 = vld [vmem:[%s1 + $0x34] sm:$0xf]
  %v38 = vld [vmem:[%s1 + $0x38] sm:$0xf]
  %v39 = vld [vmem:[%s1 + $0x3c] sm:$0xf]
  %v42 = vunpack.c.l.b16 %v22
  %v43 = vunpack.c.l.b16 %v23
  %v44 = vpack.c.b16 %v43, %v42
  %v62 = vunpack.c.l.b16 %v24
  %v63 = vunpack.c.l.b16 %v25
  %v64 = vunpack.c.l.b16 %v26
  %v65 = vunpack.c.l.b16 %v27
  %v66 = vunpack.c.l.b16 %v28
  %v67 = vunpack.c.l.b16 %v29
  %v68 = vunpack.c.l.b16 %v30
  %v69 = vunpack.c.l.b16 %v31
  %v70 = vunpack.c.l.b16 %v32
  %v71 = vunpack.c.l.b16 %v33
  %v72 = vunpack.c.l.b16 %v34
  %v73 = vunpack.c.l.b16 %v35
  %v74 = vunpack.c.l.b16 %v36
  %v75 = vunpack.c.l.b16 %v37
  %v76 = vunpack.c.l.b16 %v38
  %v77 = vunpack.c.l.b16 %v39
  %v78 = vpack.c.b16 %v63, %v62
  %v79 = vpack.c.b16 %v65, %v64
  %v80 = vpack.c.b16 %v67, %v66
  %v81 = vpack.c.b16 %v69, %v68
  %v82 = vpack.c.b16 %v71, %v70
  %v83 = vpack.c.b16 %v73, %v72
  %v84 = vpack.c.b16 %v75, %v74
  %v85 = vpack.c.b16 %v77, %v76
  %94 = vmatpush.bf16.msra.mxu0 %v85
  %95 = vmatpush.bf16.msra.mxu0 %v84
  %96 = vmatpush.bf16.msra.mxu0 %v83
  %97 = vmatpush.bf16.msra.mxu0 %v82
  %98 = vmatpush.bf16.msra.mxu0 %v81
  %99 = vmatpush.bf16.msra.mxu0 %v80
  %100 = vmatpush.bf16.msra.mxu0 %v79
  %101 = vmatpush.bf16.msra.mxu0 %v78
  %102 = vmatmul.bf16.gmra.mxu0 %v44
  %v103 = vpop.f32.mrf.mxu0
  %v104 = vadd.f32 0.0, %v103
  %v105 = vpop.f32.mrf.mxu0
  %v106 = vadd.f32 0.0, %v105
  %107 = vdwg.mxu0
  %v108 = vadd.f32 %v20, %v104
  %v109 = vadd.f32 %v21, %v106
  %110 = vst [vmem:[#allocation2] sm:$0xff] %v108
  %111 = vst [vmem:[#allocation2 + $0x8] sm:$0xff] %v109
  // Predicated region
  $region18: #{transformer_forward.44} parent=0 // pred_check
    %p112 = pneg %p14
  $region19: #{transformer_forward.44} parent=0 // pred_check_branch
    %114 = sbr.rel (%p112) target = $region21
  $region20: #{transformer_forward.44} parent=0 // pred_region
    %v115 = vld [vmem:[#allocation2] sm:$0xff]
    %v116 = vld [vmem:[#allocation2 + $0x8] sm:$0xff]
    %v117 = vld [vmem:[%s2] sm:$0x1]
    %v119 = vperm.slane %v117, 0
    %v121 = vadd.f32 %v115, %v119
    %v122 = vadd.f32 %v116, %v119
    %v123 = vmax.f32 %v121, 0.0
    %v124 = vmax.f32 %v122, 0.0
    %v125 = vpack.c.bf16 %v123, %v123
    %v126 = vpack.c.bf16 %v124, %v124
    %127 = vst [vmem:[%s3] sm:$0xf] %v125
    %128 = vst [vmem:[%s3 + $0x4] sm:$0xf] %v126
  $region21: #{transformer_forward.44} parent=0 // pred_fallthru
    _
  // Predicated region
  $region22: #{transformer_forward.44} parent=0 // pred_check
    _
  $region23: #{transformer_forward.44} parent=0 // pred_check_branch
    %130 = sbr.rel (0) target = $region25
  $region24: #{transformer_forward.44} parent=0 // pred_region
    _
  $region25: #{transformer_forward.44} parent=0 // pred_fallthru
    _
  // Predicated region
  $region26: #{transformer_forward.44} parent=0 // pred_check
    _
  $region27: #{transformer_forward.44} parent=0 // pred_check_branch
    %132 = sbr.rel (0) target = $region29
  $region28: #{transformer_forward.44} parent=0 // pred_region
    _
  $region29: #{transformer_forward.44} parent=0 // pred_fallthru
    _

// kernel: transformer_forward.59
$region0: #{transformer_forward.59}
  #allocation0 [shape = 'u32[]', space=smem, size = 0x4, offset = 0x4, fixed_abs, tag = 'smem constant byte address 0x4 - core index']
  #allocation1 [shape = 'u32[72,128]{1,0:T(1,128)}', space=vmem, size = 0x9000, scoped, tag = 'internal scratch']
  #allocation2 [shape = 'f32[16,256]{1,0:T(8,128)}', space=vmem, size = 0x4000, scoped, tag = 'scratch operand']
  %s0 = inlined_call_operand.vmem [shape: bf16[16,128], index: 0, kind: input, shape index: {}]
  %s1 = inlined_call_operand.vmem [shape: bf16[128,256], index: 1, kind: input, shape index: {}]
  %s2 = inlined_call_operand.vmem [shape: f32[1,256], index: 2, kind: input, shape index: {}]
  %s3 = inlined_call_operand.vmem [shape: bf16[16,256], index: 3, kind: output, shape index: {}]
  %s4 = sld [smem:[#allocation0]]
  $region30: #{transformer_forward.59} parent=0
    _
  %s6 = ssub.s32 1, %s4
  %s7 = scalar_select 0, %s6, %s4
  // Predicated region
  $region2: #{transformer_forward.59} parent=0 // pred_check
    _
  $region3: #{transformer_forward.59} parent=0 // pred_check_branch
    %9 = sbr.rel (0) target = $region5
  $region4: #{transformer_forward.59} parent=0 // pred_region
    _
  $region5: #{transformer_forward.59} parent=0 // pred_fallthru
    _
  // Predicated region
  $region6: #{transformer_forward.59} parent=0 // pred_check
    _
  $region7: #{transformer_forward.59} parent=0 // pred_check_branch
    %11 = sbr.rel (0) target = $region9
  $region8: #{transformer_forward.59} parent=0 // pred_region
    _
  $region9: #{transformer_forward.59} parent=0 // pred_fallthru
    _
  // Predicated region
  $region10: #{transformer_forward.59} parent=0 // pred_check
    _
  $region11: #{transformer_forward.59} parent=0 // pred_check_branch
    %13 = sbr.rel (0) target = $region13
  $region12: #{transformer_forward.59} parent=0 // pred_region
    _
  $region13: #{transformer_forward.59} parent=0 // pred_fallthru
    _
  %p14 = scmp.eq.s32.totalorder 0, 0
  // Predicated region
  $region14: #{transformer_forward.59} parent=0 // pred_check
    %p15 = pneg %p14
  $region15: #{transformer_forward.59} parent=0 // pred_check_branch
    %17 = sbr.rel (%p15) target = $region17
  $region16: #{transformer_forward.59} parent=0 // pred_region
    %18 = vst [vmem:[#allocation2] sm:$0xff] 0.0
    %19 = vst [vmem:[#allocation2 + $0x8] sm:$0xff] 0.0
    %20 = vst [vmem:[#allocation2 + $0x10] sm:$0xff] 0.0
    %21 = vst [vmem:[#allocation2 + $0x18] sm:$0xff] 0.0
  $region17: #{transformer_forward.59} parent=0 // pred_fallthru
    _
  %v22 = vld [vmem:[#allocation2] sm:$0xff]
  %v23 = vld [vmem:[#allocation2 + $0x8] sm:$0xff]
  %v24 = vld [vmem:[#allocation2 + $0x10] sm:$0xff]
  %v25 = vld [vmem:[#allocation2 + $0x18] sm:$0xff]
  %v26 = vld [vmem:[%s0] sm:$0xf]
  %v27 = vld [vmem:[%s0 + $0x4] sm:$0xf]
  %v28 = vld [vmem:[%s1] sm:$0xff]
  %v29 = vld [vmem:[%s1 + $0x8] sm:$0xff]
  %v30 = vld [vmem:[%s1 + $0x10] sm:$0xff]
  %v31 = vld [vmem:[%s1 + $0x18] sm:$0xff]
  %v32 = vld [vmem:[%s1 + $0x20] sm:$0xff]
  %v33 = vld [vmem:[%s1 + $0x28] sm:$0xff]
  %v34 = vld [vmem:[%s1 + $0x30] sm:$0xff]
  %v35 = vld [vmem:[%s1 + $0x38] sm:$0xff]
  %v36 = vld [vmem:[%s1 + $0x40] sm:$0xff]
  %v37 = vld [vmem:[%s1 + $0x48] sm:$0xff]
  %v38 = vld [vmem:[%s1 + $0x50] sm:$0xff]
  %v39 = vld [vmem:[%s1 + $0x58] sm:$0xff]
  %v40 = vld [vmem:[%s1 + $0x60] sm:$0xff]
  %v41 = vld [vmem:[%s1 + $0x68] sm:$0xff]
  %v42 = vld [vmem:[%s1 + $0x70] sm:$0xff]
  %v43 = vld [vmem:[%s1 + $0x78] sm:$0xff]
  %v46 = vunpack.c.l.b16 %v26
  %v47 = vunpack.c.l.b16 %v27
  %v48 = vpack.c.b16 %v47, %v46
  %v66 = vunpack.c.l.b16 %v28
  %v67 = vunpack.c.h.b16 %v28
  %v68 = vunpack.c.l.b16 %v29
  %v69 = vunpack.c.h.b16 %v29
  %v70 = vunpack.c.l.b16 %v30
  %v71 = vunpack.c.h.b16 %v30
  %v72 = vunpack.c.l.b16 %v31
  %v73 = vunpack.c.h.b16 %v31
  %v74 = vunpack.c.l.b16 %v32
  %v75 = vunpack.c.h.b16 %v32
  %v76 = vunpack.c.l.b16 %v33
  %v77 = vunpack.c.h.b16 %v33
  %v78 = vunpack.c.l.b16 %v34
  %v79 = vunpack.c.h.b16 %v34
  %v80 = vunpack.c.l.b16 %v35
  %v81 = vunpack.c.h.b16 %v35
  %v82 = vunpack.c.l.b16 %v36
  %v83 = vunpack.c.h.b16 %v36
  %v84 = vunpack.c.l.b16 %v37
  %v85 = vunpack.c.h.b16 %v37
  %v86 = vunpack.c.l.b16 %v38
  %v87 = vunpack.c.h.b16 %v38
  %v88 = vunpack.c.l.b16 %v39
  %v89 = vunpack.c.h.b16 %v39
  %v90 = vunpack.c.l.b16 %v40
  %v91 = vunpack.c.h.b16 %v40
  %v92 = vunpack.c.l.b16 %v41
  %v93 = vunpack.c.h.b16 %v41
  %v94 = vunpack.c.l.b16 %v42
  %v95 = vunpack.c.h.b16 %v42
  %v96 = vunpack.c.l.b16 %v43
  %v97 = vunpack.c.h.b16 %v43
  %v98 = vpack.c.b16 %v68, %v66
  %v99 = vpack.c.b16 %v69, %v67
  %v100 = vpack.c.b16 %v72, %v70
  %v101 = vpack.c.b16 %v73, %v71
  %v102 = vpack.c.b16 %v76, %v74
  %v103 = vpack.c.b16 %v77, %v75
  %v104 = vpack.c.b16 %v80, %v78
  %v105 = vpack.c.b16 %v81, %v79
  %v106 = vpack.c.b16 %v84, %v82
  %v107 = vpack.c.b16 %v85, %v83
  %v108 = vpack.c.b16 %v88, %v86
  %v109 = vpack.c.b16 %v89, %v87
  %v110 = vpack.c.b16 %v92, %v90
  %v111 = vpack.c.b16 %v93, %v91
  %v112 = vpack.c.b16 %v96, %v94
  %v113 = vpack.c.b16 %v97, %v95
  %130 = vmatpush.bf16.msra.mxu0 %v112
  %131 = vmatpush.bf16.msra.mxu0 %v110
  %132 = vmatpush.bf16.msra.mxu0 %v108
  %133 = vmatpush.bf16.msra.mxu0 %v106
  %134 = vmatpush.bf16.msra.mxu0 %v104
  %135 = vmatpush.bf16.msra.mxu0 %v102
  %136 = vmatpush.bf16.msra.mxu0 %v100
  %137 = vmatpush.bf16.msra.mxu0 %v98
  %138 = vmatmul.bf16.gmra.mxu0 %v48
  %v139 = vpop.f32.mrf.mxu0
  %v140 = vadd.f32 0.0, %v139
  %v141 = vpop.f32.mrf.mxu0
  %v142 = vadd.f32 0.0, %v141
  %143 = vdwg.mxu0
  %144 = vmatpush.bf16.msra.mxu0 %v113
  %145 = vmatpush.bf16.msra.mxu0 %v111
  %146 = vmatpush.bf16.msra.mxu0 %v109
  %147 = vmatpush.bf16.msra.mxu0 %v107
  %148 = vmatpush.bf16.msra.mxu0 %v105
  %149 = vmatpush.bf16.msra.mxu0 %v103
  %150 = vmatpush.bf16.msra.mxu0 %v101
  %151 = vmatpush.bf16.msra.mxu0 %v99
  %152 = vmatmul.bf16.gmra.mxu0 %v48
  %v153 = vpop.f32.mrf.mxu0
  %v154 = vadd.f32 0.0, %v153
  %v155 = vpop.f32.mrf.mxu0
  %v156 = vadd.f32 0.0, %v155
  %157 = vdwg.mxu0
  %v158 = vadd.f32 %v22, %v140
  %v159 = vadd.f32 %v23, %v154
  %v160 = vadd.f32 %v24, %v142
  %v161 = vadd.f32 %v25, %v156
  %162 = vst [vmem:[#allocation2] sm:$0xff] %v158
  %163 = vst [vmem:[#allocation2 + $0x8] sm:$0xff] %v159
  %164 = vst [vmem:[#allocation2 + $0x10] sm:$0xff] %v160
  %165 = vst [vmem:[#allocation2 + $0x18] sm:$0xff] %v161
  // Predicated region
  $region18: #{transformer_forward.59} parent=0 // pred_check
    %p166 = pneg %p14
  $region19: #{transformer_forward.59} parent=0 // pred_check_branch
    %168 = sbr.rel (%p166) target = $region21
  $region20: #{transformer_forward.59} parent=0 // pred_region
    %v169 = vld [vmem:[#allocation2] sm:$0xff]
    %v170 = vld [vmem:[#allocation2 + $0x8] sm:$0xff]
    %v171 = vld [vmem:[#allocation2 + $0x10] sm:$0xff]
    %v172 = vld [vmem:[#allocation2 + $0x18] sm:$0xff]
    %v173 = vld [vmem:[%s2] sm:$0x3]
    %v175 = vperm.slane %v173, 0
    %v176 = vperm.slane %v173, 1
    %v179 = vadd.f32 %v169, %v175
    %v180 = vadd.f32 %v170, %v176
    %v181 = vadd.f32 %v171, %v175
    %v182 = vadd.f32 %v172, %v176
    %v183 = vpack.c.bf16 %v180, %v179
    %v184 = vpack.c.bf16 %v182, %v181
    %185 = vst [vmem:[%s3] sm:$0xff] %v183
    %186 = vst [vmem:[%s3 + $0x8] sm:$0xff] %v184
  $region21: #{transformer_forward.59} parent=0 // pred_fallthru
    _
  // Predicated region
  $region22: #{transformer_forward.59} parent=0 // pred_check
    _
  $region23: #{transformer_forward.59} parent=0 // pred_check_branch
    %188 = sbr.rel (0) target = $region25
  $region24: #{transformer_forward.59} parent=0 // pred_region
    _
  $region25: #{transformer_forward.59} parent=0 // pred_fallthru
    _
  // Predicated region
  $region26: #{transformer_forward.59} parent=0 // pred_check
    _
  $region27: #{transformer_forward.59} parent=0 // pred_check_branch
    %190 = sbr.rel (0) target = $region29
  $region28: #{transformer_forward.59} parent=0 // pred_region
    _
  $region29: #{transformer_forward.59} parent=0 // pred_fallthru
    _

// kernel: transformer_forward.41
$region0: #{transformer_forward.41}
  #allocation0 [shape = 'u32[]', space=smem, size = 0x4, offset = 0x4, fixed_abs, tag = 'smem constant byte address 0x4 - core index']
  #allocation1 [shape = 'u32[72,128]{1,0:T(1,128)}', space=vmem, size = 0x9000, scoped, tag = 'internal scratch']
  #allocation2 [shape = 'f32[8,8,1]{2,1,0:T(8,128)}', space=vmem, size = 0x8000, scoped, tag = 'scratch operand']
  #allocation3 [shape = 'f32[8,8,1]{2,1,0:T(8,128)}', space=vmem, size = 0x8000, scoped, tag = 'scratch operand']
  #allocation4 [shape = 'f32[8,8,8]{2,1,0:T(8,128)}', space=vmem, size = 0x8000, scoped, tag = 'scratch operand']
  %s0 = inlined_call_operand.vmem [shape: bf16[8,8,8], index: 0, kind: input, shape index: {}]
  %s1 = inlined_call_operand.vmem [shape: bf16[8,8,8], index: 1, kind: input, shape index: {}]
  %s2 = inlined_call_operand.vmem [shape: bf16[8,8,8], index: 2, kind: input, shape index: {}]
  %s3 = inlined_call_operand.vmem [shape: bf16[8,8,8], index: 3, kind: output, shape index: {}]
  %s4 = sld [smem:[#allocation0]]
  $region30: #{transformer_forward.41} parent=0
    _
  %s6 = ssub.s32 1, %s4
  %s7 = scalar_select 0, %s6, %s4
  // Predicated region
  $region2: #{transformer_forward.41} parent=0 // pred_check
    _
  $region3: #{transformer_forward.41} parent=0 // pred_check_branch
    %9 = sbr.rel (0) target = $region5
  $region4: #{transformer_forward.41} parent=0 // pred_region
    _
  $region5: #{transformer_forward.41} parent=0 // pred_fallthru
    _
  // Predicated region
  $region6: #{transformer_forward.41} parent=0 // pred_check
    _
  $region7: #{transformer_forward.41} parent=0 // pred_check_branch
    %11 = sbr.rel (0) target = $region9
  $region8: #{transformer_forward.41} parent=0 // pred_region
    _
  $region9: #{transformer_forward.41} parent=0 // pred_fallthru
    _
  // Predicated region
  $region10: #{transformer_forward.41} parent=0 // pred_check
    _
  $region11: #{transformer_forward.41} parent=0 // pred_check_branch
    %13 = sbr.rel (0) target = $region13
  $region12: #{transformer_forward.41} parent=0 // pred_region
    _
  $region13: #{transformer_forward.41} parent=0 // pred_fallthru
    _
  %p15 = scmp.eq.s32.totalorder 0, 0
  // Predicated region
  $region14: #{transformer_forward.41} parent=0 // pred_check
    %p16 = pneg %p15
  $region15: #{transformer_forward.41} parent=0 // pred_check_branch
    %18 = sbr.rel (%p16) target = $region17
  $region16: #{transformer_forward.41} parent=0 // pred_region
    %vm19 = vcmask 7168
    %20 = vst.msk [vmem:[#allocation2] sm:$0xff] %vm19, -1e+30
    %21 = vst.msk [vmem:[#allocation2 + $0x8] sm:$0xff] %vm19, -1e+30
    %22 = vst.msk [vmem:[#allocation2 + $0x10] sm:$0xff] %vm19, -1e+30
    %23 = vst.msk [vmem:[#allocation2 + $0x18] sm:$0xff] %vm19, -1e+30
    %24 = vst.msk [vmem:[#allocation2 + $0x20] sm:$0xff] %vm19, -1e+30
    %25 = vst.msk [vmem:[#allocation2 + $0x28] sm:$0xff] %vm19, -1e+30
    %26 = vst.msk [vmem:[#allocation2 + $0x30] sm:$0xff] %vm19, -1e+30
    %27 = vst.msk [vmem:[#allocation2 + $0x38] sm:$0xff] %vm19, -1e+30
    %28 = vst.msk [vmem:[#allocation3] sm:$0xff] %vm19, 0.0
    %29 = vst.msk [vmem:[#allocation3 + $0x8] sm:$0xff] %vm19, 0.0
    %30 = vst.msk [vmem:[#allocation3 + $0x10] sm:$0xff] %vm19, 0.0
    %31 = vst.msk [vmem:[#allocation3 + $0x18] sm:$0xff] %vm19, 0.0
    %32 = vst.msk [vmem:[#allocation3 + $0x20] sm:$0xff] %vm19, 0.0
    %33 = vst.msk [vmem:[#allocation3 + $0x28] sm:$0xff] %vm19, 0.0
    %34 = vst.msk [vmem:[#allocation3 + $0x30] sm:$0xff] %vm19, 0.0
    %35 = vst.msk [vmem:[#allocation3 + $0x38] sm:$0xff] %vm19, 0.0
    %vm36 = vcmask 64512
    %37 = vst.msk [vmem:[#allocation4] sm:$0xff] %vm36, 0.0
    %38 = vst.msk [vmem:[#allocation4 + $0x8] sm:$0xff] %vm36, 0.0
    %39 = vst.msk [vmem:[#allocation4 + $0x10] sm:$0xff] %vm36, 0.0
    %40 = vst.msk [vmem:[#allocation4 + $0x18] sm:$0xff] %vm36, 0.0
    %41 = vst.msk [vmem:[#allocation4 + $0x20] sm:$0xff] %vm36, 0.0
    %42 = vst.msk [vmem:[#allocation4 + $0x28] sm:$0xff] %vm36, 0.0
    %43 = vst.msk [vmem:[#allocation4 + $0x30] sm:$0xff] %vm36, 0.0
    %44 = vst.msk [vmem:[#allocation4 + $0x38] sm:$0xff] %vm36, 0.0
  $region17: #{transformer_forward.41} parent=0 // pred_fallthru
    _
  %v45 = vld [vmem:[%s0] sm:$0xf]
  %v46 = vld [vmem:[%s0 + $0x4] sm:$0xf]
  %v47 = vld [vmem:[%s0 + $0x8] sm:$0xf]
  %v48 = vld [vmem:[%s0 + $0xc] sm:$0xf]
  %v49 = vld [vmem:[%s0 + $0x10] sm:$0xf]
  %v50 = vld [vmem:[%s0 + $0x14] sm:$0xf]
  %v51 = vld [vmem:[%s0 + $0x18] sm:$0xf]
  %v52 = vld [vmem:[%s0 + $0x1c] sm:$0xf]
  %v53 = vld [vmem:[%s1] sm:$0xf]
  %v54 = vld [vmem:[%s1 + $0x4] sm:$0xf]
  %v55 = vld [vmem:[%s1 + $0x8] sm:$0xf]
  %v56 = vld [vmem:[%s1 + $0xc] sm:$0xf]
  %v57 = vld [vmem:[%s1 + $0x10] sm:$0xf]
  %v58 = vld [vmem:[%s1 + $0x14] sm:$0xf]
  %v59 = vld [vmem:[%s1 + $0x18] sm:$0xf]
  %v60 = vld [vmem:[%s1 + $0x1c] sm:$0xf]
  %vm61 = vcmask 64512
  %v63 = vsel %vm61, %v45, 0
  %vm65 = vcmask 1043456
  %v67 = vsel %vm65, %v53, 0
  %69 = vmatpush.bf16.msra.mxu0 0
  %70 = vmatpush.bf16.msra.mxu0 0
  %71 = vmatpush.bf16.msra.mxu0 0
  %72 = vmatpush.bf16.msra.mxu0 0
  %73 = vmatpush.bf16.msra.mxu0 0
  %74 = vmatpush.bf16.msra.mxu0 0
  %75 = vmatpush.bf16.msra.mxu0 0
  %76 = vmatpush.bf16.msra.mxu0 %v67
  %77 = vmatmul.bf16.gmra.mxu0 %v63
  %v78 = vpop.f32.mrf.mxu0
  %v79 = vadd.f32 0.0, %v78
  %v80 = vpop.f32.mrf.mxu0
  %81 = vdwg.mxu0
  %v83 = vsel %vm61, %v46, 0
  %v86 = vsel %vm65, %v54, 0
  %88 = vmatpush.bf16.msra.mxu0 0
  %89 = vmatpush.bf16.msra.mxu0 0
  %90 = vmatpush.bf16.msra.mxu0 0
  %91 = vmatpush.bf16.msra.mxu0 0
  %92 = vmatpush.bf16.msra.mxu0 0
  %93 = vmatpush.bf16.msra.mxu0 0
  %94 = vmatpush.bf16.msra.mxu0 0
  %95 = vmatpush.bf16.msra.mxu0 %v86
  %96 = vmatmul.bf16.gmra.mxu0 %v83
  %v97 = vpop.f32.mrf.mxu0
  %v98 = vadd.f32 0.0, %v97
  %v99 = vpop.f32.mrf.mxu0
  %100 = vdwg.mxu0
  %v102 = vsel %vm61, %v47, 0
  %v105 = vsel %vm65, %v55, 0
  %107 = vmatpush.bf16.msra.mxu0 0
  %108 = vmatpush.bf16.msra.mxu0 0
  %109 = vmatpush.bf16.msra.mxu0 0
  %110 = vmatpush.bf16.msra.mxu0 0
  %111 = vmatpush.bf16.msra.mxu0 0
  %112 = vmatpush.bf16.msra.mxu0 0
  %113 = vmatpush.bf16.msra.mxu0 0
  %114 = vmatpush.bf16.msra.mxu0 %v105
  %115 = vmatmul.bf16.gmra.mxu0 %v102
  %v116 = vpop.f32.mrf.mxu0
  %v117 = vadd.f32 0.0, %v116
  %v118 = vpop.f32.mrf.mxu0
  %119 = vdwg.mxu0
  %v121 = vsel %vm61, %v48, 0
  %v124 = vsel %vm65, %v56, 0
  %126 = vmatpush.bf16.msra.mxu0 0
  %127 = vmatpush.bf16.msra.mxu0 0
  %128 = vmatpush.bf16.msra.mxu0 0
  %129 = vmatpush.bf16.msra.mxu0 0
  %130 = vmatpush.bf16.msra.mxu0 0
  %131 = vmatpush.bf16.msra.mxu0 0
  %132 = vmatpush.bf16.msra.mxu0 0
  %133 = vmatpush.bf16.msra.mxu0 %v124
  %134 = vmatmul.bf16.gmra.mxu0 %v121
  %v135 = vpop.f32.mrf.mxu0
  %v136 = vadd.f32 0.0, %v135
  %v137 = vpop.f32.mrf.mxu0
  %138 = vdwg.mxu0
  %v140 = vsel %vm61, %v49, 0
  %v143 = vsel %vm65, %v57, 0
  %145 = vmatpush.bf16.msra.mxu0 0
  %146 = vmatpush.bf16.msra.mxu0 0
  %147 = vmatpush.bf16.msra.mxu0 0
  %148 = vmatpush.bf16.msra.mxu0 0
  %149 = vmatpush.bf16.msra.mxu0 0
  %150 = vmatpush.bf16.msra.mxu0 0
  %151 = vmatpush.bf16.msra.mxu0 0
  %152 = vmatpush.bf16.msra.mxu0 %v143
  %153 = vmatmul.bf16.gmra.mxu0 %v140
  %v154 = vpop.f32.mrf.mxu0
  %v155 = vadd.f32 0.0, %v154
  %v156 = vpop.f32.mrf.mxu0
  %157 = vdwg.mxu0
  %v159 = vsel %vm61, %v50, 0
  %v162 = vsel %vm65, %v58, 0
  %164 = vmatpush.bf16.msra.mxu0 0
  %165 = vmatpush.bf16.msra.mxu0 0
  %166 = vmatpush.bf16.msra.mxu0 0
  %167 = vmatpush.bf16.msra.mxu0 0
  %168 = vmatpush.bf16.msra.mxu0 0
  %169 = vmatpush.bf16.msra.mxu0 0
  %170 = vmatpush.bf16.msra.mxu0 0
  %171 = vmatpush.bf16.msra.mxu0 %v162
  %172 = vmatmul.bf16.gmra.mxu0 %v159
  %v173 = vpop.f32.mrf.mxu0
  %v174 = vadd.f32 0.0, %v173
  %v175 = vpop.f32.mrf.mxu0
  %176 = vdwg.mxu0
  %v178 = vsel %vm61, %v51, 0
  %v181 = vsel %vm65, %v59, 0
  %183 = vmatpush.bf16.msra.mxu0 0
  %184 = vmatpush.bf16.msra.mxu0 0
  %185 = vmatpush.bf16.msra.mxu0 0
  %186 = vmatpush.bf16.msra.mxu0 0
  %187 = vmatpush.bf16.msra.mxu0 0
  %188 = vmatpush.bf16.msra.mxu0 0
  %189 = vmatpush.bf16.msra.mxu0 0
  %190 = vmatpush.bf16.msra.mxu0 %v181
  %191 = vmatmul.bf16.gmra.mxu0 %v178
  %v192 = vpop.f32.mrf.mxu0
  %v193 = vadd.f32 0.0, %v192
  %v194 = vpop.f32.mrf.mxu0
  %195 = vdwg.mxu0
  %v197 = vsel %vm61, %v52, 0
  %v200 = vsel %vm65, %v60, 0
  %202 = vmatpush.bf16.msra.mxu0 0
  %203 = vmatpush.bf16.msra.mxu0 0
  %204 = vmatpush.bf16.msra.mxu0 0
  %205 = vmatpush.bf16.msra.mxu0 0
  %206 = vmatpush.bf16.msra.mxu0 0
  %207 = vmatpush.bf16.msra.mxu0 0
  %208 = vmatpush.bf16.msra.mxu0 0
  %209 = vmatpush.bf16.msra.mxu0 %v200
  %210 = vmatmul.bf16.gmra.mxu0 %v197
  %v211 = vpop.f32.mrf.mxu0
  %v212 = vadd.f32 0.0, %v211
  %v213 = vpop.f32.mrf.mxu0
  %214 = vdwg.mxu0
  %v215 = vmul.f32 %v79, 0.17677669
  %v216 = vmul.f32 %v98, 0.17677669
  %v217 = vmul.f32 %v117, 0.17677669
  %v218 = vmul.f32 %v136, 0.17677669
  %v219 = vmul.f32 %v155, 0.17677669
  %v220 = vmul.f32 %v174, 0.17677669
  %v221 = vmul.f32 %v193, 0.17677669
  %v222 = vmul.f32 %v212, 0.17677669
  %v223 = vld [vmem:[#allocation2] sm:$0xff]
  %v224 = vld [vmem:[#allocation2 + $0x8] sm:$0xff]
  %v225 = vld [vmem:[#allocation2 + $0x10] sm:$0xff]
  %v226 = vld [vmem:[#allocation2 + $0x18] sm:$0xff]
  %v227 = vld [vmem:[#allocation2 + $0x20] sm:$0xff]
  %v228 = vld [vmem:[#allocation2 + $0x28] sm:$0xff]
  %v229 = vld [vmem:[#allocation2 + $0x30] sm:$0xff]
  %v230 = vld [vmem:[#allocation2 + $0x38] sm:$0xff]
  %v231 = vsel %vm61, %v215, -inf
  %232 = vmax.xlane.f32.xlu0 %v231
  %v233 = vpop.xlane.xlu0 %232
  %v234 = vsel %vm61, %v216, -inf
  %235 = vmax.xlane.f32.xlu0 %v234
  %v236 = vpop.xlane.xlu0 %235
  %v237 = vsel %vm61, %v217, -inf
  %238 = vmax.xlane.f32.xlu0 %v237
  %v239 = vpop.xlane.xlu0 %238
  %v240 = vsel %vm61, %v218, -inf
  %241 = vmax.xlane.f32.xlu0 %v240
  %v242 = vpop.xlane.xlu0 %241
  %v243 = vsel %vm61, %v219, -inf
  %244 = vmax.xlane.f32.xlu0 %v243
  %v245 = vpop.xlane.xlu0 %244
  %v246 = vsel %vm61, %v220, -inf
  %247 = vmax.xlane.f32.xlu0 %v246
  %v248 = vpop.xlane.xlu0 %247
  %v249 = vsel %vm61, %v221, -inf
  %250 = vmax.xlane.f32.xlu0 %v249
  %v251 = vpop.xlane.xlu0 %250
  %v252 = vsel %vm61, %v222, -inf
  %253 = vmax.xlane.f32.xlu0 %v252
  %v254 = vpop.xlane.xlu0 %253
  %v255 = vmax.f32 %v223, %v233
  %v256 = vmax.f32 %v224, %v236
  %v257 = vmax.f32 %v225, %v239
  %v258 = vmax.f32 %v226, %v242
  %v259 = vmax.f32 %v227, %v245
  %v260 = vmax.f32 %v228, %v248
  %v261 = vmax.f32 %v229, %v251
  %v262 = vmax.f32 %v230, %v254
  %v263 = vsub.f32 %v223, %v255
  %v264 = vsub.f32 %v224, %v256
  %v265 = vsub.f32 %v225, %v257
  %v266 = vsub.f32 %v226, %v258
  %v267 = vsub.f32 %v227, %v259
  %v268 = vsub.f32 %v228, %v260
  %v269 = vsub.f32 %v229, %v261
  %v270 = vsub.f32 %v230, %v262
  %v271 = vmul.f32 %v263, 1.442695
  %v272 = vpow.pop %v271
  %v273 = vmul.f32 %v264, 1.442695
  %v274 = vpow.pop %v273
  %v275 = vmul.f32 %v265, 1.442695
  %v276 = vpow.pop %v275
  %v277 = vmul.f32 %v266, 1.442695
  %v278 = vpow.pop %v277
  %v279 = vmul.f32 %v267, 1.442695
  %v280 = vpow.pop %v279
  %v281 = vmul.f32 %v268, 1.442695
  %v282 = vpow.pop %v281
  %v283 = vmul.f32 %v269, 1.442695
  %v284 = vpow.pop %v283
  %v285 = vmul.f32 %v270, 1.442695
  %v286 = vpow.pop %v285
  %288 = vset.pattern.permute.xlu0 0
  %289 = vperm.xlu0 %288, %v255
  %v290 = vpop.permute.xlu0 %289
  %293 = vset.pattern.permute.xlu0 0
  %294 = vperm.xlu0 %293, %v256
  %v295 = vpop.permute.xlu0 %294
  %298 = vset.pattern.permute.xlu0 0
  %299 = vperm.xlu0 %298, %v257
  %v300 = vpop.permute.xlu0 %299
  %303 = vset.pattern.permute.xlu0 0
  %304 = vperm.xlu0 %303, %v258
  %v305 = vpop.permute.xlu0 %304
  %308 = vset.pattern.permute.xlu0 0
  %309 = vperm.xlu0 %308, %v259
  %v310 = vpop.permute.xlu0 %309
  %313 = vset.pattern.permute.xlu0 0
  %314 = vperm.xlu0 %313, %v260
  %v315 = vpop.permute.xlu0 %314
  %318 = vset.pattern.permute.xlu0 0
  %319 = vperm.xlu0 %318, %v261
  %v320 = vpop.permute.xlu0 %319
  %323 = vset.pattern.permute.xlu0 0
  %324 = vperm.xlu0 %323, %v262
  %v325 = vpop.permute.xlu0 %324
  %v327 = vsub.f32 %v215, %v290
  %v328 = vsub.f32 %v216, %v295
  %v329 = vsub.f32 %v217, %v300
  %v330 = vsub.f32 %v218, %v305
  %v331 = vsub.f32 %v219, %v310
  %v332 = vsub.f32 %v220, %v315
  %v333 = vsub.f32 %v221, %v320
  %v334 = vsub.f32 %v222, %v325
  %v335 = vmul.f32 %v327, 1.442695
  %v336 = vpow.pop %v335
  %v337 = vmul.f32 %v328, 1.442695
  %v338 = vpow.pop %v337
  %v339 = vmul.f32 %v329, 1.442695
  %v340 = vpow.pop %v339
  %v341 = vmul.f32 %v330, 1.442695
  %v342 = vpow.pop %v341
  %v343 = vmul.f32 %v331, 1.442695
  %v344 = vpow.pop %v343
  %v345 = vmul.f32 %v332, 1.442695
  %v346 = vpow.pop %v345
  %v347 = vmul.f32 %v333, 1.442695
  %v348 = vpow.pop %v347
  %v349 = vmul.f32 %v334, 1.442695
  %v350 = vpow.pop %v349
  %v351 = vld [vmem:[#allocation3] sm:$0xff]
  %v352 = vld [vmem:[#allocation3 + $0x8] sm:$0xff]
  %v353 = vld [vmem:[#allocation3 + $0x10] sm:$0xff]
  %v354 = vld [vmem:[#allocation3 + $0x18] sm:$0xff]
  %v355 = vld [vmem:[#allocation3 + $0x20] sm:$0xff]
  %v356 = vld [vmem:[#allocation3 + $0x28] sm:$0xff]
  %v357 = vld [vmem:[#allocation3 + $0x30] sm:$0xff]
  %v358 = vld [vmem:[#allocation3 + $0x38] sm:$0xff]
  %v359 = vmul.f32 %v272, %v351
  %v360 = vmul.f32 %v274, %v352
  %v361 = vmul.f32 %v276, %v353
  %v362 = vmul.f32 %v278, %v354
  %v363 = vmul.f32 %v280, %v355
  %v364 = vmul.f32 %v282, %v356
  %v365 = vmul.f32 %v284, %v357
  %v366 = vmul.f32 %v286, %v358
  %v367 = vsel %vm61, %v336, 0.0
  %368 = vadd.xlane.f32.xlu0 %v367
  %v369 = vpop.xlane.xlu0 %368
  %v370 = vsel %vm61, %v338, 0.0
  %371 = vadd.xlane.f32.xlu0 %v370
  %v372 = vpop.xlane.xlu0 %371
  %v373 = vsel %vm61, %v340, 0.0
  %374 = vadd.xlane.f32.xlu0 %v373
  %v375 = vpop.xlane.xlu0 %374
  %v376 = vsel %vm61, %v342, 0.0
  %377 = vadd.xlane.f32.xlu0 %v376
  %v378 = vpop.xlane.xlu0 %377
  %v379 = vsel %vm61, %v344, 0.0
  %380 = vadd.xlane.f32.xlu0 %v379
  %v381 = vpop.xlane.xlu0 %380
  %v382 = vsel %vm61, %v346, 0.0
  %383 = vadd.xlane.f32.xlu0 %v382
  %v384 = vpop.xlane.xlu0 %383
  %v385 = vsel %vm61, %v348, 0.0
  %386 = vadd.xlane.f32.xlu0 %v385
  %v387 = vpop.xlane.xlu0 %386
  %v388 = vsel %vm61, %v350, 0.0
  %389 = vadd.xlane.f32.xlu0 %v388
  %v390 = vpop.xlane.xlu0 %389
  %v391 = vadd.f32 %v359, %v369
  %v392 = vadd.f32 %v360, %v372
  %v393 = vadd.f32 %v361, %v375
  %v394 = vadd.f32 %v362, %v378
  %v395 = vadd.f32 %v363, %v381
  %v396 = vadd.f32 %v364, %v384
  %v397 = vadd.f32 %v365, %v387
  %v398 = vadd.f32 %v366, %v390
  %vm399 = vcmask 7168
  %400 = vst.msk [vmem:[#allocation3] sm:$0xff] %vm399, %v391
  %401 = vst.msk [vmem:[#allocation3 + $0x8] sm:$0xff] %vm399, %v392
  %402 = vst.msk [vmem:[#allocation3 + $0x10] sm:$0xff] %vm399, %v393
  %403 = vst.msk [vmem:[#allocation3 + $0x18] sm:$0xff] %vm399, %v394
  %404 = vst.msk [vmem:[#allocation3 + $0x20] sm:$0xff] %vm399, %v395
  %405 = vst.msk [vmem:[#allocation3 + $0x28] sm:$0xff] %vm399, %v396
  %406 = vst.msk [vmem:[#allocation3 + $0x30] sm:$0xff] %vm399, %v397
  %407 = vst.msk [vmem:[#allocation3 + $0x38] sm:$0xff] %vm399, %v398
  %v408 = vld [vmem:[#allocation4] sm:$0xff]
  %v409 = vld [vmem:[#allocation4 + $0x8] sm:$0xff]
  %v410 = vld [vmem:[#allocation4 + $0x10] sm:$0xff]
  %v411 = vld [vmem:[#allocation4 + $0x18] sm:$0xff]
  %v412 = vld [vmem:[#allocation4 + $0x20] sm:$0xff]
  %v413 = vld [vmem:[#allocation4 + $0x28] sm:$0xff]
  %v414 = vld [vmem:[#allocation4 + $0x30] sm:$0xff]
  %v415 = vld [vmem:[#allocation4 + $0x38] sm:$0xff]
  %417 = vset.pattern.permute.xlu0 0
  %418 = vperm.xlu0 %417, %v272
  %v419 = vpop.permute.xlu0 %418
  %422 = vset.pattern.permute.xlu0 0
  %423 = vperm.xlu0 %422, %v274
  %v424 = vpop.permute.xlu0 %423
  %427 = vset.pattern.permute.xlu0 0
  %428 = vperm.xlu0 %427, %v276
  %v429 = vpop.permute.xlu0 %428
  %432 = vset.pattern.permute.xlu0 0
  %433 = vperm.xlu0 %432, %v278
  %v434 = vpop.permute.xlu0 %433
  %437 = vset.pattern.permute.xlu0 0
  %438 = vperm.xlu0 %437, %v280
  %v439 = vpop.permute.xlu0 %438
  %442 = vset.pattern.permute.xlu0 0
  %443 = vperm.xlu0 %442, %v282
  %v444 = vpop.permute.xlu0 %443
  %447 = vset.pattern.permute.xlu0 0
  %448 = vperm.xlu0 %447, %v284
  %v449 = vpop.permute.xlu0 %448
  %452 = vset.pattern.permute.xlu0 0
  %453 = vperm.xlu0 %452, %v286
  %v454 = vpop.permute.xlu0 %453
  %v456 = vmul.f32 %v419, %v408
  %v457 = vmul.f32 %v424, %v409
  %v458 = vmul.f32 %v429, %v410
  %v459 = vmul.f32 %v434, %v411
  %v460 = vmul.f32 %v439, %v412
  %v461 = vmul.f32 %v444, %v413
  %v462 = vmul.f32 %v449, %v414
  %v463 = vmul.f32 %v454, %v415
  %v464 = vpack.c.bf16 %v336, %v336
  %v465 = vpack.c.bf16 %v338, %v338
  %v466 = vpack.c.bf16 %v340, %v340
  %v467 = vpack.c.bf16 %v342, %v342
  %v468 = vpack.c.bf16 %v344, %v344
  %v469 = vpack.c.bf16 %v346, %v346
  %v470 = vpack.c.bf16 %v348, %v348
  %v471 = vpack.c.bf16 %v350, %v350
  %v472 = vld [vmem:[%s2] sm:$0xf]
  %v473 = vld [vmem:[%s2 + $0x4] sm:$0xf]
  %v474 = vld [vmem:[%s2 + $0x8] sm:$0xf]
  %v475 = vld [vmem:[%s2 + $0xc] sm:$0xf]
  %v476 = vld [vmem:[%s2 + $0x10] sm:$0xf]
  %v477 = vld [vmem:[%s2 + $0x14] sm:$0xf]
  %v478 = vld [vmem:[%s2 + $0x18] sm:$0xf]
  %v479 = vld [vmem:[%s2 + $0x1c] sm:$0xf]
  %v481 = vsel %vm61, %v464, 0
  %v484 = vsel %vm65, %v472, 0
  %486 = vmatpush.bf16.msra.mxu0 0
  %487 = vmatpush.bf16.msra.mxu0 0
  %488 = vmatpush.bf16.msra.mxu0 0
  %489 = vmatpush.bf16.msra.mxu0 0
  %490 = vmatpush.bf16.msra.mxu0 0
  %491 = vmatpush.bf16.msra.mxu0 0
  %492 = vmatpush.bf16.msra.mxu0 0
  %493 = vmatpush.bf16.msra.mxu0 %v484
  %494 = vmatmul.bf16.gmra.mxu0 %v481
  %v495 = vpop.f32.mrf.mxu0
  %v496 = vadd.f32 0.0, %v495
  %v497 = vpop.f32.mrf.mxu0
  %498 = vdwg.mxu0
  %v500 = vsel %vm61, %v465, 0
  %v503 = vsel %vm65, %v473, 0
  %505 = vmatpush.bf16.msra.mxu0 0
  %506 = vmatpush.bf16.msra.mxu0 0
  %507 = vmatpush.bf16.msra.mxu0 0
  %508 = vmatpush.bf16.msra.mxu0 0
  %509 = vmatpush.bf16.msra.mxu0 0
  %510 = vmatpush.bf16.msra.mxu0 0
  %511 = vmatpush.bf16.msra.mxu0 0
  %512 = vmatpush.bf16.msra.mxu0 %v503
  %513 = vmatmul.bf16.gmra.mxu0 %v500
  %v514 = vpop.f32.mrf.mxu0
  %v515 = vadd.f32 0.0, %v514
  %v516 = vpop.f32.mrf.mxu0
  %517 = vdwg.mxu0
  %v519 = vsel %vm61, %v466, 0
  %v522 = vsel %vm65, %v474, 0
  %524 = vmatpush.bf16.msra.mxu0 0
  %525 = vmatpush.bf16.msra.mxu0 0
  %526 = vmatpush.bf16.msra.mxu0 0
  %527 = vmatpush.bf16.msra.mxu0 0
  %528 = vmatpush.bf16.msra.mxu0 0
  %529 = vmatpush.bf16.msra.mxu0 0
  %530 = vmatpush.bf16.msra.mxu0 0
  %531 = vmatpush.bf16.msra.mxu0 %v522
  %532 = vmatmul.bf16.gmra.mxu0 %v519
  %v533 = vpop.f32.mrf.mxu0
  %v534 = vadd.f32 0.0, %v533
  %v535 = vpop.f32.mrf.mxu0
  %536 = vdwg.mxu0
  %v538 = vsel %vm61, %v467, 0
  %v541 = vsel %vm65, %v475, 0
  %543 = vmatpush.bf16.msra.mxu0 0
  %544 = vmatpush.bf16.msra.mxu0 0
  %545 = vmatpush.bf16.msra.mxu0 0
  %546 = vmatpush.bf16.msra.mxu0 0
  %547 = vmatpush.bf16.msra.mxu0 0
  %548 = vmatpush.bf16.msra.mxu0 0
  %549 = vmatpush.bf16.msra.mxu0 0
  %550 = vmatpush.bf16.msra.mxu0 %v541
  %551 = vmatmul.bf16.gmra.mxu0 %v538
  %v552 = vpop.f32.mrf.mxu0
  %v553 = vadd.f32 0.0, %v552
  %v554 = vpop.f32.mrf.mxu0
  %555 = vdwg.mxu0
  %v557 = vsel %vm61, %v468, 0
  %v560 = vsel %vm65, %v476, 0
  %562 = vmatpush.bf16.msra.mxu0 0
  %563 = vmatpush.bf16.msra.mxu0 0
  %564 = vmatpush.bf16.msra.mxu0 0
  %565 = vmatpush.bf16.msra.mxu0 0
  %566 = vmatpush.bf16.msra.mxu0 0
  %567 = vmatpush.bf16.msra.mxu0 0
  %568 = vmatpush.bf16.msra.mxu0 0
  %569 = vmatpush.bf16.msra.mxu0 %v560
  %570 = vmatmul.bf16.gmra.mxu0 %v557
  %v571 = vpop.f32.mrf.mxu0
  %v572 = vadd.f32 0.0, %v571
  %v573 = vpop.f32.mrf.mxu0
  %574 = vdwg.mxu0
  %v576 = vsel %vm61, %v469, 0
  %v579 = vsel %vm65, %v477, 0
  %581 = vmatpush.bf16.msra.mxu0 0
  %582 = vmatpush.bf16.msra.mxu0 0
  %583 = vmatpush.bf16.msra.mxu0 0
  %584 = vmatpush.bf16.msra.mxu0 0
  %585 = vmatpush.bf16.msra.mxu0 0
  %586 = vmatpush.bf16.msra.mxu0 0
  %587 = vmatpush.bf16.msra.mxu0 0
  %588 = vmatpush.bf16.msra.mxu0 %v579
  %589 = vmatmul.bf16.gmra.mxu0 %v576
  %v590 = vpop.f32.mrf.mxu0
  %v591 = vadd.f32 0.0, %v590
  %v592 = vpop.f32.mrf.mxu0
  %593 = vdwg.mxu0
  %v595 = vsel %vm61, %v470, 0
  %v598 = vsel %vm65, %v478, 0
  %600 = vmatpush.bf16.msra.mxu0 0
  %601 = vmatpush.bf16.msra.mxu0 0
  %602 = vmatpush.bf16.msra.mxu0 0
  %603 = vmatpush.bf16.msra.mxu0 0
  %604 = vmatpush.bf16.msra.mxu0 0
  %605 = vmatpush.bf16.msra.mxu0 0
  %606 = vmatpush.bf16.msra.mxu0 0
  %607 = vmatpush.bf16.msra.mxu0 %v598
  %608 = vmatmul.bf16.gmra.mxu0 %v595
  %v609 = vpop.f32.mrf.mxu0
  %v610 = vadd.f32 0.0, %v609
  %v611 = vpop.f32.mrf.mxu0
  %612 = vdwg.mxu0
  %v614 = vsel %vm61, %v471, 0
  %v617 = vsel %vm65, %v479, 0
  %619 = vmatpush.bf16.msra.mxu0 0
  %620 = vmatpush.bf16.msra.mxu0 0
  %621 = vmatpush.bf16.msra.mxu0 0
  %622 = vmatpush.bf16.msra.mxu0 0
  %623 = vmatpush.bf16.msra.mxu0 0
  %624 = vmatpush.bf16.msra.mxu0 0
  %625 = vmatpush.bf16.msra.mxu0 0
  %626 = vmatpush.bf16.msra.mxu0 %v617
  %627 = vmatmul.bf16.gmra.mxu0 %v614
  %v628 = vpop.f32.mrf.mxu0
  %v629 = vadd.f32 0.0, %v628
  %v630 = vpop.f32.mrf.mxu0
  %631 = vdwg.mxu0
  %v632 = vadd.f32 %v456, %v496
  %v633 = vadd.f32 %v457, %v515
  %v634 = vadd.f32 %v458, %v534
  %v635 = vadd.f32 %v459, %v553
  %v636 = vadd.f32 %v460, %v572
  %v637 = vadd.f32 %v461, %v591
  %v638 = vadd.f32 %v462, %v610
  %v639 = vadd.f32 %v463, %v629
  %640 = vst.msk [vmem:[#allocation4] sm:$0xff] %vm61, %v632
  %641 = vst.msk [vmem:[#allocation4 + $0x8] sm:$0xff] %vm61, %v633
  %642 = vst.msk [vmem:[#allocation4 + $0x10] sm:$0xff] %vm61, %v634
  %643 = vst.msk [vmem:[#allocation4 + $0x18] sm:$0xff] %vm61, %v635
  %644 = vst.msk [vmem:[#allocation4 + $0x20] sm:$0xff] %vm61, %v636
  %645 = vst.msk [vmem:[#allocation4 + $0x28] sm:$0xff] %vm61, %v637
  %646 = vst.msk [vmem:[#allocation4 + $0x30] sm:$0xff] %vm61, %v638
  %647 = vst.msk [vmem:[#allocation4 + $0x38] sm:$0xff] %vm61, %v639
  %648 = vst.msk [vmem:[#allocation2] sm:$0xff] %vm399, %v255
  %649 = vst.msk [vmem:[#allocation2 + $0x8] sm:$0xff] %vm399, %v256
  %650 = vst.msk [vmem:[#allocation2 + $0x10] sm:$0xff] %vm399, %v257
  %651 = vst.msk [vmem:[#allocation2 + $0x18] sm:$0xff] %vm399, %v258
  %652 = vst.msk [vmem:[#allocation2 + $0x20] sm:$0xff] %vm399, %v259
  %653 = vst.msk [vmem:[#allocation2 + $0x28] sm:$0xff] %vm399, %v260
  %654 = vst.msk [vmem:[#allocation2 + $0x30] sm:$0xff] %vm399, %v261
  %655 = vst.msk [vmem:[#allocation2 + $0x38] sm:$0xff] %vm399, %v262
  // Predicated region
  $region18: #{transformer_forward.41} parent=0 // pred_check
    %p656 = pneg %p15
  $region19: #{transformer_forward.41} parent=0 // pred_check_branch
    %658 = sbr.rel (%p656) target = $region21
  $region20: #{transformer_forward.41} parent=0 // pred_region
    %v659 = vld [vmem:[#allocation3] sm:$0xff]
    %v660 = vld [vmem:[#allocation3 + $0x8] sm:$0xff]
    %v661 = vld [vmem:[#allocation3 + $0x10] sm:$0xff]
    %v662 = vld [vmem:[#allocation3 + $0x18] sm:$0xff]
    %v663 = vld [vmem:[#allocation3 + $0x20] sm:$0xff]
    %v664 = vld [vmem:[#allocation3 + $0x28] sm:$0xff]
    %v665 = vld [vmem:[#allocation3 + $0x30] sm:$0xff]
    %v666 = vld [vmem:[#allocation3 + $0x38] sm:$0xff]
    %v667 = vrcp.pop %v659
    %v668 = vrcp.pop %v660
    %v669 = vrcp.pop %v661
    %v670 = vrcp.pop %v662
    %v671 = vrcp.pop %v663
    %v672 = vrcp.pop %v664
    %v673 = vrcp.pop %v665
    %v674 = vrcp.pop %v666
    %v675 = vld [vmem:[#allocation4] sm:$0xff]
    %v676 = vld [vmem:[#allocation4 + $0x8] sm:$0xff]
    %v677 = vld [vmem:[#allocation4 + $0x10] sm:$0xff]
    %v678 = vld [vmem:[#allocation4 + $0x18] sm:$0xff]
    %v679 = vld [vmem:[#allocation4 + $0x20] sm:$0xff]
    %v680 = vld [vmem:[#allocation4 + $0x28] sm:$0xff]
    %v681 = vld [vmem:[#allocation4 + $0x30] sm:$0xff]
    %v682 = vld [vmem:[#allocation4 + $0x38] sm:$0xff]
    %684 = vset.pattern.permute.xlu0 0
    %685 = vperm.xlu0 %684, %v667
    %v686 = vpop.permute.xlu0 %685
    %689 = vset.pattern.permute.xlu0 0
    %690 = vperm.xlu0 %689, %v668
    %v691 = vpop.permute.xlu0 %690
    %694 = vset.pattern.permute.xlu0 0
    %695 = vperm.xlu0 %694, %v669
    %v696 = vpop.permute.xlu0 %695
    %699 = vset.pattern.permute.xlu0 0
    %700 = vperm.xlu0 %699, %v670
    %v701 = vpop.permute.xlu0 %700
    %704 = vset.pattern.permute.xlu0 0
    %705 = vperm.xlu0 %704, %v671
    %v706 = vpop.permute.xlu0 %705
    %709 = vset.pattern.permute.xlu0 0
    %710 = vperm.xlu0 %709, %v672
    %v711 = vpop.permute.xlu0 %710
    %714 = vset.pattern.permute.xlu0 0
    %715 = vperm.xlu0 %714, %v673
    %v716 = vpop.permute.xlu0 %715
    %719 = vset.pattern.permute.xlu0 0
    %720 = vperm.xlu0 %719, %v674
    %v721 = vpop.permute.xlu0 %720
    %v723 = vmul.f32 %v675, %v686
    %v724 = vmul.f32 %v676, %v691
    %v725 = vmul.f32 %v677, %v696
    %v726 = vmul.f32 %v678, %v701
    %v727 = vmul.f32 %v679, %v706
    %v728 = vmul.f32 %v680, %v711
    %v729 = vmul.f32 %v681, %v716
    %v730 = vmul.f32 %v682, %v721
    %v731 = vpack.c.bf16 %v723, %v723
    %v732 = vpack.c.bf16 %v724, %v724
    %v733 = vpack.c.bf16 %v725, %v725
    %v734 = vpack.c.bf16 %v726, %v726
    %v735 = vpack.c.bf16 %v727, %v727
    %v736 = vpack.c.bf16 %v728, %v728
    %v737 = vpack.c.bf16 %v729, %v729
    %v738 = vpack.c.bf16 %v730, %v730
    %vm739 = vcmask 60416
    %740 = vst.msk [vmem:[%s3] sm:$0xf] %vm739, %v731
    %741 = vst.msk [vmem:[%s3 + $0x4] sm:$0xf] %vm739, %v732
    %742 = vst.msk [vmem:[%s3 + $0x8] sm:$0xf] %vm739, %v733
    %743 = vst.msk [vmem:[%s3 + $0xc] sm:$0xf] %vm739, %v734
    %744 = vst.msk [vmem:[%s3 + $0x10] sm:$0xf] %vm739, %v735
    %745 = vst.msk [vmem:[%s3 + $0x14] sm:$0xf] %vm739, %v736
    %746 = vst.msk [vmem:[%s3 + $0x18] sm:$0xf] %vm739, %v737
    %747 = vst.msk [vmem:[%s3 + $0x1c] sm:$0xf] %vm739, %v738
  $region21: #{transformer_forward.41} parent=0 // pred_fallthru
    _
  // Predicated region
  $region22: #{transformer_forward.41} parent=0 // pred_check
    _
  $region23: #{transformer_forward.41} parent=0 // pred_check_branch
    %749 = sbr.rel (0) target = $region25
  $region24: #{transformer_forward.41} parent=0 // pred_region
    _
  $region25: #{transformer_forward.41} parent=0 // pred_fallthru
    _
  // Predicated region
  $region26: #{transformer_forward.41} parent=0 // pred_check
    _
  $region27: #{transformer_forward.41} parent=0 // pred_check_branch
    %751 = sbr.rel (0) target = $region29
  $region28: #{transformer_forward.41} parent=0 // pred_region
    _
  $region29: #{transformer_forward.41} parent=0 // pred_fallthru
    _

// kernel: transformer_forward.79
$region0: #{transformer_forward.79}
  #allocation0 [shape = 'u32[]', space=smem, size = 0x4, offset = 0x4, fixed_abs, tag = 'smem constant byte address 0x4 - core index']
  #allocation1 [shape = 'u32[72,128]{1,0:T(1,128)}', space=vmem, size = 0x9000, scoped, tag = 'internal scratch']
  %s0 = inlined_call_operand.vmem [shape: bf16[2,8,32], index: 0, kind: input, shape index: {}]
  %s1 = inlined_call_operand.hbm [shape: f32[2,8,32], index: 1, kind: output, shape index: {}]
  %s2 = sld [smem:[#allocation0]]
  $region37: #{transformer_forward.79} parent=0
    _
  %s4 = ssub.s32 1, %s2
  %s5 = scalar_select 0, %s4, %s2
  $region1: #{transformer_forward.79} parent=0
    #allocation2 [shape = 'u8[8192]{0}', space=vmem, size = 0x2000, scoped, tag = 'output window, operand 0']
    #allocation3 [shape = 's32[2]{0}', space=sflag, size = 0x8, scoped, tag = 'scoped memory for transformer_forward.79']
    %6 = vsyncpa [#allocation3], 0
    %s7 = scalar_lea.sflag [#allocation3], 1
    %8 = vsyncpa %s7, 0
    loop: start=0, step=1, limit=4
    $region2: #{transformer_forward.79} parent=1 // loop_pre_header
      _
    $region3: #{transformer_forward.79} parent=1 // loop_header
      %s10 = sphi 0, %s14
      %p11 = scmp.ge.s32.totalorder %s10, 4
      %s17 = sphi 0, %s29
      %s18 = sphi 0, %s25
      %s19 = sphi 0, %s17
      %s20 = sphi 0, %s18
      %s21 = sphi 0, %s19
      %s22 = sphi 0, %s20
      %s34 = sphi 0, %s36
      %s37 = sphi 0, %s34
      %s38 = sphi 0, %s37
      %s54 = sphi 0, %s38
      %s62 = sphi 0, %s64
      %s65 = sphi 0, %s62
      %s66 = sphi 0, %s65
      %s82 = sphi 0, %s66
    $region4: #{transformer_forward.79} parent=1 // loop_header_branch
      %13 = sbr.rel (%p11) target = $region8
    $region5: #{transformer_forward.79} parent=1 // loop_body
      %s15 = ssub.s32 %s10, 1
      %s16 = ssub.s32 %s10, 2
      %s23 = sadd.s32 1, %s18
      %p24 = scmp.ge.s32.totalorder %s23, 1
      %s25 = scalar_select %p24, 0, %s23
      %s26 = sadd.s32 1, %s17
      %s27 = scalar_select %p24, %s26, %s17
      %p28 = scmp.ge.s32.totalorder %s27, 2
      %s29 = scalar_select %p28, 0, %s27
      %s30 = ssub.s32 %s17, %s29
      %s31 = ssub.s32 %s18, %s25
      %s32 = sor.u32 %s30, %s31
      %p33 = scmp.eq.s32.totalorder %s32, 0
      %s35 = sadd.s32 %s34, 1
      %s36 = scalar_select %p33, %s34, %s35
      %p39 = pneg %p33
      %p40 = scmp.eq.s32.totalorder %s10, 1
      %p41 = por %p39, %p40
      %p42 = scmp.ne.s32.totalorder %s34, %s37
      %p43 = scmp.eq.s32.totalorder %s10, 0
      %p44 = por %p42, %p43
      %p45 = scmp.ne.s32.totalorder %s34, %s37
      %p46 = scmp.eq.s32.totalorder %s15, 1
      %p47 = por %p45, %p46
      %p48 = scmp.ne.s32.totalorder %s37, %s38
      %p49 = scmp.eq.s32.totalorder %s15, 0
      %p50 = por %p48, %p49
      %p51 = scmp.ne.s32.totalorder %s37, %s38
      %p52 = scmp.eq.s32.totalorder %s16, 1
      %p53 = por %p51, %p52
      %p55 = scmp.ne.s32.totalorder %s38, %s54
      %p56 = scmp.eq.s32.totalorder %s16, 0
      %p57 = por %p55, %p56
      %s58 = ssub.s32 %s17, %s29
      %s59 = ssub.s32 %s18, %s25
      %s60 = sor.u32 %s58, %s59
      %p61 = scmp.eq.s32.totalorder %s60, 0
      %s63 = sadd.s32 %s62, 1
      %s64 = scalar_select %p61, %s62, %s63
      %p67 = pneg %p61
      %p68 = scmp.eq.s32.totalorder %s10, 1
      %p69 = por %p67, %p68
      %p70 = scmp.ne.s32.totalorder %s62, %s65
      %p71 = scmp.eq.s32.totalorder %s10, 0
      %p72 = por %p70, %p71
      %p73 = scmp.ne.s32.totalorder %s62, %s65
      %p74 = scmp.eq.s32.totalorder %s15, 1
      %p75 = por %p73, %p74
      %p76 = scmp.ne.s32.totalorder %s65, %s66
      %p77 = scmp.eq.s32.totalorder %s15, 0
      %p78 = por %p76, %p77
      %p79 = scmp.ne.s32.totalorder %s65, %s66
      %p80 = scmp.eq.s32.totalorder %s16, 1
      %p81 = por %p79, %p80
      %p83 = scmp.ne.s32.totalorder %s66, %s82
      %p84 = scmp.eq.s32.totalorder %s16, 0
      %p85 = por %p83, %p84
      %p86 = scmp.le.s32.totalorder 1, %s10
      %p87 = scmp.lt.s32.totalorder %s10, 3
      %p88 = pnand %p86, %p87
      %p89 = pneg %p88
      // Predicated region
      $region9: #{transformer_forward.79} parent=5 // pred_check
        _
      $region10: #{transformer_forward.79} parent=5 // pred_check_branch
        %91 = sbr.rel (%p88) target = $region12
      $region11: #{transformer_forward.79} parent=5 // pred_region
        %s92 = ssub.s32 %s10, 1
      $region12: #{transformer_forward.79} parent=5 // pred_fallthru
        _
      %p93 = scmp.lt.s32.totalorder %s10, 2
      // Predicated region
      $region13: #{transformer_forward.79} parent=5 // pred_check
        %p94 = pneg %p93
      $region14: #{transformer_forward.79} parent=5 // pred_check_branch
        %96 = sbr.rel (%p94) target = $region16
      $region15: #{transformer_forward.79} parent=5 // pred_region
        // Predicated region
        $region17: #{transformer_forward.79} parent=15 // pred_check
          %p97 = pneg %p44
        $region18: #{transformer_forward.79} parent=15 // pred_check_branch
          %99 = sbr.rel (%p97) target = $region20
        $region19: #{transformer_forward.79} parent=15 // pred_region
          %p100 = scmp.lt.s32.totalorder %s17, 1
          %s101 = scalar_select %p100, %s17, 1
          %p102 = scmp.lt.s32.totalorder %s18, 0
          %s103 = scalar_select %p102, %s18, 0
          %s104 = sadd.s32 %s103, %s101
          %s105 = smul.addr %s104, 4
          %s106 = scalar_lea.vmem %s0, %s105
        $region20: #{transformer_forward.79} parent=15 // pred_fallthru
          _
      $region16: #{transformer_forward.79} parent=5 // pred_fallthru
        _
      %p107 = scmp.le.s32.totalorder 1, %s10
      %p108 = scmp.lt.s32.totalorder %s10, 3
      %p109 = pnand %p107, %p108
      %p110 = pneg %p109
      // Predicated region
      $region21: #{transformer_forward.79} parent=5 // pred_check
        _
      $region22: #{transformer_forward.79} parent=5 // pred_check_branch
        %112 = sbr.rel (%p109) target = $region24
      $region23: #{transformer_forward.79} parent=5 // pred_region
        %s113 = ssub.s32 %s10, 1
        %p114 = scmp.lt.s32.totalorder %s19, 1
        %s115 = scalar_select %p114, %s19, 1
        %p116 = scmp.lt.s32.totalorder %s20, 0
        %s117 = scalar_select %p116, %s20, 0
        %s118 = sadd.s32 %s117, %s115
        %s119 = smul.addr %s118, 4
        %s120 = scalar_lea.vmem %s0, %s119
        %p121 = pneg %p50
        %p122 = pneg %p47
        %p123 = pneg %p78
        %p124 = pneg %p75
        %s125 = sand.u32 %s65, 1
        %s126 = scalar_lea.sflag [#allocation3], %s125
        %s127 = sand.u32 %s65, 1
        %s128 = smul.addr %s127, 8
        %s129 = scalar_lea.vmem [#allocation2], %s128
        %p130 = scmp.lt.s32.totalorder %s19, 1
        %s131 = scalar_select %p130, %s19, 1
        %p132 = scmp.lt.s32.totalorder %s20, 0
        %s133 = scalar_select %p132, %s20, 0
        %s134 = sadd.s32 %s133, %s131
        %s135 = smul.addr %s134, 4
        %s136 = scalar_lea.vmem %s0, %s135
        %v137 = vld [vmem:[%s136] sm:$0xf]
        %v138 = vunpack.c.l.bf16 %v137
        %vm139 = vcmask 261120
        %v140 = vsel %vm139, %v138, -inf
        %v141 = vrot.slane %v140, 4
        %v142 = vmax.f32 %v140, %v141
        %v143 = vrot.slane %v142, 2
        %v144 = vmax.f32 %v142, %v143
        %v145 = vrot.slane %v144, 1
        %v146 = vmax.f32 %v144, %v145
        %v147 = vsub.f32 %v138, %v146
        %v148 = vmul.f32 %v147, 1.442695
        %v149 = vpow.pop %v148
        %v150 = vsel %vm139, %v149, 0.0
        %v151 = vrot.slane %v150, 4
        %v152 = vadd.f32 %v150, %v151
        %v153 = vrot.slane %v152, 2
        %v154 = vadd.f32 %v152, %v153
        %v155 = vrot.slane %v154, 1
        %v156 = vadd.f32 %v154, %v155
        %v157 = vrcp.pop %v156
        %v158 = vmul.f32 %v156, %v157
        %v159 = vsub.f32 1.0, %v158
        %v160 = vmul.f32 %v157, %v159
        %v161 = vadd.f32 %v157, %v160
        %vm162 = vweird.f32 %v156
        %vm163 = vweird.f32 %v157
        %vm164 = vmor %vm162, %vm163
        %v165 = vsel %vm164, %v157, %v161
        %v166 = vand.u32 2147483647, %v156
        %vm167 = vcmp.eq.f32.partialorder %v166, 8.507059e+37
        %v168 = vand.u32 %v156, 2147483648
        %v169 = vor.u32 1.1754944e-38, %v168
        %v170 = vsel %vm167, %v169, %v165
        %v171 = vmul.f32 %v149, %v170
        %172 = vst.msk [vmem:[%s129] sm:$0xff] %vm139, %v171
        %s173 = sand.u32 %s65, 1
        %s174 = scalar_lea.sflag [#allocation3], %s173
        %s175 = sand.u32 %s65, 1
        %s176 = smul.addr %s175, 8
        %s177 = scalar_lea.vmem [#allocation2], %s176
        // Predicated region
        $region25: #{transformer_forward.79} parent=23 // pred_check
          %p178 = pneg %p75
        $region26: #{transformer_forward.79} parent=23 // pred_check_branch
          %180 = sbr.rel (%p178) target = $region28
        $region27: #{transformer_forward.79} parent=23 // pred_region
          %182 = vsyncadd %s174, 0
          %s183 = sadd.s32 %s20, %s19
          %s184 = smul.addr %s183, 8
          %s185 = scalar_lea.hbm %s1, %s184
          %s187 = sshll.u32 %s177, 4
          %s188 = int_to_ptr.vmem [resolvable:$true] %s187
          %s189 = sshll.u32 %s185, 4
          %s190 = int_to_ptr.hbm [resolvable:$true] %s189
          %192 = dma.vmem_to_hbm [thread:$0]  %s188, 128, %s190, %s174
        $region28: #{transformer_forward.79} parent=23 // pred_fallthru
          _
      $region24: #{transformer_forward.79} parent=5 // pred_fallthru
        _
      %p193 = scmp.le.s32.totalorder 2, %s10
      // Predicated region
      $region29: #{transformer_forward.79} parent=5 // pred_check
        %p194 = pneg %p193
      $region30: #{transformer_forward.79} parent=5 // pred_check_branch
        %196 = sbr.rel (%p194) target = $region32
      $region31: #{transformer_forward.79} parent=5 // pred_region
        %s197 = ssub.s32 %s10, 2
        // Predicated region
        $region33: #{transformer_forward.79} parent=31 // pred_check
          %p198 = pneg %p81
        $region34: #{transformer_forward.79} parent=31 // pred_check_branch
          %200 = sbr.rel (%p198) target = $region36
        $region35: #{transformer_forward.79} parent=31 // pred_region
          %s201 = sand.u32 %s66, 1
          %s202 = scalar_lea.sflag [#allocation3], %s201
          %s203 = sand.u32 %s66, 1
          %s204 = smul.addr %s203, 8
          %s205 = scalar_lea.vmem [#allocation2], %s204
          %207 = dma.done %s202, 128
        $region36: #{transformer_forward.79} parent=31 // pred_fallthru
          _
      $region32: #{transformer_forward.79} parent=5 // pred_fallthru
        _
    $region6: #{transformer_forward.79} parent=1 // loop_footer
      %s14 = sadd.s32 1, %s10
    $region7: #{transformer_forward.79} parent=1 // loop_footer_branch
      %9 = sbr.rel target = $region3
    $region8: #{transformer_forward.79} parent=1 // loop_exit
      _
    %208 = vsyncpa [#allocation3], 1
    %s209 = scalar_lea.sflag [#allocation3], 1
    %210 = vsyncpa %s209, 1

</llo_original>
